<compile_context>
chip_gen: v7x
topology: tpu7x:2x2x1
jax: 0.10.0
libtpu: 0.0.40
codegen_flags: <defaults>
</compile_context>

<pallas_src>
import functools

import jax
import jax.numpy as jnp
from jax.experimental import pallas as pl
from jax.experimental.pallas import tpu as pltpu

NUM_CLASSES = 8
BN_EPS = 1e-5
CPAD = 128                 # every channel / class axis padded to 128 lanes
CLS_PAD = 128
ROW_TILE = 512             # rows per grid step (mem-bound sweet spot)
VMEM_LIMIT = 32 * 1024 * 1024


def _round_up(x, m):
    return ((x + m - 1) // m) * m


def _rows_plan(rows):
    """Return (row_tile, padded_rows)."""
    if rows <= ROW_TILE:
        pr = _round_up(rows, 8)
        return pr, pr
    return ROW_TILE, _round_up(rows, ROW_TILE)


# ---------------------------------------------------------------------------
# Pallas kernels
# ---------------------------------------------------------------------------
def matmul_stats_kernel(a_ref, b_ref, y_ref, sum_ref, sq_ref):
    """bf16 MXU matmul row-tile; per-tile partial channel sum / sumsq in f32."""
    y = jnp.dot(a_ref[...], b_ref[...], preferred_element_type=jnp.float32)
    y_ref[...] = y.astype(y_ref.dtype)                       # bf16 activation out
    sum_ref[...] = jnp.sum(y, axis=0, keepdims=True).reshape(sum_ref.shape)
    sq_ref[...] = jnp.sum(y * y, axis=0, keepdims=True).reshape(sq_ref.shape)


def bn_apply_kernel(y_ref, sum_ref, sq_ref, g_ref, b_ref, o_ref, *, nrows, relu):
    """Training-mode BN affine (+ReLU) from precomputed sum/sumsq (f32 math)."""
    inv_n = 1.0 / float(nrows)
    mean = sum_ref[...] * inv_n
    var = jnp.maximum(sq_ref[...] * inv_n - mean * mean, 0.0)
    scale = jax.lax.rsqrt(var + BN_EPS) * g_ref[...]
    shift = b_ref[...] - mean * scale
    y = y_ref[...].astype(jnp.float32) * scale + shift
    if relu:
        y = jnp.maximum(y, 0.0)
    o_ref[...] = y.astype(o_ref.dtype)


def bn2_add_relu_kernel(y_ref, yd_ref, s_ref, q_ref, g_ref, b_ref,
                        sd_ref, qd_ref, gd_ref, bd_ref, o_ref, *, nrows):
    """Main-path BN + shortcut BN + residual add + ReLU fused in one pass."""
    inv_n = 1.0 / float(nrows)

    def affine(y, s, q, g, b):
        mean = s[...] * inv_n
        var = jnp.maximum(q[...] * inv_n - mean * mean, 0.0)
        scale = jax.lax.rsqrt(var + BN_EPS) * g[...]
        shift = b[...] - mean * scale
        return y[...].astype(jnp.float32) * scale + shift

    out = affine(y_ref, s_ref, q_ref, g_ref, b_ref) + \
          affine(yd_ref, sd_ref, qd_ref, gd_ref, bd_ref)
    o_ref[...] = jnp.maximum(out, 0.0).astype(o_ref.dtype)


def maxpool_kernel(p_ref, o_ref, *, ntaps, c):
    """Running max over ntaps lane-concatenated taps, in bf16 (max is exact)."""
    m = p_ref[:, 0:c]
    for t in range(1, ntaps):
        m = jnp.maximum(m, p_ref[:, t * c:(t + 1) * c])
    o_ref[...] = m


def tail_kernel(x_ref, w_ref, b_ref, oh_ref, logits_ref, loss_ref, *, inv_n):
    """Fused global-avg-pool + FC(+bias) + mean cross-entropy (padded classes masked)."""
    @pl.when(pl.program_id(0) == 0)
    def _init():
        loss_ref[...] = jnp.zeros_like(loss_ref)

    x = x_ref[...].astype(jnp.float32)            # (bt, H*W, Cpad)
    pooled = jnp.mean(x, axis=1)                  # (bt, Cpad)
    logits = jnp.dot(pooled.astype(jnp.bfloat16), w_ref[...],
                     preferred_element_type=jnp.float32) + b_ref[...]
    logits_ref[...] = logits
    mask = jax.lax.broadcasted_iota(jnp.int32, logits.shape, 1) < NUM_CLASSES
    ml = jnp.where(mask, logits, -1e30)
    m = jnp.max(ml, axis=-1, keepdims=True)
    lse = m + jnp.log(jnp.sum(jnp.where(mask, jnp.exp(ml - m), 0.0),
                              axis=-1, keepdims=True))
    nll = lse - jnp.sum(oh_ref[...] * logits, axis=-1, keepdims=True)
    loss_ref[...] = loss_ref[...] + jnp.sum(nll) * inv_n


# ---------------------------------------------------------------------------
# pallas_call wrappers (row-tiled grids, lane-dense 128-wide blocks)
# ---------------------------------------------------------------------------
def matmul_stats(a, b):
    """a: (rows, K) bf16, b: (K, Cout_pad) bf16 -> (y bf16 padded-rows, sum, sumsq f32)."""
    rows, k = a.shape
    cout = b.shape[1]
    tm, prows = _rows_plan(rows)
    if prows != rows:
        a = jnp.pad(a, ((0, prows - rows), (0, 0)))
    nt = prows // tm
    y, s, sq = pl.pallas_call(
        matmul_stats_kernel,
        out_shape=(jax.ShapeDtypeStruct((prows, cout), jnp.bfloat16),
                   jax.ShapeDtypeStruct((nt, 1, cout), jnp.float32),
                   jax.ShapeDtypeStruct((nt, 1, cout), jnp.float32)),
        grid=(nt,),
        in_specs=[pl.BlockSpec((tm, k), lambda i: (i, 0)),
                  pl.BlockSpec((k, cout), lambda i: (0, 0))],
        out_specs=(pl.BlockSpec((tm, cout), lambda i: (i, 0)),
                   pl.BlockSpec((1, 1, cout), lambda i: (i, 0, 0)),
                   pl.BlockSpec((1, 1, cout), lambda i: (i, 0, 0))),
        compiler_params=pltpu.CompilerParams(
            dimension_semantics=("parallel",),       # per-tile partial stats
            vmem_limit_bytes=VMEM_LIMIT),
    )(a, b)
    # tiny cross-tile reduction of the partial stats
    return y, jnp.sum(s, axis=0), jnp.sum(sq, axis=0)


def bn_apply(y, s, sq, gamma, beta, *, nrows, relu=True, ycol=0,
             out_dtype=jnp.bfloat16):
    prows = y.shape[0]
    tm = prows if prows <= ROW_TILE else ROW_TILE
    y_spec = pl.BlockSpec((tm, CPAD), lambda i, c=ycol: (i, c))
    out_spec = pl.BlockSpec((tm, CPAD), lambda i: (i, 0))
    vec = pl.BlockSpec((1, CPAD), lambda i: (0, 0))
    return pl.pallas_call(
        functools.partial(bn_apply_kernel, nrows=nrows, relu=relu),
        out_shape=jax.ShapeDtypeStruct((prows, CPAD), out_dtype),
        grid=(prows // tm,),
        in_specs=[y_spec, vec, vec, vec, vec],
        out_specs=out_spec,
        compiler_params=pltpu.CompilerParams(
            dimension_semantics=("parallel",), vmem_limit_bytes=VMEM_LIMIT),
    )(y, s, sq, gamma, beta)


def bn_add_relu(y, s, q, g, b, yd, sd, qd, gd, bd, *, nrows, ydcol=0):
    prows = y.shape[0]
    assert yd.shape[0] == prows
    tm = prows if prows <= ROW_TILE else ROW_TILE
    row_spec = pl.BlockSpec((tm, CPAD), lambda i: (i, 0))
    yd_spec = pl.BlockSpec((tm, CPAD), lambda i, c=ydcol: (i, c))
    vec = pl.BlockSpec((1, CPAD), lambda i: (0, 0))
    return pl.pallas_call(
        functools.partial(bn2_add_relu_kernel, nrows=nrows),
        out_shape=jax.ShapeDtypeStruct((prows, CPAD), jnp.bfloat16),
        grid=(prows // tm,),
        in_specs=[row_spec, yd_spec, vec, vec, vec, vec, vec, vec, vec, vec],
        out_specs=row_spec,
        compiler_params=pltpu.CompilerParams(
            dimension_semantics=("parallel",), vmem_limit_bytes=VMEM_LIMIT),
    )(y, yd, s, q, g, b, sd, qd, gd, bd)


# ---------------------------------------------------------------------------
# Plain-JAX glue: im2col only for 3x3 convs / maxpool (K = kh*kw*cin_real).
# ---------------------------------------------------------------------------
def im2col(x, kh, kw, stride, padding):
    n, h, w, c = x.shape
    xp = jnp.pad(x, ((0, 0), (padding, padding), (padding, padding), (0, 0)))
    hp, wp = h + 2 * padding, w + 2 * padding
    ho = (hp - kh) // stride + 1
    wo = (wp - kw) // stride + 1
    cols = []
    for i in range(kh):
        for j in range(kw):
            cols.append(xp[:, i:i + stride * ho:stride,
                           j:j + stride * wo:stride, :])
    cols = jnp.concatenate(cols, axis=-1)          # (N, Ho, Wo, kh*kw*c)
    return cols.reshape(n * ho * wo, kh * kw * c), n, ho, wo


def pad_k(cols, kpad):
    k = cols.shape[1]
    if k < kpad:
        cols = jnp.pad(cols, ((0, 0), (0, kpad - k)))
    return cols


def conv3x3_stats(x_real, wmat, stride):
    """3x3 conv on the REAL-channel input slice; K padded once to wmat's K."""
    cols, n, ho, wo = im2col(x_real, 3, 3, stride, 1)
    cols = pad_k(cols, wmat.shape[0])
    y, s, q = matmul_stats(cols, wmat)
    return y, s, q, n, ho, wo


def maxpool2d(x, k=3, stride=2, padding=1):
    # post-ReLU, zero channel-padded input: zero spatial padding == -inf padding.
    c = x.shape[-1]
    cols, n, ho, wo = im2col(x, k, k, stride, padding)    # (rows, k*k*c) bf16
    rows = n * ho * wo
    tm, prows = _rows_plan(rows)
    if prows != rows:
        cols = jnp.pad(cols, ((0, prows - rows), (0, 0)))
    out = pl.pallas_call(
        functools.partial(maxpool_kernel, ntaps=k * k, c=c),
        out_shape=jax.ShapeDtypeStruct((prows, c), x.dtype),
        grid=(prows // tm,),
        in_specs=[pl.BlockSpec((tm, k * k * c), lambda i: (i, 0))],
        out_specs=pl.BlockSpec((tm, c), lambda i: (i, 0)),
        compiler_params=pltpu.CompilerParams(
            dimension_semantics=("parallel",), vmem_limit_bytes=VMEM_LIMIT),
    )(cols)
    return out[:rows].reshape(n, ho, wo, c)


def tail_loss(feats, fc_w, fc_b, onehot):
    n, hw, c = feats.shape
    cls = fc_w.shape[1]
    bt = n if n <= 128 else 128          # batch-tiled tail (v7x VMEM safety)
    assert n % bt == 0
    return pl.pallas_call(
        functools.partial(tail_kernel, inv_n=1.0 / n),
        out_shape=(jax.ShapeDtypeStruct((n, cls), jnp.float32),
                   jax.ShapeDtypeStruct((1, 1), jnp.float32)),
        grid=(n // bt,),
        in_specs=[pl.BlockSpec((bt, hw, c), lambda i: (i, 0, 0)),
                  pl.BlockSpec((c, cls), lambda i: (0, 0)),
                  pl.BlockSpec((1, cls), lambda i: (0, 0)),
                  pl.BlockSpec((bt, cls), lambda i: (i, 0))],
        out_specs=(pl.BlockSpec((bt, cls), lambda i: (i, 0)),
                   pl.BlockSpec((1, 1), lambda i: (0, 0))),
        compiler_params=pltpu.CompilerParams(
            dimension_semantics=("arbitrary",),      # loss is accumulated
            vmem_limit_bytes=VMEM_LIMIT),
    )(feats, fc_w, fc_b, onehot)


# ---------------------------------------------------------------------------
# Network (channel-padded NHWC, bf16 activations)
# ---------------------------------------------------------------------------
def bottleneck(x, p, stride, cmid):
    n, h, w, _ = x.shape
    rows_in = n * h * w
    lhs = x.reshape(rows_in, CPAD)

    if stride == 1:
        # Shared-LHS 1x1 convs (main w1 + projection wd) packed into one
        # 256-wide RHS -> single MXU pass; halves read via column BlockSpecs.
        ypk, spk, qpk = matmul_stats(lhs, p["w1wd"])
        s1, sd = spk[:, :CPAD], spk[:, CPAD:]
        q1, qd = qpk[:, :CPAD], qpk[:, CPAD:]
        o1 = bn_apply(ypk, s1, q1, p["g1"], p["b1"], nrows=rows_in, relu=True,
                      ycol=0)
        yd, ydcol = ypk, 1
        n_o, h_o, w_o, rows_out = n, h, w, rows_in
    else:
        y1, s1, q1 = matmul_stats(lhs, p["w1"])
        o1 = bn_apply(y1, s1, q1, p["g1"], p["b1"], nrows=rows_in, relu=True)
        xs = x[:, ::stride, ::stride, :]
        n_o, h_o, w_o = xs.shape[0], xs.shape[1], xs.shape[2]
        rows_out = n_o * h_o * w_o
        yd, sd, qd = matmul_stats(xs.reshape(rows_out, CPAD), p["wd"])
        ydcol = 0
    o1 = o1[:rows_in].reshape(n, h, w, CPAD)

    # 3x3 conv on the real cmid channels only (K = round_up(9*cmid, 128))
    y2, s2, q2, _, h2, w2 = conv3x3_stats(o1[..., :cmid], p["w2"], stride)
    rows2 = n * h2 * w2
    o2 = bn_apply(y2, s2, q2, p["g2"], p["b2"], nrows=rows2, relu=True)
    o2 = o2[:rows2]

    # final 1x1 conv; its BN + shortcut BN + residual add + ReLU in one kernel
    y3, s3, q3 = matmul_stats(o2, p["w3"])
    out = bn_add_relu(y3, s3, q3, p["g3"], p["b3"],
                      yd, sd, qd, p["gd"], p["bd"],
                      nrows=rows_out, ydcol=ydcol)
    return out[:rows_out].reshape(n_o, h_o, w_o, CPAD)


def resnet_forward(params, x_real):
    # stem: 3x3 / stride-2 conv directly on the real (unpadded) input channels
    y, s, q, n, ho, wo = conv3x3_stats(x_real, params["stem_w"], stride=2)
    rows = n * ho * wo
    out = bn_apply(y, s, q, params["stem_g"], params["stem_b"], nrows=rows,
                   relu=True)
    out = out[:rows].reshape(n, ho, wo, CPAD)
    out = maxpool2d(out, 3, 2, 1)
    out = bottleneck(out, params["block1"], stride=1, cmid=8)
    out = bottleneck(out, params["block2"], stride=2, cmid=16)
    n2, h2, w2, c2 = out.shape
    return out.reshape(n2, h2 * w2, c2)            # features for the fused tail


def model_and_loss_forward(params, data_nchw, target):
    # mirrors ModelAndLoss.forward(data, target) -> (loss, output)
    x = jnp.transpose(data_nchw, (0, 2, 3, 1)).astype(jnp.bfloat16)  # NCHW->NHWC
    feats = resnet_forward(params, x)
    onehot = jax.nn.one_hot(target, CLS_PAD, dtype=jnp.float32)
    logits_pad, loss = tail_loss(feats, params["fc_w"], params["fc_b"], onehot)
    return loss[0, 0], logits_pad[:, :NUM_CLASSES]


# ---------------------------------------------------------------------------
# Deterministic parameter init; weights converted ONCE to matmul layout:
# K = kh*kw*cin_real rounded up to 128, Cout padded to 128 lanes, bf16.
# ---------------------------------------------------------------------------
def _prep_conv1x1(key, cout, cin):
    w = jax.random.normal(key, (cout, cin), jnp.float32) * (2.0 / cin) ** 0.5
    wmat = jnp.pad(jnp.transpose(w), ((0, CPAD - cin), (0, CPAD - cout)))
    return wmat.astype(jnp.bfloat16)                       # (128, 128)


def _prep_conv3x3(key, cout, cin):
    fan_in = 9 * cin
    w = jax.random.normal(key, (cout, cin, 3, 3), jnp.float32) * (2.0 / fan_in) ** 0.5
    wmat = jnp.transpose(w, (2, 3, 1, 0)).reshape(9 * cin, cout)   # [tap,cin] x cout
    kpad = _round_up(9 * cin, 128)
    wmat = jnp.pad(wmat, ((0, kpad - 9 * cin), (0, CPAD - cout)))
    return wmat.astype(jnp.bfloat16)                       # (kpad, 128)


def _prep_bn(c):
    g = jnp.pad(jnp.ones((1, c), jnp.float32), ((0, 0), (0, CPAD - c)))
    b = jnp.zeros((1, CPAD), jnp.float32)
    return g, b


def _block_params(key, cin, cmid, cout, stride):
    k1, k2, k3, kd = jax.random.split(key, 4)
    g1, b1 = _prep_bn(cmid)
    g2, b2 = _prep_bn(cmid)
    g3, b3 = _prep_bn(cout)
    gd, bd = _prep_bn(cout)
    w1 = _prep_conv1x1(k1, cmid, cin)
    wd = _prep_conv1x1(kd, cout, cin)
    p = dict(w1=w1, g1=g1, b1=b1,
             w2=_prep_conv3x3(k2, cmid, cmid), g2=g2, b2=b2,
             w3=_prep_conv1x1(k3, cout, cmid), g3=g3, b3=b3,
             wd=wd, gd=gd, bd=bd)
    if stride == 1:
        p["w1wd"] = jnp.concatenate([w1, wd], axis=1)       # (128, 256) packed RHS
    return p


def init_params(key):
    ks, k1, k2, kf = jax.random.split(key, 4)
    stem_g, stem_b = _prep_bn(16)
    fc_w = jax.random.normal(kf, (64, NUM_CLASSES), jnp.float32) * (1.0 / 64.0) ** 0.5
    fc_w = jnp.pad(fc_w, ((0, CPAD - 64), (0, CLS_PAD - NUM_CLASSES))).astype(jnp.bfloat16)
    return dict(
        stem_w=_prep_conv3x3(ks, 16, 4), stem_g=stem_g, stem_b=stem_b,
        block1=_block_params(k1, 16, 8, 32, 1),
        block2=_block_params(k2, 32, 16, 64, 2),
        fc_w=fc_w,
        fc_b=jnp.zeros((1, CLS_PAD), jnp.float32),
    )


# TODO(synk): DDP / AMP autocast / GradScaler / fp16 network conversion and
# BatchNorm running-stat buffer updates from the reference module are
# distributed-training runtime features with no kernel equivalent; only the
# forward (model + loss) math is implemented here.

if __name__ == "__main__":
    key = jax.random.PRNGKey(0)
    kp, kd, kt = jax.random.split(key, 3)
    params = init_params(kp)

    data = jax.random.normal(kd, (2, 4, 16, 16), jnp.float32)   # NCHW like PyTorch
    target = jax.random.randint(kt, (2,), 0, NUM_CLASSES)

    loss, output = jax.jit(model_and_loss_forward)(params, data, target)
    jax.block_until_ready((loss, output))
    assert output.shape == (2, NUM_CLASSES) and loss.shape == ()
    assert bool(jnp.isfinite(loss))
    print("KERNEL_OK")
</pallas_src>

<mosaic_0001>
module attributes {stable_mosaic.version = 11 : i64} {
  func.func @bn_apply_kernel(%arg0: i32, %arg1: memref<128x128xbf16, #tpu.memory_space<vmem>>, %arg2: memref<1x128xf32, #tpu.memory_space<vmem>>, %arg3: memref<1x128xf32, #tpu.memory_space<vmem>>, %arg4: memref<1x128xf32, #tpu.memory_space<vmem>>, %arg5: memref<1x128xf32, #tpu.memory_space<vmem>>, %arg6: memref<128x128xbf16, #tpu.memory_space<vmem>>) attributes {dimension_semantics = [#tpu.dimension_semantics<parallel>], iteration_bounds = array<i64: 1>, scalar_prefetch = 0 : i64, scratch_operands = 0 : i64, tpu.core_type = #tpu.core_type<tc>, window_params = [{transform_indices = @transform_0, window_bounds = array<i64: 128, 128>}, {pipeline_mode = #tpu.pipeline_mode<synchronous>, transform_indices = @transform_1, window_bounds = array<i64: 1, 128>}, {pipeline_mode = #tpu.pipeline_mode<synchronous>, transform_indices = @transform_2, window_bounds = array<i64: 1, 128>}, {pipeline_mode = #tpu.pipeline_mode<synchronous>, transform_indices = @transform_3, window_bounds = array<i64: 1, 128>}, {pipeline_mode = #tpu.pipeline_mode<synchronous>, transform_indices = @transform_4, window_bounds = array<i64: 1, 128>}, {transform_indices = @transform_5, window_bounds = array<i64: 128, 128>}]} {
    %c0 = arith.constant 0 : index
    %c0_0 = arith.constant 0 : index
    %0 = vector.load %arg2[%c0, %c0_0] : memref<1x128xf32, #tpu.memory_space<vmem>>, vector<1x128xf32>
    %cst = arith.constant 7.812500e-03 : f32
    %1 = vector.broadcast %cst : f32 to vector<1x128xf32>
    %2 = arith.mulf %0, %1 : vector<1x128xf32>
    %c0_1 = arith.constant 0 : index
    %c0_2 = arith.constant 0 : index
    %3 = vector.load %arg3[%c0_1, %c0_2] : memref<1x128xf32, #tpu.memory_space<vmem>>, vector<1x128xf32>
    %cst_3 = arith.constant 7.812500e-03 : f32
    %4 = vector.broadcast %cst_3 : f32 to vector<1x128xf32>
    %5 = arith.mulf %3, %4 : vector<1x128xf32>
    %6 = arith.mulf %2, %2 : vector<1x128xf32>
    %7 = arith.subf %5, %6 : vector<1x128xf32>
    %cst_4 = arith.constant 0.000000e+00 : f32
    %8 = vector.broadcast %cst_4 : f32 to vector<1x128xf32>
    %9 = arith.maximumf %7, %8 : vector<1x128xf32>
    %cst_5 = arith.constant 9.99999974E-6 : f32
    %10 = vector.broadcast %cst_5 : f32 to vector<1x128xf32>
    %11 = arith.addf %9, %10 : vector<1x128xf32>
    %12 = math.rsqrt %11 : vector<1x128xf32>
    %c0_6 = arith.constant 0 : index
    %c0_7 = arith.constant 0 : index
    %13 = vector.load %arg4[%c0_6, %c0_7] : memref<1x128xf32, #tpu.memory_space<vmem>>, vector<1x128xf32>
    %14 = arith.mulf %12, %13 : vector<1x128xf32>
    %c0_8 = arith.constant 0 : index
    %c0_9 = arith.constant 0 : index
    %15 = vector.load %arg5[%c0_8, %c0_9] : memref<1x128xf32, #tpu.memory_space<vmem>>, vector<1x128xf32>
    %16 = arith.mulf %2, %14 : vector<1x128xf32>
    %17 = arith.subf %15, %16 : vector<1x128xf32>
    %c0_10 = arith.constant 0 : index
    %c0_11 = arith.constant 0 : index
    %18 = vector.load %arg1[%c0_10, %c0_11] : memref<128x128xbf16, #tpu.memory_space<vmem>>, vector<128x128xbf16>
    %19 = arith.extf %18 : vector<128x128xbf16> to vector<128x128xf32>
    %20 = vector.broadcast %14 : vector<1x128xf32> to vector<128x128xf32>
    %21 = arith.mulf %19, %20 : vector<128x128xf32>
    %22 = vector.broadcast %17 : vector<1x128xf32> to vector<128x128xf32>
    %23 = arith.addf %21, %22 : vector<128x128xf32>
    %cst_12 = arith.constant 0.000000e+00 : f32
    %24 = vector.broadcast %cst_12 : f32 to vector<128x128xf32>
    %25 = arith.maximumf %23, %24 : vector<128x128xf32>
    %26 = arith.truncf %25 : vector<128x128xf32> to vector<128x128xbf16>
    %c0_13 = arith.constant 0 : index
    %c0_14 = arith.constant 0 : index
    %27 = vector.load %arg6[%c0_13, %c0_14] : memref<128x128xbf16, #tpu.memory_space<vmem>>, vector<128x128xbf16>
    tpu.vector_store %arg6[%c0_13, %c0_14], %26 {strides = array<i32>} : memref<128x128xbf16, #tpu.memory_space<vmem>>, vector<128x128xbf16>,
    return
  }
  func.func @transform_0(%arg0: i32) -> (i32, i32) {
    %c0_i32 = arith.constant 0 : i32
    %c0_i32_0 = arith.constant 0 : i32
    return %arg0, %c0_i32 : i32, i32
  }
  func.func @transform_1(%arg0: i32) -> (i32, i32) {
    %c0_i32 = arith.constant 0 : i32
    %c0_i32_0 = arith.constant 0 : i32
    %c0_i32_1 = arith.constant 0 : i32
    return %c0_i32, %c0_i32_0 : i32, i32
  }
  func.func @transform_2(%arg0: i32) -> (i32, i32) {
    %c0_i32 = arith.constant 0 : i32
    %c0_i32_0 = arith.constant 0 : i32
    %c0_i32_1 = arith.constant 0 : i32
    return %c0_i32, %c0_i32_0 : i32, i32
  }
  func.func @transform_3(%arg0: i32) -> (i32, i32) {
    %c0_i32 = arith.constant 0 : i32
    %c0_i32_0 = arith.constant 0 : i32
    %c0_i32_1 = arith.constant 0 : i32
    return %c0_i32, %c0_i32_0 : i32, i32
  }
  func.func @transform_4(%arg0: i32) -> (i32, i32) {
    %c0_i32 = arith.constant 0 : i32
    %c0_i32_0 = arith.constant 0 : i32
    %c0_i32_1 = arith.constant 0 : i32
    return %c0_i32, %c0_i32_0 : i32, i32
  }
  func.func @transform_5(%arg0: i32) -> (i32, i32) {
    %c0_i32 = arith.constant 0 : i32
    %c0_i32_0 = arith.constant 0 : i32
    return %arg0, %c0_i32 : i32, i32
  }
}

module attributes {stable_mosaic.version = 11 : i64} {
  func.func @matmul_stats_kernel(%arg0: i32, %arg1: memref<128x128xbf16, #tpu.memory_space<vmem>>, %arg2: memref<128x128xbf16, #tpu.memory_space<vmem>>, %arg3: memref<128x128xbf16, #tpu.memory_space<vmem>>, %arg4: memref<1x1x128xf32, #tpu.memory_space<vmem>>, %arg5: memref<1x1x128xf32, #tpu.memory_space<vmem>>) attributes {dimension_semantics = [#tpu.dimension_semantics<parallel>], iteration_bounds = array<i64: 1>, scalar_prefetch = 0 : i64, scratch_operands = 0 : i64, tpu.core_type = #tpu.core_type<tc>, window_params = [{transform_indices = @transform_0, window_bounds = array<i64: 128, 128>}, {pipeline_mode = #tpu.pipeline_mode<synchronous>, transform_indices = @transform_1, window_bounds = array<i64: 128, 128>}, {transform_indices = @transform_2, window_bounds = array<i64: 128, 128>}, {transform_indices = @transform_3, window_bounds = array<i64: 1, 1, 128>}, {transform_indices = @transform_4, window_bounds = array<i64: 1, 1, 128>}]} {
    %c0 = arith.constant 0 : index
    %c0_0 = arith.constant 0 : index
    %0 = vector.load %arg1[%c0, %c0_0] : memref<128x128xbf16, #tpu.memory_space<vmem>>, vector<128x128xbf16>
    %c0_1 = arith.constant 0 : index
    %c0_2 = arith.constant 0 : index
    %1 = vector.load %arg2[%c0_1, %c0_2] : memref<128x128xbf16, #tpu.memory_space<vmem>>, vector<128x128xbf16>
    %cst = arith.constant dense<0.000000e+00> : vector<128x128xf32>
    %2 = tpu.matmul %0, %1, %cst {dimension_numbers = #tpu.dot_dimension_numbers<[1], [0], [0], [1], [0, 0, 1, 1], [], []>} : vector<128x128xbf16>, vector<128x128xbf16>, vector<128x128xf32> -> vector<128x128xf32>
    %3 = arith.truncf %2 : vector<128x128xf32> to vector<128x128xbf16>
    %c0_3 = arith.constant 0 : index
    %c0_4 = arith.constant 0 : index
    %4 = vector.load %arg3[%c0_3, %c0_4] : memref<128x128xbf16, #tpu.memory_space<vmem>>, vector<128x128xbf16>
    tpu.vector_store %arg3[%c0_3, %c0_4], %3 {strides = array<i32>} : memref<128x128xbf16, #tpu.memory_space<vmem>>, vector<128x128xbf16>,
    %cst_5 = arith.constant dense<0.000000e+00> : vector<128xf32>
    %5 = vector.multi_reduction <add>, %2, %cst_5 [0] : vector<128x128xf32> to vector<128xf32>
    %6 = vector.shape_cast %5 : vector<128xf32> to vector<1x128xf32>
    %7 = vector.shape_cast %6 : vector<1x128xf32> to vector<1x1x128xf32>
    %c0_6 = arith.constant 0 : index
    %c0_7 = arith.constant 0 : index
    %c0_8 = arith.constant 0 : index
    %8 = vector.load %arg4[%c0_6, %c0_7, %c0_8] : memref<1x1x128xf32, #tpu.memory_space<vmem>>, vector<1x1x128xf32>
    tpu.vector_store %arg4[%c0_6, %c0_7, %c0_8], %7 {strides = array<i32>} : memref<1x1x128xf32, #tpu.memory_space<vmem>>, vector<1x1x128xf32>,
    %9 = arith.mulf %2, %2 : vector<128x128xf32>
    %cst_9 = arith.constant dense<0.000000e+00> : vector<128xf32>
    %10 = vector.multi_reduction <add>, %9, %cst_9 [0] : vector<128x128xf32> to vector<128xf32>
    %11 = vector.shape_cast %10 : vector<128xf32> to vector<1x128xf32>
    %12 = vector.shape_cast %11 : vector<1x128xf32> to vector<1x1x128xf32>
    %c0_10 = arith.constant 0 : index
    %c0_11 = arith.constant 0 : index
    %c0_12 = arith.constant 0 : index
    %13 = vector.load %arg5[%c0_10, %c0_11, %c0_12] : memref<1x1x128xf32, #tpu.memory_space<vmem>>, vector<1x1x128xf32>
    tpu.vector_store %arg5[%c0_10, %c0_11, %c0_12], %12 {strides = array<i32>} : memref<1x1x128xf32, #tpu.memory_space<vmem>>, vector<1x1x128xf32>,
    return
  }
  func.func @transform_0(%arg0: i32) -> (i32, i32) {
    %c0_i32 = arith.constant 0 : i32
    %c0_i32_0 = arith.constant 0 : i32
    return %arg0, %c0_i32 : i32, i32
  }
  func.func @transform_1(%arg0: i32) -> (i32, i32) {
    %c0_i32 = arith.constant 0 : i32
    %c0_i32_0 = arith.constant 0 : i32
    %c0_i32_1 = arith.constant 0 : i32
    return %c0_i32, %c0_i32_0 : i32, i32
  }
  func.func @transform_2(%arg0: i32) -> (i32, i32) {
    %c0_i32 = arith.constant 0 : i32
    %c0_i32_0 = arith.constant 0 : i32
    return %arg0, %c0_i32 : i32, i32
  }
  func.func @transform_3(%arg0: i32) -> (i32, i32, i32) {
    %c0_i32 = arith.constant 0 : i32
    %c0_i32_0 = arith.constant 0 : i32
    %c0_i32_1 = arith.constant 0 : i32
    return %arg0, %c0_i32, %c0_i32_0 : i32, i32, i32
  }
  func.func @transform_4(%arg0: i32) -> (i32, i32, i32) {
    %c0_i32 = arith.constant 0 : i32
    %c0_i32_0 = arith.constant 0 : i32
    %c0_i32_1 = arith.constant 0 : i32
    return %arg0, %c0_i32, %c0_i32_0 : i32, i32, i32
  }
}

module attributes {stable_mosaic.version = 11 : i64} {
  func.func @bn_apply_kernel(%arg0: i32, %arg1: memref<32x128xbf16, #tpu.memory_space<vmem>>, %arg2: memref<1x128xf32, #tpu.memory_space<vmem>>, %arg3: memref<1x128xf32, #tpu.memory_space<vmem>>, %arg4: memref<1x128xf32, #tpu.memory_space<vmem>>, %arg5: memref<1x128xf32, #tpu.memory_space<vmem>>, %arg6: memref<32x128xbf16, #tpu.memory_space<vmem>>) attributes {dimension_semantics = [#tpu.dimension_semantics<parallel>], iteration_bounds = array<i64: 1>, scalar_prefetch = 0 : i64, scratch_operands = 0 : i64, tpu.core_type = #tpu.core_type<tc>, window_params = [{transform_indices = @transform_0, window_bounds = array<i64: 32, 128>}, {pipeline_mode = #tpu.pipeline_mode<synchronous>, transform_indices = @transform_1, window_bounds = array<i64: 1, 128>}, {pipeline_mode = #tpu.pipeline_mode<synchronous>, transform_indices = @transform_2, window_bounds = array<i64: 1, 128>}, {pipeline_mode = #tpu.pipeline_mode<synchronous>, transform_indices = @transform_3, window_bounds = array<i64: 1, 128>}, {pipeline_mode = #tpu.pipeline_mode<synchronous>, transform_indices = @transform_4, window_bounds = array<i64: 1, 128>}, {transform_indices = @transform_5, window_bounds = array<i64: 32, 128>}]} {
    %c0 = arith.constant 0 : index
    %c0_0 = arith.constant 0 : index
    %0 = vector.load %arg2[%c0, %c0_0] : memref<1x128xf32, #tpu.memory_space<vmem>>, vector<1x128xf32>
    %cst = arith.constant 3.125000e-02 : f32
    %1 = vector.broadcast %cst : f32 to vector<1x128xf32>
    %2 = arith.mulf %0, %1 : vector<1x128xf32>
    %c0_1 = arith.constant 0 : index
    %c0_2 = arith.constant 0 : index
    %3 = vector.load %arg3[%c0_1, %c0_2] : memref<1x128xf32, #tpu.memory_space<vmem>>, vector<1x128xf32>
    %cst_3 = arith.constant 3.125000e-02 : f32
    %4 = vector.broadcast %cst_3 : f32 to vector<1x128xf32>
    %5 = arith.mulf %3, %4 : vector<1x128xf32>
    %6 = arith.mulf %2, %2 : vector<1x128xf32>
    %7 = arith.subf %5, %6 : vector<1x128xf32>
    %cst_4 = arith.constant 0.000000e+00 : f32
    %8 = vector.broadcast %cst_4 : f32 to vector<1x128xf32>
    %9 = arith.maximumf %7, %8 : vector<1x128xf32>
    %cst_5 = arith.constant 9.99999974E-6 : f32
    %10 = vector.broadcast %cst_5 : f32 to vector<1x128xf32>
    %11 = arith.addf %9, %10 : vector<1x128xf32>
    %12 = math.rsqrt %11 : vector<1x128xf32>
    %c0_6 = arith.constant 0 : index
    %c0_7 = arith.constant 0 : index
    %13 = vector.load %arg4[%c0_6, %c0_7] : memref<1x128xf32, #tpu.memory_space<vmem>>, vector<1x128xf32>
    %14 = arith.mulf %12, %13 : vector<1x128xf32>
    %c0_8 = arith.constant 0 : index
    %c0_9 = arith.constant 0 : index
    %15 = vector.load %arg5[%c0_8, %c0_9] : memref<1x128xf32, #tpu.memory_space<vmem>>, vector<1x128xf32>
    %16 = arith.mulf %2, %14 : vector<1x128xf32>
    %17 = arith.subf %15, %16 : vector<1x128xf32>
    %c0_10 = arith.constant 0 : index
    %c0_11 = arith.constant 0 : index
    %18 = vector.load %arg1[%c0_10, %c0_11] : memref<32x128xbf16, #tpu.memory_space<vmem>>, vector<32x128xbf16>
    %19 = arith.extf %18 : vector<32x128xbf16> to vector<32x128xf32>
    %20 = vector.broadcast %14 : vector<1x128xf32> to vector<32x128xf32>
    %21 = arith.mulf %19, %20 : vector<32x128xf32>
    %22 = vector.broadcast %17 : vector<1x128xf32> to vector<32x128xf32>
    %23 = arith.addf %21, %22 : vector<32x128xf32>
    %cst_12 = arith.constant 0.000000e+00 : f32
    %24 = vector.broadcast %cst_12 : f32 to vector<32x128xf32>
    %25 = arith.maximumf %23, %24 : vector<32x128xf32>
    %26 = arith.truncf %25 : vector<32x128xf32> to vector<32x128xbf16>
    %c0_13 = arith.constant 0 : index
    %c0_14 = arith.constant 0 : index
    %27 = vector.load %arg6[%c0_13, %c0_14] : memref<32x128xbf16, #tpu.memory_space<vmem>>, vector<32x128xbf16>
    tpu.vector_store %arg6[%c0_13, %c0_14], %26 {strides = array<i32>} : memref<32x128xbf16, #tpu.memory_space<vmem>>, vector<32x128xbf16>,
    return
  }
  func.func @transform_0(%arg0: i32) -> (i32, i32) {
    %c0_i32 = arith.constant 0 : i32
    %c0_i32_0 = arith.constant 0 : i32
    return %arg0, %c0_i32 : i32, i32
  }
  func.func @transform_1(%arg0: i32) -> (i32, i32) {
    %c0_i32 = arith.constant 0 : i32
    %c0_i32_0 = arith.constant 0 : i32
    %c0_i32_1 = arith.constant 0 : i32
    return %c0_i32, %c0_i32_0 : i32, i32
  }
  func.func @transform_2(%arg0: i32) -> (i32, i32) {
    %c0_i32 = arith.constant 0 : i32
    %c0_i32_0 = arith.constant 0 : i32
    %c0_i32_1 = arith.constant 0 : i32
    return %c0_i32, %c0_i32_0 : i32, i32
  }
  func.func @transform_3(%arg0: i32) -> (i32, i32) {
    %c0_i32 = arith.constant 0 : i32
    %c0_i32_0 = arith.constant 0 : i32
    %c0_i32_1 = arith.constant 0 : i32
    return %c0_i32, %c0_i32_0 : i32, i32
  }
  func.func @transform_4(%arg0: i32) -> (i32, i32) {
    %c0_i32 = arith.constant 0 : i32
    %c0_i32_0 = arith.constant 0 : i32
    %c0_i32_1 = arith.constant 0 : i32
    return %c0_i32, %c0_i32_0 : i32, i32
  }
  func.func @transform_5(%arg0: i32) -> (i32, i32) {
    %c0_i32 = arith.constant 0 : i32
    %c0_i32_0 = arith.constant 0 : i32
    return %arg0, %c0_i32 : i32, i32
  }
}

module attributes {stable_mosaic.version = 11 : i64} {
  func.func @maxpool_kernel(%arg0: i32, %arg1: memref<32x1152xbf16, #tpu.memory_space<vmem>>, %arg2: memref<32x128xbf16, #tpu.memory_space<vmem>>) attributes {dimension_semantics = [#tpu.dimension_semantics<parallel>], iteration_bounds = array<i64: 1>, scalar_prefetch = 0 : i64, scratch_operands = 0 : i64, tpu.core_type = #tpu.core_type<tc>, window_params = [{transform_indices = @transform_0, window_bounds = array<i64: 32, 1152>}, {transform_indices = @transform_1, window_bounds = array<i64: 32, 128>}]} {
    %c0 = arith.constant 0 : index
    %c0_0 = arith.constant 0 : index
    %0 = vector.load %arg1[%c0, %c0_0] : memref<32x1152xbf16, #tpu.memory_space<vmem>>, vector<32x128xbf16>
    %c0_1 = arith.constant 0 : index
    %c128 = arith.constant 128 : index
    %1 = vector.load %arg1[%c0_1, %c128] : memref<32x1152xbf16, #tpu.memory_space<vmem>>, vector<32x128xbf16>
    %2 = arith.maximumf %0, %1 : vector<32x128xbf16>
    %c0_2 = arith.constant 0 : index
    %c256 = arith.constant 256 : index
    %3 = vector.load %arg1[%c0_2, %c256] : memref<32x1152xbf16, #tpu.memory_space<vmem>>, vector<32x128xbf16>
    %4 = arith.maximumf %2, %3 : vector<32x128xbf16>
    %c0_3 = arith.constant 0 : index
    %c384 = arith.constant 384 : index
    %5 = vector.load %arg1[%c0_3, %c384] : memref<32x1152xbf16, #tpu.memory_space<vmem>>, vector<32x128xbf16>
    %6 = arith.maximumf %4, %5 : vector<32x128xbf16>
    %c0_4 = arith.constant 0 : index
    %c512 = arith.constant 512 : index
    %7 = vector.load %arg1[%c0_4, %c512] : memref<32x1152xbf16, #tpu.memory_space<vmem>>, vector<32x128xbf16>
    %8 = arith.maximumf %6, %7 : vector<32x128xbf16>
    %c0_5 = arith.constant 0 : index
    %c640 = arith.constant 640 : index
    %9 = vector.load %arg1[%c0_5, %c640] : memref<32x1152xbf16, #tpu.memory_space<vmem>>, vector<32x128xbf16>
    %10 = arith.maximumf %8, %9 : vector<32x128xbf16>
    %c0_6 = arith.constant 0 : index
    %c768 = arith.constant 768 : index
    %11 = vector.load %arg1[%c0_6, %c768] : memref<32x1152xbf16, #tpu.memory_space<vmem>>, vector<32x128xbf16>
    %12 = arith.maximumf %10, %11 : vector<32x128xbf16>
    %c0_7 = arith.constant 0 : index
    %c896 = arith.constant 896 : index
    %13 = vector.load %arg1[%c0_7, %c896] : memref<32x1152xbf16, #tpu.memory_space<vmem>>, vector<32x128xbf16>
    %14 = arith.maximumf %12, %13 : vector<32x128xbf16>
    %c0_8 = arith.constant 0 : index
    %c1024 = arith.constant 1024 : index
    %15 = vector.load %arg1[%c0_8, %c1024] : memref<32x1152xbf16, #tpu.memory_space<vmem>>, vector<32x128xbf16>
    %16 = arith.maximumf %14, %15 : vector<32x128xbf16>
    %c0_9 = arith.constant 0 : index
    %c0_10 = arith.constant 0 : index
    %17 = vector.load %arg2[%c0_9, %c0_10] : memref<32x128xbf16, #tpu.memory_space<vmem>>, vector<32x128xbf16>
    tpu.vector_store %arg2[%c0_9, %c0_10], %16 {strides = array<i32>} : memref<32x128xbf16, #tpu.memory_space<vmem>>, vector<32x128xbf16>,
    return
  }
  func.func @transform_0(%arg0: i32) -> (i32, i32) {
    %c0_i32 = arith.constant 0 : i32
    %c0_i32_0 = arith.constant 0 : i32
    return %arg0, %c0_i32 : i32, i32
  }
  func.func @transform_1(%arg0: i32) -> (i32, i32) {
    %c0_i32 = arith.constant 0 : i32
    %c0_i32_0 = arith.constant 0 : i32
    return %arg0, %c0_i32 : i32, i32
  }
}

module attributes {stable_mosaic.version = 11 : i64} {
  func.func @matmul_stats_kernel(%arg0: i32, %arg1: memref<32x128xbf16, #tpu.memory_space<vmem>>, %arg2: memref<128x256xbf16, #tpu.memory_space<vmem>>, %arg3: memref<32x256xbf16, #tpu.memory_space<vmem>>, %arg4: memref<1x1x256xf32, #tpu.memory_space<vmem>>, %arg5: memref<1x1x256xf32, #tpu.memory_space<vmem>>) attributes {dimension_semantics = [#tpu.dimension_semantics<parallel>], iteration_bounds = array<i64: 1>, scalar_prefetch = 0 : i64, scratch_operands = 0 : i64, tpu.core_type = #tpu.core_type<tc>, window_params = [{transform_indices = @transform_0, window_bounds = array<i64: 32, 128>}, {pipeline_mode = #tpu.pipeline_mode<synchronous>, transform_indices = @transform_1, window_bounds = array<i64: 128, 256>}, {transform_indices = @transform_2, window_bounds = array<i64: 32, 256>}, {transform_indices = @transform_3, window_bounds = array<i64: 1, 1, 256>}, {transform_indices = @transform_4, window_bounds = array<i64: 1, 1, 256>}]} {
    %c0 = arith.constant 0 : index
    %c0_0 = arith.constant 0 : index
    %0 = vector.load %arg1[%c0, %c0_0] : memref<32x128xbf16, #tpu.memory_space<vmem>>, vector<32x128xbf16>
    %c0_1 = arith.constant 0 : index
    %c0_2 = arith.constant 0 : index
    %1 = vector.load %arg2[%c0_1, %c0_2] : memref<128x256xbf16, #tpu.memory_space<vmem>>, vector<128x256xbf16>
    %cst = arith.constant dense<0.000000e+00> : vector<32x256xf32>
    %2 = tpu.matmul %0, %1, %cst {dimension_numbers = #tpu.dot_dimension_numbers<[1], [0], [0], [1], [0, 0, 1, 1], [], []>} : vector<32x128xbf16>, vector<128x256xbf16>, vector<32x256xf32> -> vector<32x256xf32>
    %3 = arith.truncf %2 : vector<32x256xf32> to vector<32x256xbf16>
    %c0_3 = arith.constant 0 : index
    %c0_4 = arith.constant 0 : index
    %4 = vector.load %arg3[%c0_3, %c0_4] : memref<32x256xbf16, #tpu.memory_space<vmem>>, vector<32x256xbf16>
    tpu.vector_store %arg3[%c0_3, %c0_4], %3 {strides = array<i32>} : memref<32x256xbf16, #tpu.memory_space<vmem>>, vector<32x256xbf16>,
    %cst_5 = arith.constant dense<0.000000e+00> : vector<256xf32>
    %5 = vector.multi_reduction <add>, %2, %cst_5 [0] : vector<32x256xf32> to vector<256xf32>
    %6 = vector.shape_cast %5 : vector<256xf32> to vector<1x256xf32>
    %7 = vector.shape_cast %6 : vector<1x256xf32> to vector<1x1x256xf32>
    %c0_6 = arith.constant 0 : index
    %c0_7 = arith.constant 0 : index
    %c0_8 = arith.constant 0 : index
    %8 = vector.load %arg4[%c0_6, %c0_7, %c0_8] : memref<1x1x256xf32, #tpu.memory_space<vmem>>, vector<1x1x256xf32>
    tpu.vector_store %arg4[%c0_6, %c0_7, %c0_8], %7 {strides = array<i32>} : memref<1x1x256xf32, #tpu.memory_space<vmem>>, vector<1x1x256xf32>,
    %9 = arith.mulf %2, %2 : vector<32x256xf32>
    %cst_9 = arith.constant dense<0.000000e+00> : vector<256xf32>
    %10 = vector.multi_reduction <add>, %9, %cst_9 [0] : vector<32x256xf32> to vector<256xf32>
    %11 = vector.shape_cast %10 : vector<256xf32> to vector<1x256xf32>
    %12 = vector.shape_cast %11 : vector<1x256xf32> to vector<1x1x256xf32>
    %c0_10 = arith.constant 0 : index
    %c0_11 = arith.constant 0 : index
    %c0_12 = arith.constant 0 : index
    %13 = vector.load %arg5[%c0_10, %c0_11, %c0_12] : memref<1x1x256xf32, #tpu.memory_space<vmem>>, vector<1x1x256xf32>
    tpu.vector_store %arg5[%c0_10, %c0_11, %c0_12], %12 {strides = array<i32>} : memref<1x1x256xf32, #tpu.memory_space<vmem>>, vector<1x1x256xf32>,
    return
  }
  func.func @transform_0(%arg0: i32) -> (i32, i32) {
    %c0_i32 = arith.constant 0 : i32
    %c0_i32_0 = arith.constant 0 : i32
    return %arg0, %c0_i32 : i32, i32
  }
  func.func @transform_1(%arg0: i32) -> (i32, i32) {
    %c0_i32 = arith.constant 0 : i32
    %c0_i32_0 = arith.constant 0 : i32
    %c0_i32_1 = arith.constant 0 : i32
    return %c0_i32, %c0_i32_0 : i32, i32
  }
  func.func @transform_2(%arg0: i32) -> (i32, i32) {
    %c0_i32 = arith.constant 0 : i32
    %c0_i32_0 = arith.constant 0 : i32
    return %arg0, %c0_i32 : i32, i32
  }
  func.func @transform_3(%arg0: i32) -> (i32, i32, i32) {
    %c0_i32 = arith.constant 0 : i32
    %c0_i32_0 = arith.constant 0 : i32
    %c0_i32_1 = arith.constant 0 : i32
    return %arg0, %c0_i32, %c0_i32_0 : i32, i32, i32
  }
  func.func @transform_4(%arg0: i32) -> (i32, i32, i32) {
    %c0_i32 = arith.constant 0 : i32
    %c0_i32_0 = arith.constant 0 : i32
    %c0_i32_1 = arith.constant 0 : i32
    return %arg0, %c0_i32, %c0_i32_0 : i32, i32, i32
  }
}

module attributes {stable_mosaic.version = 11 : i64} {
  func.func @matmul_stats_kernel(%arg0: i32, %arg1: memref<32x128xbf16, #tpu.memory_space<vmem>>, %arg2: memref<128x128xbf16, #tpu.memory_space<vmem>>, %arg3: memref<32x128xbf16, #tpu.memory_space<vmem>>, %arg4: memref<1x1x128xf32, #tpu.memory_space<vmem>>, %arg5: memref<1x1x128xf32, #tpu.memory_space<vmem>>) attributes {dimension_semantics = [#tpu.dimension_semantics<parallel>], iteration_bounds = array<i64: 1>, scalar_prefetch = 0 : i64, scratch_operands = 0 : i64, tpu.core_type = #tpu.core_type<tc>, window_params = [{transform_indices = @transform_0, window_bounds = array<i64: 32, 128>}, {pipeline_mode = #tpu.pipeline_mode<synchronous>, transform_indices = @transform_1, window_bounds = array<i64: 128, 128>}, {transform_indices = @transform_2, window_bounds = array<i64: 32, 128>}, {transform_indices = @transform_3, window_bounds = array<i64: 1, 1, 128>}, {transform_indices = @transform_4, window_bounds = array<i64: 1, 1, 128>}]} {
    %c0 = arith.constant 0 : index
    %c0_0 = arith.constant 0 : index
    %0 = vector.load %arg1[%c0, %c0_0] : memref<32x128xbf16, #tpu.memory_space<vmem>>, vector<32x128xbf16>
    %c0_1 = arith.constant 0 : index
    %c0_2 = arith.constant 0 : index
    %1 = vector.load %arg2[%c0_1, %c0_2] : memref<128x128xbf16, #tpu.memory_space<vmem>>, vector<128x128xbf16>
    %cst = arith.constant dense<0.000000e+00> : vector<32x128xf32>
    %2 = tpu.matmul %0, %1, %cst {dimension_numbers = #tpu.dot_dimension_numbers<[1], [0], [0], [1], [0, 0, 1, 1], [], []>} : vector<32x128xbf16>, vector<128x128xbf16>, vector<32x128xf32> -> vector<32x128xf32>
    %3 = arith.truncf %2 : vector<32x128xf32> to vector<32x128xbf16>
    %c0_3 = arith.constant 0 : index
    %c0_4 = arith.constant 0 : index
    %4 = vector.load %arg3[%c0_3, %c0_4] : memref<32x128xbf16, #tpu.memory_space<vmem>>, vector<32x128xbf16>
    tpu.vector_store %arg3[%c0_3, %c0_4], %3 {strides = array<i32>} : memref<32x128xbf16, #tpu.memory_space<vmem>>, vector<32x128xbf16>,
    %cst_5 = arith.constant dense<0.000000e+00> : vector<128xf32>
    %5 = vector.multi_reduction <add>, %2, %cst_5 [0] : vector<32x128xf32> to vector<128xf32>
    %6 = vector.shape_cast %5 : vector<128xf32> to vector<1x128xf32>
    %7 = vector.shape_cast %6 : vector<1x128xf32> to vector<1x1x128xf32>
    %c0_6 = arith.constant 0 : index
    %c0_7 = arith.constant 0 : index
    %c0_8 = arith.constant 0 : index
    %8 = vector.load %arg4[%c0_6, %c0_7, %c0_8] : memref<1x1x128xf32, #tpu.memory_space<vmem>>, vector<1x1x128xf32>
    tpu.vector_store %arg4[%c0_6, %c0_7, %c0_8], %7 {strides = array<i32>} : memref<1x1x128xf32, #tpu.memory_space<vmem>>, vector<1x1x128xf32>,
    %9 = arith.mulf %2, %2 : vector<32x128xf32>
    %cst_9 = arith.constant dense<0.000000e+00> : vector<128xf32>
    %10 = vector.multi_reduction <add>, %9, %cst_9 [0] : vector<32x128xf32> to vector<128xf32>
    %11 = vector.shape_cast %10 : vector<128xf32> to vector<1x128xf32>
    %12 = vector.shape_cast %11 : vector<1x128xf32> to vector<1x1x128xf32>
    %c0_10 = arith.constant 0 : index
    %c0_11 = arith.constant 0 : index
    %c0_12 = arith.constant 0 : index
    %13 = vector.load %arg5[%c0_10, %c0_11, %c0_12] : memref<1x1x128xf32, #tpu.memory_space<vmem>>, vector<1x1x128xf32>
    tpu.vector_store %arg5[%c0_10, %c0_11, %c0_12], %12 {strides = array<i32>} : memref<1x1x128xf32, #tpu.memory_space<vmem>>, vector<1x1x128xf32>,
    return
  }
  func.func @transform_0(%arg0: i32) -> (i32, i32) {
    %c0_i32 = arith.constant 0 : i32
    %c0_i32_0 = arith.constant 0 : i32
    return %arg0, %c0_i32 : i32, i32
  }
  func.func @transform_1(%arg0: i32) -> (i32, i32) {
    %c0_i32 = arith.constant 0 : i32
    %c0_i32_0 = arith.constant 0 : i32
    %c0_i32_1 = arith.constant 0 : i32
    return %c0_i32, %c0_i32_0 : i32, i32
  }
  func.func @transform_2(%arg0: i32) -> (i32, i32) {
    %c0_i32 = arith.constant 0 : i32
    %c0_i32_0 = arith.constant 0 : i32
    return %arg0, %c0_i32 : i32, i32
  }
  func.func @transform_3(%arg0: i32) -> (i32, i32, i32) {
    %c0_i32 = arith.constant 0 : i32
    %c0_i32_0 = arith.constant 0 : i32
    %c0_i32_1 = arith.constant 0 : i32
    return %arg0, %c0_i32, %c0_i32_0 : i32, i32, i32
  }
  func.func @transform_4(%arg0: i32) -> (i32, i32, i32) {
    %c0_i32 = arith.constant 0 : i32
    %c0_i32_0 = arith.constant 0 : i32
    %c0_i32_1 = arith.constant 0 : i32
    return %arg0, %c0_i32, %c0_i32_0 : i32, i32, i32
  }
}

module attributes {stable_mosaic.version = 11 : i64} {
  func.func @bn_apply_kernel(%arg0: i32, %arg1: memref<32x128xbf16, #tpu.memory_space<vmem>>, %arg2: memref<1x128xf32, #tpu.memory_space<vmem>>, %arg3: memref<1x128xf32, #tpu.memory_space<vmem>>, %arg4: memref<1x128xf32, #tpu.memory_space<vmem>>, %arg5: memref<1x128xf32, #tpu.memory_space<vmem>>, %arg6: memref<32x128xbf16, #tpu.memory_space<vmem>>) attributes {dimension_semantics = [#tpu.dimension_semantics<parallel>], iteration_bounds = array<i64: 1>, scalar_prefetch = 0 : i64, scratch_operands = 0 : i64, tpu.core_type = #tpu.core_type<tc>, window_params = [{transform_indices = @transform_0, window_bounds = array<i64: 32, 128>}, {pipeline_mode = #tpu.pipeline_mode<synchronous>, transform_indices = @transform_1, window_bounds = array<i64: 1, 128>}, {pipeline_mode = #tpu.pipeline_mode<synchronous>, transform_indices = @transform_2, window_bounds = array<i64: 1, 128>}, {pipeline_mode = #tpu.pipeline_mode<synchronous>, transform_indices = @transform_3, window_bounds = array<i64: 1, 128>}, {pipeline_mode = #tpu.pipeline_mode<synchronous>, transform_indices = @transform_4, window_bounds = array<i64: 1, 128>}, {transform_indices = @transform_5, window_bounds = array<i64: 32, 128>}]} {
    %c0 = arith.constant 0 : index
    %c0_0 = arith.constant 0 : index
    %0 = vector.load %arg2[%c0, %c0_0] : memref<1x128xf32, #tpu.memory_space<vmem>>, vector<1x128xf32>
    %cst = arith.constant 3.125000e-02 : f32
    %1 = vector.broadcast %cst : f32 to vector<1x128xf32>
    %2 = arith.mulf %0, %1 : vector<1x128xf32>
    %c0_1 = arith.constant 0 : index
    %c0_2 = arith.constant 0 : index
    %3 = vector.load %arg3[%c0_1, %c0_2] : memref<1x128xf32, #tpu.memory_space<vmem>>, vector<1x128xf32>
    %cst_3 = arith.constant 3.125000e-02 : f32
    %4 = vector.broadcast %cst_3 : f32 to vector<1x128xf32>
    %5 = arith.mulf %3, %4 : vector<1x128xf32>
    %6 = arith.mulf %2, %2 : vector<1x128xf32>
    %7 = arith.subf %5, %6 : vector<1x128xf32>
    %cst_4 = arith.constant 0.000000e+00 : f32
    %8 = vector.broadcast %cst_4 : f32 to vector<1x128xf32>
    %9 = arith.maximumf %7, %8 : vector<1x128xf32>
    %cst_5 = arith.constant 9.99999974E-6 : f32
    %10 = vector.broadcast %cst_5 : f32 to vector<1x128xf32>
    %11 = arith.addf %9, %10 : vector<1x128xf32>
    %12 = math.rsqrt %11 : vector<1x128xf32>
    %c0_6 = arith.constant 0 : index
    %c0_7 = arith.constant 0 : index
    %13 = vector.load %arg4[%c0_6, %c0_7] : memref<1x128xf32, #tpu.memory_space<vmem>>, vector<1x128xf32>
    %14 = arith.mulf %12, %13 : vector<1x128xf32>
    %c0_8 = arith.constant 0 : index
    %c0_9 = arith.constant 0 : index
    %15 = vector.load %arg5[%c0_8, %c0_9] : memref<1x128xf32, #tpu.memory_space<vmem>>, vector<1x128xf32>
    %16 = arith.mulf %2, %14 : vector<1x128xf32>
    %17 = arith.subf %15, %16 : vector<1x128xf32>
    %c0_10 = arith.constant 0 : index
    %c0_11 = arith.constant 0 : index
    %18 = vector.load %arg1[%c0_10, %c0_11] : memref<32x128xbf16, #tpu.memory_space<vmem>>, vector<32x128xbf16>
    %19 = arith.extf %18 : vector<32x128xbf16> to vector<32x128xf32>
    %20 = vector.broadcast %14 : vector<1x128xf32> to vector<32x128xf32>
    %21 = arith.mulf %19, %20 : vector<32x128xf32>
    %22 = vector.broadcast %17 : vector<1x128xf32> to vector<32x128xf32>
    %23 = arith.addf %21, %22 : vector<32x128xf32>
    %cst_12 = arith.constant 0.000000e+00 : f32
    %24 = vector.broadcast %cst_12 : f32 to vector<32x128xf32>
    %25 = arith.maximumf %23, %24 : vector<32x128xf32>
    %26 = arith.truncf %25 : vector<32x128xf32> to vector<32x128xbf16>
    %c0_13 = arith.constant 0 : index
    %c0_14 = arith.constant 0 : index
    %27 = vector.load %arg6[%c0_13, %c0_14] : memref<32x128xbf16, #tpu.memory_space<vmem>>, vector<32x128xbf16>
    tpu.vector_store %arg6[%c0_13, %c0_14], %26 {strides = array<i32>} : memref<32x128xbf16, #tpu.memory_space<vmem>>, vector<32x128xbf16>,
    return
  }
  func.func @transform_0(%arg0: i32) -> (i32, i32) {
    %c0_i32 = arith.constant 0 : i32
    %c0_i32_0 = arith.constant 0 : i32
    return %arg0, %c0_i32 : i32, i32
  }
  func.func @transform_1(%arg0: i32) -> (i32, i32) {
    %c0_i32 = arith.constant 0 : i32
    %c0_i32_0 = arith.constant 0 : i32
    %c0_i32_1 = arith.constant 0 : i32
    return %c0_i32, %c0_i32_0 : i32, i32
  }
  func.func @transform_2(%arg0: i32) -> (i32, i32) {
    %c0_i32 = arith.constant 0 : i32
    %c0_i32_0 = arith.constant 0 : i32
    %c0_i32_1 = arith.constant 0 : i32
    return %c0_i32, %c0_i32_0 : i32, i32
  }
  func.func @transform_3(%arg0: i32) -> (i32, i32) {
    %c0_i32 = arith.constant 0 : i32
    %c0_i32_0 = arith.constant 0 : i32
    %c0_i32_1 = arith.constant 0 : i32
    return %c0_i32, %c0_i32_0 : i32, i32
  }
  func.func @transform_4(%arg0: i32) -> (i32, i32) {
    %c0_i32 = arith.constant 0 : i32
    %c0_i32_0 = arith.constant 0 : i32
    %c0_i32_1 = arith.constant 0 : i32
    return %c0_i32, %c0_i32_0 : i32, i32
  }
  func.func @transform_5(%arg0: i32) -> (i32, i32) {
    %c0_i32 = arith.constant 0 : i32
    %c0_i32_0 = arith.constant 0 : i32
    return %arg0, %c0_i32 : i32, i32
  }
}

module attributes {stable_mosaic.version = 11 : i64} {
  func.func @bn2_add_relu_kernel(%arg0: i32, %arg1: memref<32x128xbf16, #tpu.memory_space<vmem>>, %arg2: memref<32x128xbf16, #tpu.memory_space<vmem>>, %arg3: memref<1x128xf32, #tpu.memory_space<vmem>>, %arg4: memref<1x128xf32, #tpu.memory_space<vmem>>, %arg5: memref<1x128xf32, #tpu.memory_space<vmem>>, %arg6: memref<1x128xf32, #tpu.memory_space<vmem>>, %arg7: memref<1x128xf32, #tpu.memory_space<vmem>>, %arg8: memref<1x128xf32, #tpu.memory_space<vmem>>, %arg9: memref<1x128xf32, #tpu.memory_space<vmem>>, %arg10: memref<1x128xf32, #tpu.memory_space<vmem>>, %arg11: memref<32x128xbf16, #tpu.memory_space<vmem>>) attributes {dimension_semantics = [#tpu.dimension_semantics<parallel>], iteration_bounds = array<i64: 1>, scalar_prefetch = 0 : i64, scratch_operands = 0 : i64, tpu.core_type = #tpu.core_type<tc>, window_params = [{transform_indices = @transform_0, window_bounds = array<i64: 32, 128>}, {transform_indices = @transform_1, window_bounds = array<i64: 32, 128>}, {pipeline_mode = #tpu.pipeline_mode<synchronous>, transform_indices = @transform_2, window_bounds = array<i64: 1, 128>}, {pipeline_mode = #tpu.pipeline_mode<synchronous>, transform_indices = @transform_3, window_bounds = array<i64: 1, 128>}, {pipeline_mode = #tpu.pipeline_mode<synchronous>, transform_indices = @transform_4, window_bounds = array<i64: 1, 128>}, {pipeline_mode = #tpu.pipeline_mode<synchronous>, transform_indices = @transform_5, window_bounds = array<i64: 1, 128>}, {pipeline_mode = #tpu.pipeline_mode<synchronous>, transform_indices = @transform_6, window_bounds = array<i64: 1, 128>}, {pipeline_mode = #tpu.pipeline_mode<synchronous>, transform_indices = @transform_7, window_bounds = array<i64: 1, 128>}, {pipeline_mode = #tpu.pipeline_mode<synchronous>, transform_indices = @transform_8, window_bounds = array<i64: 1, 128>}, {pipeline_mode = #tpu.pipeline_mode<synchronous>, transform_indices = @transform_9, window_bounds = array<i64: 1, 128>}, {transform_indices = @transform_10, window_bounds = array<i64: 32, 128>}]} {
    %c0 = arith.constant 0 : index
    %c0_0 = arith.constant 0 : index
    %0 = vector.load %arg3[%c0, %c0_0] : memref<1x128xf32, #tpu.memory_space<vmem>>, vector<1x128xf32>
    %cst = arith.constant 3.125000e-02 : f32
    %1 = vector.broadcast %cst : f32 to vector<1x128xf32>
    %2 = arith.mulf %0, %1 : vector<1x128xf32>
    %c0_1 = arith.constant 0 : index
    %c0_2 = arith.constant 0 : index
    %3 = vector.load %arg4[%c0_1, %c0_2] : memref<1x128xf32, #tpu.memory_space<vmem>>, vector<1x128xf32>
    %cst_3 = arith.constant 3.125000e-02 : f32
    %4 = vector.broadcast %cst_3 : f32 to vector<1x128xf32>
    %5 = arith.mulf %3, %4 : vector<1x128xf32>
    %6 = arith.mulf %2, %2 : vector<1x128xf32>
    %7 = arith.subf %5, %6 : vector<1x128xf32>
    %cst_4 = arith.constant 0.000000e+00 : f32
    %8 = vector.broadcast %cst_4 : f32 to vector<1x128xf32>
    %9 = arith.maximumf %7, %8 : vector<1x128xf32>
    %cst_5 = arith.constant 9.99999974E-6 : f32
    %10 = vector.broadcast %cst_5 : f32 to vector<1x128xf32>
    %11 = arith.addf %9, %10 : vector<1x128xf32>
    %12 = math.rsqrt %11 : vector<1x128xf32>
    %c0_6 = arith.constant 0 : index
    %c0_7 = arith.constant 0 : index
    %13 = vector.load %arg5[%c0_6, %c0_7] : memref<1x128xf32, #tpu.memory_space<vmem>>, vector<1x128xf32>
    %14 = arith.mulf %12, %13 : vector<1x128xf32>
    %c0_8 = arith.constant 0 : index
    %c0_9 = arith.constant 0 : index
    %15 = vector.load %arg6[%c0_8, %c0_9] : memref<1x128xf32, #tpu.memory_space<vmem>>, vector<1x128xf32>
    %16 = arith.mulf %2, %14 : vector<1x128xf32>
    %17 = arith.subf %15, %16 : vector<1x128xf32>
    %c0_10 = arith.constant 0 : index
    %c0_11 = arith.constant 0 : index
    %18 = vector.load %arg1[%c0_10, %c0_11] : memref<32x128xbf16, #tpu.memory_space<vmem>>, vector<32x128xbf16>
    %19 = arith.extf %18 : vector<32x128xbf16> to vector<32x128xf32>
    %20 = vector.broadcast %14 : vector<1x128xf32> to vector<32x128xf32>
    %21 = arith.mulf %19, %20 : vector<32x128xf32>
    %22 = vector.broadcast %17 : vector<1x128xf32> to vector<32x128xf32>
    %23 = arith.addf %21, %22 : vector<32x128xf32>
    %c0_12 = arith.constant 0 : index
    %c0_13 = arith.constant 0 : index
    %24 = vector.load %arg7[%c0_12, %c0_13] : memref<1x128xf32, #tpu.memory_space<vmem>>, vector<1x128xf32>
    %cst_14 = arith.constant 3.125000e-02 : f32
    %25 = vector.broadcast %cst_14 : f32 to vector<1x128xf32>
    %26 = arith.mulf %24, %25 : vector<1x128xf32>
    %c0_15 = arith.constant 0 : index
    %c0_16 = arith.constant 0 : index
    %27 = vector.load %arg8[%c0_15, %c0_16] : memref<1x128xf32, #tpu.memory_space<vmem>>, vector<1x128xf32>
    %cst_17 = arith.constant 3.125000e-02 : f32
    %28 = vector.broadcast %cst_17 : f32 to vector<1x128xf32>
    %29 = arith.mulf %27, %28 : vector<1x128xf32>
    %30 = arith.mulf %26, %26 : vector<1x128xf32>
    %31 = arith.subf %29, %30 : vector<1x128xf32>
    %cst_18 = arith.constant 0.000000e+00 : f32
    %32 = vector.broadcast %cst_18 : f32 to vector<1x128xf32>
    %33 = arith.maximumf %31, %32 : vector<1x128xf32>
    %cst_19 = arith.constant 9.99999974E-6 : f32
    %34 = vector.broadcast %cst_19 : f32 to vector<1x128xf32>
    %35 = arith.addf %33, %34 : vector<1x128xf32>
    %36 = math.rsqrt %35 : vector<1x128xf32>
    %c0_20 = arith.constant 0 : index
    %c0_21 = arith.constant 0 : index
    %37 = vector.load %arg9[%c0_20, %c0_21] : memref<1x128xf32, #tpu.memory_space<vmem>>, vector<1x128xf32>
    %38 = arith.mulf %36, %37 : vector<1x128xf32>
    %c0_22 = arith.constant 0 : index
    %c0_23 = arith.constant 0 : index
    %39 = vector.load %arg10[%c0_22, %c0_23] : memref<1x128xf32, #tpu.memory_space<vmem>>, vector<1x128xf32>
    %40 = arith.mulf %26, %38 : vector<1x128xf32>
    %41 = arith.subf %39, %40 : vector<1x128xf32>
    %c0_24 = arith.constant 0 : index
    %c0_25 = arith.constant 0 : index
    %42 = vector.load %arg2[%c0_24, %c0_25] : memref<32x128xbf16, #tpu.memory_space<vmem>>, vector<32x128xbf16>
    %43 = arith.extf %42 : vector<32x128xbf16> to vector<32x128xf32>
    %44 = vector.broadcast %38 : vector<1x128xf32> to vector<32x128xf32>
    %45 = arith.mulf %43, %44 : vector<32x128xf32>
    %46 = vector.broadcast %41 : vector<1x128xf32> to vector<32x128xf32>
    %47 = arith.addf %45, %46 : vector<32x128xf32>
    %48 = arith.addf %23, %47 : vector<32x128xf32>
    %cst_26 = arith.constant 0.000000e+00 : f32
    %49 = vector.broadcast %cst_26 : f32 to vector<32x128xf32>
    %50 = arith.maximumf %48, %49 : vector<32x128xf32>
    %51 = arith.truncf %50 : vector<32x128xf32> to vector<32x128xbf16>
    %c0_27 = arith.constant 0 : index
    %c0_28 = arith.constant 0 : index
    %52 = vector.load %arg11[%c0_27, %c0_28] : memref<32x128xbf16, #tpu.memory_space<vmem>>, vector<32x128xbf16>
    tpu.vector_store %arg11[%c0_27, %c0_28], %51 {strides = array<i32>} : memref<32x128xbf16, #tpu.memory_space<vmem>>, vector<32x128xbf16>,
    return
  }
  func.func @transform_0(%arg0: i32) -> (i32, i32) {
    %c0_i32 = arith.constant 0 : i32
    %c0_i32_0 = arith.constant 0 : i32
    return %arg0, %c0_i32 : i32, i32
  }
  func.func @transform_1(%arg0: i32) -> (i32, i32) {
    %c1_i32 = arith.constant 1 : i32
    %c0_i32 = arith.constant 0 : i32
    return %arg0, %c1_i32 : i32, i32
  }
  func.func @transform_2(%arg0: i32) -> (i32, i32) {
    %c0_i32 = arith.constant 0 : i32
    %c0_i32_0 = arith.constant 0 : i32
    %c0_i32_1 = arith.constant 0 : i32
    return %c0_i32, %c0_i32_0 : i32, i32
  }
  func.func @transform_3(%arg0: i32) -> (i32, i32) {
    %c0_i32 = arith.constant 0 : i32
    %c0_i32_0 = arith.constant 0 : i32
    %c0_i32_1 = arith.constant 0 : i32
    return %c0_i32, %c0_i32_0 : i32, i32
  }
  func.func @transform_4(%arg0: i32) -> (i32, i32) {
    %c0_i32 = arith.constant 0 : i32
    %c0_i32_0 = arith.constant 0 : i32
    %c0_i32_1 = arith.constant 0 : i32
    return %c0_i32, %c0_i32_0 : i32, i32
  }
  func.func @transform_5(%arg0: i32) -> (i32, i32) {
    %c0_i32 = arith.constant 0 : i32
    %c0_i32_0 = arith.constant 0 : i32
    %c0_i32_1 = arith.constant 0 : i32
    return %c0_i32, %c0_i32_0 : i32, i32
  }
  func.func @transform_6(%arg0: i32) -> (i32, i32) {
    %c0_i32 = arith.constant 0 : i32
    %c0_i32_0 = arith.constant 0 : i32
    %c0_i32_1 = arith.constant 0 : i32
    return %c0_i32, %c0_i32_0 : i32, i32
  }
  func.func @transform_7(%arg0: i32) -> (i32, i32) {
    %c0_i32 = arith.constant 0 : i32
    %c0_i32_0 = arith.constant 0 : i32
    %c0_i32_1 = arith.constant 0 : i32
    return %c0_i32, %c0_i32_0 : i32, i32
  }
  func.func @transform_8(%arg0: i32) -> (i32, i32) {
    %c0_i32 = arith.constant 0 : i32
    %c0_i32_0 = arith.constant 0 : i32
    %c0_i32_1 = arith.constant 0 : i32
    return %c0_i32, %c0_i32_0 : i32, i32
  }
  func.func @transform_9(%arg0: i32) -> (i32, i32) {
    %c0_i32 = arith.constant 0 : i32
    %c0_i32_0 = arith.constant 0 : i32
    %c0_i32_1 = arith.constant 0 : i32
    return %c0_i32, %c0_i32_0 : i32, i32
  }
  func.func @transform_10(%arg0: i32) -> (i32, i32) {
    %c0_i32 = arith.constant 0 : i32
    %c0_i32_0 = arith.constant 0 : i32
    return %arg0, %c0_i32 : i32, i32
  }
}

module attributes {stable_mosaic.version = 11 : i64} {
  func.func @bn_apply_kernel(%arg0: i32, %arg1: memref<8x128xbf16, #tpu.memory_space<vmem>>, %arg2: memref<1x128xf32, #tpu.memory_space<vmem>>, %arg3: memref<1x128xf32, #tpu.memory_space<vmem>>, %arg4: memref<1x128xf32, #tpu.memory_space<vmem>>, %arg5: memref<1x128xf32, #tpu.memory_space<vmem>>, %arg6: memref<8x128xbf16, #tpu.memory_space<vmem>>) attributes {dimension_semantics = [#tpu.dimension_semantics<parallel>], iteration_bounds = array<i64: 1>, scalar_prefetch = 0 : i64, scratch_operands = 0 : i64, tpu.core_type = #tpu.core_type<tc>, window_params = [{transform_indices = @transform_0, window_bounds = array<i64: 8, 128>}, {pipeline_mode = #tpu.pipeline_mode<synchronous>, transform_indices = @transform_1, window_bounds = array<i64: 1, 128>}, {pipeline_mode = #tpu.pipeline_mode<synchronous>, transform_indices = @transform_2, window_bounds = array<i64: 1, 128>}, {pipeline_mode = #tpu.pipeline_mode<synchronous>, transform_indices = @transform_3, window_bounds = array<i64: 1, 128>}, {pipeline_mode = #tpu.pipeline_mode<synchronous>, transform_indices = @transform_4, window_bounds = array<i64: 1, 128>}, {transform_indices = @transform_5, window_bounds = array<i64: 8, 128>}]} {
    %c0 = arith.constant 0 : index
    %c0_0 = arith.constant 0 : index
    %0 = vector.load %arg2[%c0, %c0_0] : memref<1x128xf32, #tpu.memory_space<vmem>>, vector<1x128xf32>
    %cst = arith.constant 1.250000e-01 : f32
    %1 = vector.broadcast %cst : f32 to vector<1x128xf32>
    %2 = arith.mulf %0, %1 : vector<1x128xf32>
    %c0_1 = arith.constant 0 : index
    %c0_2 = arith.constant 0 : index
    %3 = vector.load %arg3[%c0_1, %c0_2] : memref<1x128xf32, #tpu.memory_space<vmem>>, vector<1x128xf32>
    %cst_3 = arith.constant 1.250000e-01 : f32
    %4 = vector.broadcast %cst_3 : f32 to vector<1x128xf32>
    %5 = arith.mulf %3, %4 : vector<1x128xf32>
    %6 = arith.mulf %2, %2 : vector<1x128xf32>
    %7 = arith.subf %5, %6 : vector<1x128xf32>
    %cst_4 = arith.constant 0.000000e+00 : f32
    %8 = vector.broadcast %cst_4 : f32 to vector<1x128xf32>
    %9 = arith.maximumf %7, %8 : vector<1x128xf32>
    %cst_5 = arith.constant 9.99999974E-6 : f32
    %10 = vector.broadcast %cst_5 : f32 to vector<1x128xf32>
    %11 = arith.addf %9, %10 : vector<1x128xf32>
    %12 = math.rsqrt %11 : vector<1x128xf32>
    %c0_6 = arith.constant 0 : index
    %c0_7 = arith.constant 0 : index
    %13 = vector.load %arg4[%c0_6, %c0_7] : memref<1x128xf32, #tpu.memory_space<vmem>>, vector<1x128xf32>
    %14 = arith.mulf %12, %13 : vector<1x128xf32>
    %c0_8 = arith.constant 0 : index
    %c0_9 = arith.constant 0 : index
    %15 = vector.load %arg5[%c0_8, %c0_9] : memref<1x128xf32, #tpu.memory_space<vmem>>, vector<1x128xf32>
    %16 = arith.mulf %2, %14 : vector<1x128xf32>
    %17 = arith.subf %15, %16 : vector<1x128xf32>
    %c0_10 = arith.constant 0 : index
    %c0_11 = arith.constant 0 : index
    %18 = vector.load %arg1[%c0_10, %c0_11] : memref<8x128xbf16, #tpu.memory_space<vmem>>, vector<8x128xbf16>
    %19 = arith.extf %18 : vector<8x128xbf16> to vector<8x128xf32>
    %20 = vector.broadcast %14 : vector<1x128xf32> to vector<8x128xf32>
    %21 = arith.mulf %19, %20 : vector<8x128xf32>
    %22 = vector.broadcast %17 : vector<1x128xf32> to vector<8x128xf32>
    %23 = arith.addf %21, %22 : vector<8x128xf32>
    %cst_12 = arith.constant 0.000000e+00 : f32
    %24 = vector.broadcast %cst_12 : f32 to vector<8x128xf32>
    %25 = arith.maximumf %23, %24 : vector<8x128xf32>
    %26 = arith.truncf %25 : vector<8x128xf32> to vector<8x128xbf16>
    %c0_13 = arith.constant 0 : index
    %c0_14 = arith.constant 0 : index
    %27 = vector.load %arg6[%c0_13, %c0_14] : memref<8x128xbf16, #tpu.memory_space<vmem>>, vector<8x128xbf16>
    tpu.vector_store %arg6[%c0_13, %c0_14], %26 {strides = array<i32>} : memref<8x128xbf16, #tpu.memory_space<vmem>>, vector<8x128xbf16>,
    return
  }
  func.func @transform_0(%arg0: i32) -> (i32, i32) {
    %c0_i32 = arith.constant 0 : i32
    %c0_i32_0 = arith.constant 0 : i32
    return %arg0, %c0_i32 : i32, i32
  }
  func.func @transform_1(%arg0: i32) -> (i32, i32) {
    %c0_i32 = arith.constant 0 : i32
    %c0_i32_0 = arith.constant 0 : i32
    %c0_i32_1 = arith.constant 0 : i32
    return %c0_i32, %c0_i32_0 : i32, i32
  }
  func.func @transform_2(%arg0: i32) -> (i32, i32) {
    %c0_i32 = arith.constant 0 : i32
    %c0_i32_0 = arith.constant 0 : i32
    %c0_i32_1 = arith.constant 0 : i32
    return %c0_i32, %c0_i32_0 : i32, i32
  }
  func.func @transform_3(%arg0: i32) -> (i32, i32) {
    %c0_i32 = arith.constant 0 : i32
    %c0_i32_0 = arith.constant 0 : i32
    %c0_i32_1 = arith.constant 0 : i32
    return %c0_i32, %c0_i32_0 : i32, i32
  }
  func.func @transform_4(%arg0: i32) -> (i32, i32) {
    %c0_i32 = arith.constant 0 : i32
    %c0_i32_0 = arith.constant 0 : i32
    %c0_i32_1 = arith.constant 0 : i32
    return %c0_i32, %c0_i32_0 : i32, i32
  }
  func.func @transform_5(%arg0: i32) -> (i32, i32) {
    %c0_i32 = arith.constant 0 : i32
    %c0_i32_0 = arith.constant 0 : i32
    return %arg0, %c0_i32 : i32, i32
  }
}

module attributes {stable_mosaic.version = 11 : i64} {
  func.func @matmul_stats_kernel(%arg0: i32, %arg1: memref<8x128xbf16, #tpu.memory_space<vmem>>, %arg2: memref<128x128xbf16, #tpu.memory_space<vmem>>, %arg3: memref<8x128xbf16, #tpu.memory_space<vmem>>, %arg4: memref<1x1x128xf32, #tpu.memory_space<vmem>>, %arg5: memref<1x1x128xf32, #tpu.memory_space<vmem>>) attributes {dimension_semantics = [#tpu.dimension_semantics<parallel>], iteration_bounds = array<i64: 1>, scalar_prefetch = 0 : i64, scratch_operands = 0 : i64, tpu.core_type = #tpu.core_type<tc>, window_params = [{transform_indices = @transform_0, window_bounds = array<i64: 8, 128>}, {pipeline_mode = #tpu.pipeline_mode<synchronous>, transform_indices = @transform_1, window_bounds = array<i64: 128, 128>}, {transform_indices = @transform_2, window_bounds = array<i64: 8, 128>}, {transform_indices = @transform_3, window_bounds = array<i64: 1, 1, 128>}, {transform_indices = @transform_4, window_bounds = array<i64: 1, 1, 128>}]} {
    %c0 = arith.constant 0 : index
    %c0_0 = arith.constant 0 : index
    %0 = vector.load %arg1[%c0, %c0_0] : memref<8x128xbf16, #tpu.memory_space<vmem>>, vector<8x128xbf16>
    %c0_1 = arith.constant 0 : index
    %c0_2 = arith.constant 0 : index
    %1 = vector.load %arg2[%c0_1, %c0_2] : memref<128x128xbf16, #tpu.memory_space<vmem>>, vector<128x128xbf16>
    %cst = arith.constant dense<0.000000e+00> : vector<8x128xf32>
    %2 = tpu.matmul %0, %1, %cst {dimension_numbers = #tpu.dot_dimension_numbers<[1], [0], [0], [1], [0, 0, 1, 1], [], []>} : vector<8x128xbf16>, vector<128x128xbf16>, vector<8x128xf32> -> vector<8x128xf32>
    %3 = arith.truncf %2 : vector<8x128xf32> to vector<8x128xbf16>
    %c0_3 = arith.constant 0 : index
    %c0_4 = arith.constant 0 : index
    %4 = vector.load %arg3[%c0_3, %c0_4] : memref<8x128xbf16, #tpu.memory_space<vmem>>, vector<8x128xbf16>
    tpu.vector_store %arg3[%c0_3, %c0_4], %3 {strides = array<i32>} : memref<8x128xbf16, #tpu.memory_space<vmem>>, vector<8x128xbf16>,
    %cst_5 = arith.constant dense<0.000000e+00> : vector<128xf32>
    %5 = vector.multi_reduction <add>, %2, %cst_5 [0] : vector<8x128xf32> to vector<128xf32>
    %6 = vector.shape_cast %5 : vector<128xf32> to vector<1x128xf32>
    %7 = vector.shape_cast %6 : vector<1x128xf32> to vector<1x1x128xf32>
    %c0_6 = arith.constant 0 : index
    %c0_7 = arith.constant 0 : index
    %c0_8 = arith.constant 0 : index
    %8 = vector.load %arg4[%c0_6, %c0_7, %c0_8] : memref<1x1x128xf32, #tpu.memory_space<vmem>>, vector<1x1x128xf32>
    tpu.vector_store %arg4[%c0_6, %c0_7, %c0_8], %7 {strides = array<i32>} : memref<1x1x128xf32, #tpu.memory_space<vmem>>, vector<1x1x128xf32>,
    %9 = arith.mulf %2, %2 : vector<8x128xf32>
    %cst_9 = arith.constant dense<0.000000e+00> : vector<128xf32>
    %10 = vector.multi_reduction <add>, %9, %cst_9 [0] : vector<8x128xf32> to vector<128xf32>
    %11 = vector.shape_cast %10 : vector<128xf32> to vector<1x128xf32>
    %12 = vector.shape_cast %11 : vector<1x128xf32> to vector<1x1x128xf32>
    %c0_10 = arith.constant 0 : index
    %c0_11 = arith.constant 0 : index
    %c0_12 = arith.constant 0 : index
    %13 = vector.load %arg5[%c0_10, %c0_11, %c0_12] : memref<1x1x128xf32, #tpu.memory_space<vmem>>, vector<1x1x128xf32>
    tpu.vector_store %arg5[%c0_10, %c0_11, %c0_12], %12 {strides = array<i32>} : memref<1x1x128xf32, #tpu.memory_space<vmem>>, vector<1x1x128xf32>,
    return
  }
  func.func @transform_0(%arg0: i32) -> (i32, i32) {
    %c0_i32 = arith.constant 0 : i32
    %c0_i32_0 = arith.constant 0 : i32
    return %arg0, %c0_i32 : i32, i32
  }
  func.func @transform_1(%arg0: i32) -> (i32, i32) {
    %c0_i32 = arith.constant 0 : i32
    %c0_i32_0 = arith.constant 0 : i32
    %c0_i32_1 = arith.constant 0 : i32
    return %c0_i32, %c0_i32_0 : i32, i32
  }
  func.func @transform_2(%arg0: i32) -> (i32, i32) {
    %c0_i32 = arith.constant 0 : i32
    %c0_i32_0 = arith.constant 0 : i32
    return %arg0, %c0_i32 : i32, i32
  }
  func.func @transform_3(%arg0: i32) -> (i32, i32, i32) {
    %c0_i32 = arith.constant 0 : i32
    %c0_i32_0 = arith.constant 0 : i32
    %c0_i32_1 = arith.constant 0 : i32
    return %arg0, %c0_i32, %c0_i32_0 : i32, i32, i32
  }
  func.func @transform_4(%arg0: i32) -> (i32, i32, i32) {
    %c0_i32 = arith.constant 0 : i32
    %c0_i32_0 = arith.constant 0 : i32
    %c0_i32_1 = arith.constant 0 : i32
    return %arg0, %c0_i32, %c0_i32_0 : i32, i32, i32
  }
}

module attributes {stable_mosaic.version = 11 : i64} {
  func.func @matmul_stats_kernel(%arg0: i32, %arg1: memref<8x256xbf16, #tpu.memory_space<vmem>>, %arg2: memref<256x128xbf16, #tpu.memory_space<vmem>>, %arg3: memref<8x128xbf16, #tpu.memory_space<vmem>>, %arg4: memref<1x1x128xf32, #tpu.memory_space<vmem>>, %arg5: memref<1x1x128xf32, #tpu.memory_space<vmem>>) attributes {dimension_semantics = [#tpu.dimension_semantics<parallel>], iteration_bounds = array<i64: 1>, scalar_prefetch = 0 : i64, scratch_operands = 0 : i64, tpu.core_type = #tpu.core_type<tc>, window_params = [{transform_indices = @transform_0, window_bounds = array<i64: 8, 256>}, {pipeline_mode = #tpu.pipeline_mode<synchronous>, transform_indices = @transform_1, window_bounds = array<i64: 256, 128>}, {transform_indices = @transform_2, window_bounds = array<i64: 8, 128>}, {transform_indices = @transform_3, window_bounds = array<i64: 1, 1, 128>}, {transform_indices = @transform_4, window_bounds = array<i64: 1, 1, 128>}]} {
    %c0 = arith.constant 0 : index
    %c0_0 = arith.constant 0 : index
    %0 = vector.load %arg1[%c0, %c0_0] : memref<8x256xbf16, #tpu.memory_space<vmem>>, vector<8x256xbf16>
    %c0_1 = arith.constant 0 : index
    %c0_2 = arith.constant 0 : index
    %1 = vector.load %arg2[%c0_1, %c0_2] : memref<256x128xbf16, #tpu.memory_space<vmem>>, vector<256x128xbf16>
    %cst = arith.constant dense<0.000000e+00> : vector<8x128xf32>
    %2 = tpu.matmul %0, %1, %cst {dimension_numbers = #tpu.dot_dimension_numbers<[1], [0], [0], [1], [0, 0, 1, 1], [], []>} : vector<8x256xbf16>, vector<256x128xbf16>, vector<8x128xf32> -> vector<8x128xf32>
    %3 = arith.truncf %2 : vector<8x128xf32> to vector<8x128xbf16>
    %c0_3 = arith.constant 0 : index
    %c0_4 = arith.constant 0 : index
    %4 = vector.load %arg3[%c0_3, %c0_4] : memref<8x128xbf16, #tpu.memory_space<vmem>>, vector<8x128xbf16>
    tpu.vector_store %arg3[%c0_3, %c0_4], %3 {strides = array<i32>} : memref<8x128xbf16, #tpu.memory_space<vmem>>, vector<8x128xbf16>,
    %cst_5 = arith.constant dense<0.000000e+00> : vector<128xf32>
    %5 = vector.multi_reduction <add>, %2, %cst_5 [0] : vector<8x128xf32> to vector<128xf32>
    %6 = vector.shape_cast %5 : vector<128xf32> to vector<1x128xf32>
    %7 = vector.shape_cast %6 : vector<1x128xf32> to vector<1x1x128xf32>
    %c0_6 = arith.constant 0 : index
    %c0_7 = arith.constant 0 : index
    %c0_8 = arith.constant 0 : index
    %8 = vector.load %arg4[%c0_6, %c0_7, %c0_8] : memref<1x1x128xf32, #tpu.memory_space<vmem>>, vector<1x1x128xf32>
    tpu.vector_store %arg4[%c0_6, %c0_7, %c0_8], %7 {strides = array<i32>} : memref<1x1x128xf32, #tpu.memory_space<vmem>>, vector<1x1x128xf32>,
    %9 = arith.mulf %2, %2 : vector<8x128xf32>
    %cst_9 = arith.constant dense<0.000000e+00> : vector<128xf32>
    %10 = vector.multi_reduction <add>, %9, %cst_9 [0] : vector<8x128xf32> to vector<128xf32>
    %11 = vector.shape_cast %10 : vector<128xf32> to vector<1x128xf32>
    %12 = vector.shape_cast %11 : vector<1x128xf32> to vector<1x1x128xf32>
    %c0_10 = arith.constant 0 : index
    %c0_11 = arith.constant 0 : index
    %c0_12 = arith.constant 0 : index
    %13 = vector.load %arg5[%c0_10, %c0_11, %c0_12] : memref<1x1x128xf32, #tpu.memory_space<vmem>>, vector<1x1x128xf32>
    tpu.vector_store %arg5[%c0_10, %c0_11, %c0_12], %12 {strides = array<i32>} : memref<1x1x128xf32, #tpu.memory_space<vmem>>, vector<1x1x128xf32>,
    return
  }
  func.func @transform_0(%arg0: i32) -> (i32, i32) {
    %c0_i32 = arith.constant 0 : i32
    %c0_i32_0 = arith.constant 0 : i32
    return %arg0, %c0_i32 : i32, i32
  }
  func.func @transform_1(%arg0: i32) -> (i32, i32) {
    %c0_i32 = arith.constant 0 : i32
    %c0_i32_0 = arith.constant 0 : i32
    %c0_i32_1 = arith.constant 0 : i32
    return %c0_i32, %c0_i32_0 : i32, i32
  }
  func.func @transform_2(%arg0: i32) -> (i32, i32) {
    %c0_i32 = arith.constant 0 : i32
    %c0_i32_0 = arith.constant 0 : i32
    return %arg0, %c0_i32 : i32, i32
  }
  func.func @transform_3(%arg0: i32) -> (i32, i32, i32) {
    %c0_i32 = arith.constant 0 : i32
    %c0_i32_0 = arith.constant 0 : i32
    %c0_i32_1 = arith.constant 0 : i32
    return %arg0, %c0_i32, %c0_i32_0 : i32, i32, i32
  }
  func.func @transform_4(%arg0: i32) -> (i32, i32, i32) {
    %c0_i32 = arith.constant 0 : i32
    %c0_i32_0 = arith.constant 0 : i32
    %c0_i32_1 = arith.constant 0 : i32
    return %arg0, %c0_i32, %c0_i32_0 : i32, i32, i32
  }
}

module attributes {stable_mosaic.version = 11 : i64} {
  func.func @bn2_add_relu_kernel(%arg0: i32, %arg1: memref<8x128xbf16, #tpu.memory_space<vmem>>, %arg2: memref<8x128xbf16, #tpu.memory_space<vmem>>, %arg3: memref<1x128xf32, #tpu.memory_space<vmem>>, %arg4: memref<1x128xf32, #tpu.memory_space<vmem>>, %arg5: memref<1x128xf32, #tpu.memory_space<vmem>>, %arg6: memref<1x128xf32, #tpu.memory_space<vmem>>, %arg7: memref<1x128xf32, #tpu.memory_space<vmem>>, %arg8: memref<1x128xf32, #tpu.memory_space<vmem>>, %arg9: memref<1x128xf32, #tpu.memory_space<vmem>>, %arg10: memref<1x128xf32, #tpu.memory_space<vmem>>, %arg11: memref<8x128xbf16, #tpu.memory_space<vmem>>) attributes {dimension_semantics = [#tpu.dimension_semantics<parallel>], iteration_bounds = array<i64: 1>, scalar_prefetch = 0 : i64, scratch_operands = 0 : i64, tpu.core_type = #tpu.core_type<tc>, window_params = [{transform_indices = @transform_0, window_bounds = array<i64: 8, 128>}, {transform_indices = @transform_1, window_bounds = array<i64: 8, 128>}, {pipeline_mode = #tpu.pipeline_mode<synchronous>, transform_indices = @transform_2, window_bounds = array<i64: 1, 128>}, {pipeline_mode = #tpu.pipeline_mode<synchronous>, transform_indices = @transform_3, window_bounds = array<i64: 1, 128>}, {pipeline_mode = #tpu.pipeline_mode<synchronous>, transform_indices = @transform_4, window_bounds = array<i64: 1, 128>}, {pipeline_mode = #tpu.pipeline_mode<synchronous>, transform_indices = @transform_5, window_bounds = array<i64: 1, 128>}, {pipeline_mode = #tpu.pipeline_mode<synchronous>, transform_indices = @transform_6, window_bounds = array<i64: 1, 128>}, {pipeline_mode = #tpu.pipeline_mode<synchronous>, transform_indices = @transform_7, window_bounds = array<i64: 1, 128>}, {pipeline_mode = #tpu.pipeline_mode<synchronous>, transform_indices = @transform_8, window_bounds = array<i64: 1, 128>}, {pipeline_mode = #tpu.pipeline_mode<synchronous>, transform_indices = @transform_9, window_bounds = array<i64: 1, 128>}, {transform_indices = @transform_10, window_bounds = array<i64: 8, 128>}]} {
    %c0 = arith.constant 0 : index
    %c0_0 = arith.constant 0 : index
    %0 = vector.load %arg3[%c0, %c0_0] : memref<1x128xf32, #tpu.memory_space<vmem>>, vector<1x128xf32>
    %cst = arith.constant 1.250000e-01 : f32
    %1 = vector.broadcast %cst : f32 to vector<1x128xf32>
    %2 = arith.mulf %0, %1 : vector<1x128xf32>
    %c0_1 = arith.constant 0 : index
    %c0_2 = arith.constant 0 : index
    %3 = vector.load %arg4[%c0_1, %c0_2] : memref<1x128xf32, #tpu.memory_space<vmem>>, vector<1x128xf32>
    %cst_3 = arith.constant 1.250000e-01 : f32
    %4 = vector.broadcast %cst_3 : f32 to vector<1x128xf32>
    %5 = arith.mulf %3, %4 : vector<1x128xf32>
    %6 = arith.mulf %2, %2 : vector<1x128xf32>
    %7 = arith.subf %5, %6 : vector<1x128xf32>
    %cst_4 = arith.constant 0.000000e+00 : f32
    %8 = vector.broadcast %cst_4 : f32 to vector<1x128xf32>
    %9 = arith.maximumf %7, %8 : vector<1x128xf32>
    %cst_5 = arith.constant 9.99999974E-6 : f32
    %10 = vector.broadcast %cst_5 : f32 to vector<1x128xf32>
    %11 = arith.addf %9, %10 : vector<1x128xf32>
    %12 = math.rsqrt %11 : vector<1x128xf32>
    %c0_6 = arith.constant 0 : index
    %c0_7 = arith.constant 0 : index
    %13 = vector.load %arg5[%c0_6, %c0_7] : memref<1x128xf32, #tpu.memory_space<vmem>>, vector<1x128xf32>
    %14 = arith.mulf %12, %13 : vector<1x128xf32>
    %c0_8 = arith.constant 0 : index
    %c0_9 = arith.constant 0 : index
    %15 = vector.load %arg6[%c0_8, %c0_9] : memref<1x128xf32, #tpu.memory_space<vmem>>, vector<1x128xf32>
    %16 = arith.mulf %2, %14 : vector<1x128xf32>
    %17 = arith.subf %15, %16 : vector<1x128xf32>
    %c0_10 = arith.constant 0 : index
    %c0_11 = arith.constant 0 : index
    %18 = vector.load %arg1[%c0_10, %c0_11] : memref<8x128xbf16, #tpu.memory_space<vmem>>, vector<8x128xbf16>
    %19 = arith.extf %18 : vector<8x128xbf16> to vector<8x128xf32>
    %20 = vector.broadcast %14 : vector<1x128xf32> to vector<8x128xf32>
    %21 = arith.mulf %19, %20 : vector<8x128xf32>
    %22 = vector.broadcast %17 : vector<1x128xf32> to vector<8x128xf32>
    %23 = arith.addf %21, %22 : vector<8x128xf32>
    %c0_12 = arith.constant 0 : index
    %c0_13 = arith.constant 0 : index
    %24 = vector.load %arg7[%c0_12, %c0_13] : memref<1x128xf32, #tpu.memory_space<vmem>>, vector<1x128xf32>
    %cst_14 = arith.constant 1.250000e-01 : f32
    %25 = vector.broadcast %cst_14 : f32 to vector<1x128xf32>
    %26 = arith.mulf %24, %25 : vector<1x128xf32>
    %c0_15 = arith.constant 0 : index
    %c0_16 = arith.constant 0 : index
    %27 = vector.load %arg8[%c0_15, %c0_16] : memref<1x128xf32, #tpu.memory_space<vmem>>, vector<1x128xf32>
    %cst_17 = arith.constant 1.250000e-01 : f32
    %28 = vector.broadcast %cst_17 : f32 to vector<1x128xf32>
    %29 = arith.mulf %27, %28 : vector<1x128xf32>
    %30 = arith.mulf %26, %26 : vector<1x128xf32>
    %31 = arith.subf %29, %30 : vector<1x128xf32>
    %cst_18 = arith.constant 0.000000e+00 : f32
    %32 = vector.broadcast %cst_18 : f32 to vector<1x128xf32>
    %33 = arith.maximumf %31, %32 : vector<1x128xf32>
    %cst_19 = arith.constant 9.99999974E-6 : f32
    %34 = vector.broadcast %cst_19 : f32 to vector<1x128xf32>
    %35 = arith.addf %33, %34 : vector<1x128xf32>
    %36 = math.rsqrt %35 : vector<1x128xf32>
    %c0_20 = arith.constant 0 : index
    %c0_21 = arith.constant 0 : index
    %37 = vector.load %arg9[%c0_20, %c0_21] : memref<1x128xf32, #tpu.memory_space<vmem>>, vector<1x128xf32>
    %38 = arith.mulf %36, %37 : vector<1x128xf32>
    %c0_22 = arith.constant 0 : index
    %c0_23 = arith.constant 0 : index
    %39 = vector.load %arg10[%c0_22, %c0_23] : memref<1x128xf32, #tpu.memory_space<vmem>>, vector<1x128xf32>
    %40 = arith.mulf %26, %38 : vector<1x128xf32>
    %41 = arith.subf %39, %40 : vector<1x128xf32>
    %c0_24 = arith.constant 0 : index
    %c0_25 = arith.constant 0 : index
    %42 = vector.load %arg2[%c0_24, %c0_25] : memref<8x128xbf16, #tpu.memory_space<vmem>>, vector<8x128xbf16>
    %43 = arith.extf %42 : vector<8x128xbf16> to vector<8x128xf32>
    %44 = vector.broadcast %38 : vector<1x128xf32> to vector<8x128xf32>
    %45 = arith.mulf %43, %44 : vector<8x128xf32>
    %46 = vector.broadcast %41 : vector<1x128xf32> to vector<8x128xf32>
    %47 = arith.addf %45, %46 : vector<8x128xf32>
    %48 = arith.addf %23, %47 : vector<8x128xf32>
    %cst_26 = arith.constant 0.000000e+00 : f32
    %49 = vector.broadcast %cst_26 : f32 to vector<8x128xf32>
    %50 = arith.maximumf %48, %49 : vector<8x128xf32>
    %51 = arith.truncf %50 : vector<8x128xf32> to vector<8x128xbf16>
    %c0_27 = arith.constant 0 : index
    %c0_28 = arith.constant 0 : index
    %52 = vector.load %arg11[%c0_27, %c0_28] : memref<8x128xbf16, #tpu.memory_space<vmem>>, vector<8x128xbf16>
    tpu.vector_store %arg11[%c0_27, %c0_28], %51 {strides = array<i32>} : memref<8x128xbf16, #tpu.memory_space<vmem>>, vector<8x128xbf16>,
    return
  }
  func.func @transform_0(%arg0: i32) -> (i32, i32) {
    %c0_i32 = arith.constant 0 : i32
    %c0_i32_0 = arith.constant 0 : i32
    return %arg0, %c0_i32 : i32, i32
  }
  func.func @transform_1(%arg0: i32) -> (i32, i32) {
    %c0_i32 = arith.constant 0 : i32
    %c0_i32_0 = arith.constant 0 : i32
    return %arg0, %c0_i32 : i32, i32
  }
  func.func @transform_2(%arg0: i32) -> (i32, i32) {
    %c0_i32 = arith.constant 0 : i32
    %c0_i32_0 = arith.constant 0 : i32
    %c0_i32_1 = arith.constant 0 : i32
    return %c0_i32, %c0_i32_0 : i32, i32
  }
  func.func @transform_3(%arg0: i32) -> (i32, i32) {
    %c0_i32 = arith.constant 0 : i32
    %c0_i32_0 = arith.constant 0 : i32
    %c0_i32_1 = arith.constant 0 : i32
    return %c0_i32, %c0_i32_0 : i32, i32
  }
  func.func @transform_4(%arg0: i32) -> (i32, i32) {
    %c0_i32 = arith.constant 0 : i32
    %c0_i32_0 = arith.constant 0 : i32
    %c0_i32_1 = arith.constant 0 : i32
    return %c0_i32, %c0_i32_0 : i32, i32
  }
  func.func @transform_5(%arg0: i32) -> (i32, i32) {
    %c0_i32 = arith.constant 0 : i32
    %c0_i32_0 = arith.constant 0 : i32
    %c0_i32_1 = arith.constant 0 : i32
    return %c0_i32, %c0_i32_0 : i32, i32
  }
  func.func @transform_6(%arg0: i32) -> (i32, i32) {
    %c0_i32 = arith.constant 0 : i32
    %c0_i32_0 = arith.constant 0 : i32
    %c0_i32_1 = arith.constant 0 : i32
    return %c0_i32, %c0_i32_0 : i32, i32
  }
  func.func @transform_7(%arg0: i32) -> (i32, i32) {
    %c0_i32 = arith.constant 0 : i32
    %c0_i32_0 = arith.constant 0 : i32
    %c0_i32_1 = arith.constant 0 : i32
    return %c0_i32, %c0_i32_0 : i32, i32
  }
  func.func @transform_8(%arg0: i32) -> (i32, i32) {
    %c0_i32 = arith.constant 0 : i32
    %c0_i32_0 = arith.constant 0 : i32
    %c0_i32_1 = arith.constant 0 : i32
    return %c0_i32, %c0_i32_0 : i32, i32
  }
  func.func @transform_9(%arg0: i32) -> (i32, i32) {
    %c0_i32 = arith.constant 0 : i32
    %c0_i32_0 = arith.constant 0 : i32
    %c0_i32_1 = arith.constant 0 : i32
    return %c0_i32, %c0_i32_0 : i32, i32
  }
  func.func @transform_10(%arg0: i32) -> (i32, i32) {
    %c0_i32 = arith.constant 0 : i32
    %c0_i32_0 = arith.constant 0 : i32
    return %arg0, %c0_i32 : i32, i32
  }
}

module attributes {stable_mosaic.version = 11 : i64} {
  func.func @tail_kernel(%arg0: i32, %arg1: memref<2x4x128xbf16, #tpu.memory_space<vmem>>, %arg2: memref<128x128xbf16, #tpu.memory_space<vmem>>, %arg3: memref<1x128xf32, #tpu.memory_space<vmem>>, %arg4: memref<2x128xf32, #tpu.memory_space<vmem>>, %arg5: memref<2x128xf32, #tpu.memory_space<vmem>>, %arg6: memref<1x1xf32, #tpu.memory_space<vmem>>) attributes {dimension_semantics = [#tpu.dimension_semantics<arbitrary>], iteration_bounds = array<i64: 1>, scalar_prefetch = 0 : i64, scratch_operands = 0 : i64, tpu.core_type = #tpu.core_type<tc>, window_params = [{transform_indices = @transform_0, window_bounds = array<i64: 2, 4, 128>}, {pipeline_mode = #tpu.pipeline_mode<synchronous>, transform_indices = @transform_1, window_bounds = array<i64: 128, 128>}, {pipeline_mode = #tpu.pipeline_mode<synchronous>, transform_indices = @transform_2, window_bounds = array<i64: 1, 128>}, {transform_indices = @transform_3, window_bounds = array<i64: 2, 128>}, {transform_indices = @transform_4, window_bounds = array<i64: 2, 128>}, {pipeline_mode = #tpu.pipeline_mode<synchronous>, transform_indices = @transform_5, window_bounds = array<i64: 1, 1>}]} {
    %c0_i32 = arith.constant 0 : i32
    %0 = arith.cmpi eq, %arg0, %c0_i32 : i32
    %1 = arith.extui %0 : i1 to i32
    %c0_i32_0 = arith.constant 0 : i32
    %2 = arith.cmpi ne, %1, %c0_i32_0 : i32
    scf.if %2 {
      %cst_24 = arith.constant 0.000000e+00 : f32
      %45 = vector.broadcast %cst_24 : f32 to vector<1x1xf32>
      %c0_25 = arith.constant 0 : index
      %c0_26 = arith.constant 0 : index
      %46 = vector.load %arg6[%c0_25, %c0_26] : memref<1x1xf32, #tpu.memory_space<vmem>>, vector<1x1xf32>
      tpu.vector_store %arg6[%c0_25, %c0_26], %45 {strides = array<i32>} : memref<1x1xf32, #tpu.memory_space<vmem>>, vector<1x1xf32>,
    } else {
    }
    %c0 = arith.constant 0 : index
    %c0_1 = arith.constant 0 : index
    %c0_2 = arith.constant 0 : index
    %3 = vector.load %arg1[%c0, %c0_1, %c0_2] : memref<2x4x128xbf16, #tpu.memory_space<vmem>>, vector<2x4x128xbf16>
    %4 = arith.extf %3 : vector<2x4x128xbf16> to vector<2x4x128xf32>
    %cst = arith.constant dense<0.000000e+00> : vector<2x128xf32>
    %5 = vector.multi_reduction <add>, %4, %cst [1] : vector<2x4x128xf32> to vector<2x128xf32>
    %cst_3 = arith.constant 4.000000e+00 : f32
    %6 = vector.broadcast %cst_3 : f32 to vector<2x128xf32>
    %7 = arith.divf %5, %6 : vector<2x128xf32>
    %8 = arith.truncf %7 : vector<2x128xf32> to vector<2x128xbf16>
    %c0_4 = arith.constant 0 : index
    %c0_5 = arith.constant 0 : index
    %9 = vector.load %arg2[%c0_4, %c0_5] : memref<128x128xbf16, #tpu.memory_space<vmem>>, vector<128x128xbf16>
    %cst_6 = arith.constant dense<0.000000e+00> : vector<2x128xf32>
    %10 = tpu.matmul %8, %9, %cst_6 {dimension_numbers = #tpu.dot_dimension_numbers<[1], [0], [0], [1], [0, 0, 1, 1], [], []>} : vector<2x128xbf16>, vector<128x128xbf16>, vector<2x128xf32> -> vector<2x128xf32>
    %c0_7 = arith.constant 0 : index
    %c0_8 = arith.constant 0 : index
    %11 = vector.load %arg3[%c0_7, %c0_8] : memref<1x128xf32, #tpu.memory_space<vmem>>, vector<1x128xf32>
    %12 = vector.broadcast %11 : vector<1x128xf32> to vector<2x128xf32>
    %13 = arith.addf %10, %12 : vector<2x128xf32>
    %c0_9 = arith.constant 0 : index
    %c0_10 = arith.constant 0 : index
    %14 = vector.load %arg5[%c0_9, %c0_10] : memref<2x128xf32, #tpu.memory_space<vmem>>, vector<2x128xf32>
    tpu.vector_store %arg5[%c0_9, %c0_10], %13 {strides = array<i32>} : memref<2x128xf32, #tpu.memory_space<vmem>>, vector<2x128xf32>,
    %15 = tpu.iota {dimensions = array<i32: 1>} : vector<2x128xi32>
    %c8_i32 = arith.constant 8 : i32
    %16 = vector.broadcast %c8_i32 : i32 to vector<2x128xi32>
    %17 = arith.cmpi slt, %15, %16 : vector<2x128xi32>
    %cst_11 = arith.constant -1.000000e+30 : f32
    %18 = vector.broadcast %cst_11 : f32 to vector<2x128xf32>
    %19 = arith.select %17, %13, %18 : vector<2x128xi1>, vector<2x128xf32>
    %cst_12 = arith.constant dense<0xFF800000> : vector<2xf32>
    %20 = vector.multi_reduction <maximumf>, %19, %cst_12 [1] : vector<2x128xf32> to vector<2xf32>
    %21 = vector.shape_cast %20 : vector<2xf32> to vector<2x1xf32>
    %22 = vector.broadcast %21 : vector<2x1xf32> to vector<2x128xf32>
    %23 = arith.subf %19, %22 : vector<2x128xf32>
    %24 = math.exp %23 : vector<2x128xf32>
    %cst_13 = arith.constant 0.000000e+00 : f32
    %25 = vector.broadcast %cst_13 : f32 to vector<2x128xf32>
    %26 = arith.select %17, %24, %25 : vector<2x128xi1>, vector<2x128xf32>
    %cst_14 = arith.constant dense<0.000000e+00> : vector<2xf32>
    %27 = vector.multi_reduction <add>, %26, %cst_14 [1] : vector<2x128xf32> to vector<2xf32>
    %28 = vector.shape_cast %27 : vector<2xf32> to vector<2x1xf32>
    %29 = math.log %28 : vector<2x1xf32>
    %30 = arith.addf %21, %29 : vector<2x1xf32>
    %c0_15 = arith.constant 0 : index
    %c0_16 = arith.constant 0 : index
    %31 = vector.load %arg4[%c0_15, %c0_16] : memref<2x128xf32, #tpu.memory_space<vmem>>, vector<2x128xf32>
    %32 = arith.mulf %31, %13 : vector<2x128xf32>
    %cst_17 = arith.constant dense<0.000000e+00> : vector<2xf32>
    %33 = vector.multi_reduction <add>, %32, %cst_17 [1] : vector<2x128xf32> to vector<2xf32>
    %34 = vector.shape_cast %33 : vector<2xf32> to vector<2x1xf32>
    %35 = arith.subf %30, %34 : vector<2x1xf32>
    %c0_18 = arith.constant 0 : index
    %c0_19 = arith.constant 0 : index
    %36 = vector.load %arg6[%c0_18, %c0_19] : memref<1x1xf32, #tpu.memory_space<vmem>>, vector<1x1xf32>
    %37 = vector.shape_cast %35 : vector<2x1xf32> to vector<1x2x1xf32>
    %cst_20 = arith.constant dense<0.000000e+00> : vector<1xf32>
    %38 = vector.multi_reduction <add>, %37, %cst_20 [1, 2] : vector<1x2x1xf32> to vector<1xf32>
    %39 = vector.shape_cast %38 : vector<1xf32> to vector<1x1x1xf32>
    %40 = vector.extract %39[0, 0, 0] : f32 from vector<1x1x1xf32>
    %cst_21 = arith.constant 5.000000e-01 : f32
    %41 = arith.mulf %40, %cst_21 : f32
    %42 = vector.broadcast %41 : f32 to vector<1x1xf32>
    %43 = arith.addf %36, %42 : vector<1x1xf32>
    %c0_22 = arith.constant 0 : index
    %c0_23 = arith.constant 0 : index
    %44 = vector.load %arg6[%c0_22, %c0_23] : memref<1x1xf32, #tpu.memory_space<vmem>>, vector<1x1xf32>
    tpu.vector_store %arg6[%c0_22, %c0_23], %43 {strides = array<i32>} : memref<1x1xf32, #tpu.memory_space<vmem>>, vector<1x1xf32>,
    return
  }
  func.func @transform_0(%arg0: i32) -> (i32, i32, i32) {
    %c0_i32 = arith.constant 0 : i32
    %c0_i32_0 = arith.constant 0 : i32
    %c0_i32_1 = arith.constant 0 : i32
    return %arg0, %c0_i32, %c0_i32_0 : i32, i32, i32
  }
  func.func @transform_1(%arg0: i32) -> (i32, i32) {
    %c0_i32 = arith.constant 0 : i32
    %c0_i32_0 = arith.constant 0 : i32
    %c0_i32_1 = arith.constant 0 : i32
    return %c0_i32, %c0_i32_0 : i32, i32
  }
  func.func @transform_2(%arg0: i32) -> (i32, i32) {
    %c0_i32 = arith.constant 0 : i32
    %c0_i32_0 = arith.constant 0 : i32
    %c0_i32_1 = arith.constant 0 : i32
    return %c0_i32, %c0_i32_0 : i32, i32
  }
  func.func @transform_3(%arg0: i32) -> (i32, i32) {
    %c0_i32 = arith.constant 0 : i32
    %c0_i32_0 = arith.constant 0 : i32
    return %arg0, %c0_i32 : i32, i32
  }
  func.func @transform_4(%arg0: i32) -> (i32, i32) {
    %c0_i32 = arith.constant 0 : i32
    %c0_i32_0 = arith.constant 0 : i32
    return %arg0, %c0_i32 : i32, i32
  }
  func.func @transform_5(%arg0: i32) -> (i32, i32) {
    %c0_i32 = arith.constant 0 : i32
    %c0_i32_0 = arith.constant 0 : i32
    %c0_i32_1 = arith.constant 0 : i32
    return %c0_i32, %c0_i32_0 : i32, i32
  }
}

</mosaic_0001>

<llo_original>
// kernel: model_and_loss_forward.18
$region0: #{model_and_loss_forward.18}
  #allocation0 [shape = 'u32[]', space=smem, size = 0x4, offset = 0x4, fixed_abs, tag = 'smem constant byte address 0x4 - core index']
  #allocation1 [shape = 'u32[144,128]{1,0:T(1,128)}', space=vmem, size = 0x12000, scoped, tag = 'internal scratch']
  %s0 = inlined_call_operand.vmem [shape: bf16[128,128], index: 0, kind: input, shape index: {}]
  %s1 = inlined_call_operand.vmem [shape: f32[1,128], index: 1, kind: input, shape index: {}]
  %s2 = inlined_call_operand.vmem [shape: f32[1,128], index: 2, kind: input, shape index: {}]
  %s3 = inlined_call_operand.vmem [shape: f32[1,128], index: 3, kind: input, shape index: {}]
  %s4 = inlined_call_operand.vmem [shape: f32[1,128], index: 4, kind: input, shape index: {}]
  %s5 = inlined_call_operand.vmem [shape: bf16[128,128], index: 5, kind: output, shape index: {}]
  %s6 = sld [smem:[#allocation0]]
  $region30: #{model_and_loss_forward.18} parent=0
    _
  %s8 = ssub.s32 1, %s6
  %s9 = scalar_select 0, %s8, %s6
  // Predicated region
  $region2: #{model_and_loss_forward.18} parent=0 // pred_check
    _
  $region3: #{model_and_loss_forward.18} parent=0 // pred_check_branch
    %11 = sbr.rel (0) target = $region5
  $region4: #{model_and_loss_forward.18} parent=0 // pred_region
    _
  $region5: #{model_and_loss_forward.18} parent=0 // pred_fallthru
    _
  // Predicated region
  $region6: #{model_and_loss_forward.18} parent=0 // pred_check
    _
  $region7: #{model_and_loss_forward.18} parent=0 // pred_check_branch
    %13 = sbr.rel (0) target = $region9
  $region8: #{model_and_loss_forward.18} parent=0 // pred_region
    _
  $region9: #{model_and_loss_forward.18} parent=0 // pred_fallthru
    _
  // Predicated region
  $region10: #{model_and_loss_forward.18} parent=0 // pred_check
    _
  $region11: #{model_and_loss_forward.18} parent=0 // pred_check_branch
    %15 = sbr.rel (0) target = $region13
  $region12: #{model_and_loss_forward.18} parent=0 // pred_region
    _
  $region13: #{model_and_loss_forward.18} parent=0 // pred_fallthru
    _
  // Predicated region
  $region14: #{model_and_loss_forward.18} parent=0 // pred_check
    _
  $region15: #{model_and_loss_forward.18} parent=0 // pred_check_branch
    %17 = sbr.rel (0) target = $region17
  $region16: #{model_and_loss_forward.18} parent=0 // pred_region
    _
  $region17: #{model_and_loss_forward.18} parent=0 // pred_fallthru
    _
  // Predicated region
  $region18: #{model_and_loss_forward.18} parent=0 // pred_check
    _
  $region19: #{model_and_loss_forward.18} parent=0 // pred_check_branch
    %19 = sbr.rel (0) target = $region21
  $region20: #{model_and_loss_forward.18} parent=0 // pred_region
    _
  $region21: #{model_and_loss_forward.18} parent=0 // pred_fallthru
    _
  %v20 = vld [vmem:[%s1] sm:$0x1]
  %v21 = vmul.f32 %v20, 0.0078125
  %v22 = vld [vmem:[%s2] sm:$0x1]
  %v23 = vmul.f32 %v22, 0.0078125
  %v24 = vmul.f32 %v21, %v21
  %v25 = vsub.f32 %v23, %v24
  %v26 = vmax.f32 %v25, 0.0
  %v27 = vadd.f32 %v26, 1e-05
  %v28 = vrsqrt.pop %v27
  %v29 = vld [vmem:[%s3] sm:$0x1]
  %v30 = vmul.f32 %v28, %v29
  %v31 = vld [vmem:[%s4] sm:$0x1]
  %v32 = vmul.f32 %v21, %v30
  %v33 = vsub.f32 %v31, %v32
  %v34 = vld [vmem:[%s0] sm:$0xf]
  %v35 = vld [vmem:[%s0 + $0x4] sm:$0xf]
  %v36 = vld [vmem:[%s0 + $0x8] sm:$0xf]
  %v37 = vld [vmem:[%s0 + $0xc] sm:$0xf]
  %v38 = vld [vmem:[%s0 + $0x10] sm:$0xf]
  %v39 = vld [vmem:[%s0 + $0x14] sm:$0xf]
  %v40 = vld [vmem:[%s0 + $0x18] sm:$0xf]
  %v41 = vld [vmem:[%s0 + $0x1c] sm:$0xf]
  %v42 = vld [vmem:[%s0 + $0x20] sm:$0xf]
  %v43 = vld [vmem:[%s0 + $0x24] sm:$0xf]
  %v44 = vld [vmem:[%s0 + $0x28] sm:$0xf]
  %v45 = vld [vmem:[%s0 + $0x2c] sm:$0xf]
  %v46 = vld [vmem:[%s0 + $0x30] sm:$0xf]
  %v47 = vld [vmem:[%s0 + $0x34] sm:$0xf]
  %v48 = vld [vmem:[%s0 + $0x38] sm:$0xf]
  %v49 = vld [vmem:[%s0 + $0x3c] sm:$0xf]
  %v50 = vunpack.c.l.bf16 %v34
  %v51 = vunpack.c.l.bf16 %v35
  %v52 = vunpack.c.l.bf16 %v36
  %v53 = vunpack.c.l.bf16 %v37
  %v54 = vunpack.c.l.bf16 %v38
  %v55 = vunpack.c.l.bf16 %v39
  %v56 = vunpack.c.l.bf16 %v40
  %v57 = vunpack.c.l.bf16 %v41
  %v58 = vunpack.c.l.bf16 %v42
  %v59 = vunpack.c.l.bf16 %v43
  %v60 = vunpack.c.l.bf16 %v44
  %v61 = vunpack.c.l.bf16 %v45
  %v62 = vunpack.c.l.bf16 %v46
  %v63 = vunpack.c.l.bf16 %v47
  %v64 = vunpack.c.l.bf16 %v48
  %v65 = vunpack.c.l.bf16 %v49
  %v67 = vlaneseq
  %v68 = vshrl.u32 %v67, 7
  %v69 = vsub.s32 0, %v68
  %v70 = vrot.slane %v30, %v69
  %v72 = vmul.f32 %v50, %v70
  %v73 = vmul.f32 %v51, %v70
  %v74 = vmul.f32 %v52, %v70
  %v75 = vmul.f32 %v53, %v70
  %v76 = vmul.f32 %v54, %v70
  %v77 = vmul.f32 %v55, %v70
  %v78 = vmul.f32 %v56, %v70
  %v79 = vmul.f32 %v57, %v70
  %v80 = vmul.f32 %v58, %v70
  %v81 = vmul.f32 %v59, %v70
  %v82 = vmul.f32 %v60, %v70
  %v83 = vmul.f32 %v61, %v70
  %v84 = vmul.f32 %v62, %v70
  %v85 = vmul.f32 %v63, %v70
  %v86 = vmul.f32 %v64, %v70
  %v87 = vmul.f32 %v65, %v70
  %v89 = vlaneseq
  %v90 = vshrl.u32 %v89, 7
  %v91 = vsub.s32 0, %v90
  %v92 = vrot.slane %v33, %v91
  %v94 = vadd.f32 %v72, %v92
  %v95 = vadd.f32 %v73, %v92
  %v96 = vadd.f32 %v74, %v92
  %v97 = vadd.f32 %v75, %v92
  %v98 = vadd.f32 %v76, %v92
  %v99 = vadd.f32 %v77, %v92
  %v100 = vadd.f32 %v78, %v92
  %v101 = vadd.f32 %v79, %v92
  %v102 = vadd.f32 %v80, %v92
  %v103 = vadd.f32 %v81, %v92
  %v104 = vadd.f32 %v82, %v92
  %v105 = vadd.f32 %v83, %v92
  %v106 = vadd.f32 %v84, %v92
  %v107 = vadd.f32 %v85, %v92
  %v108 = vadd.f32 %v86, %v92
  %v109 = vadd.f32 %v87, %v92
  %v110 = vmax.f32 %v94, 0.0
  %v111 = vmax.f32 %v95, 0.0
  %v112 = vmax.f32 %v96, 0.0
  %v113 = vmax.f32 %v97, 0.0
  %v114 = vmax.f32 %v98, 0.0
  %v115 = vmax.f32 %v99, 0.0
  %v116 = vmax.f32 %v100, 0.0
  %v117 = vmax.f32 %v101, 0.0
  %v118 = vmax.f32 %v102, 0.0
  %v119 = vmax.f32 %v103, 0.0
  %v120 = vmax.f32 %v104, 0.0
  %v121 = vmax.f32 %v105, 0.0
  %v122 = vmax.f32 %v106, 0.0
  %v123 = vmax.f32 %v107, 0.0
  %v124 = vmax.f32 %v108, 0.0
  %v125 = vmax.f32 %v109, 0.0
  %v126 = vpack.c.bf16 %v111, %v110
  %v127 = vpack.c.bf16 %v113, %v112
  %v128 = vpack.c.bf16 %v115, %v114
  %v129 = vpack.c.bf16 %v117, %v116
  %v130 = vpack.c.bf16 %v119, %v118
  %v131 = vpack.c.bf16 %v121, %v120
  %v132 = vpack.c.bf16 %v123, %v122
  %v133 = vpack.c.bf16 %v125, %v124
  %v142 = vunpack.c.l.b16 %v126
  %v143 = vunpack.c.h.b16 %v126
  %v144 = vunpack.c.l.b16 %v127
  %v145 = vunpack.c.h.b16 %v127
  %v146 = vunpack.c.l.b16 %v128
  %v147 = vunpack.c.h.b16 %v128
  %v148 = vunpack.c.l.b16 %v129
  %v149 = vunpack.c.h.b16 %v129
  %v150 = vunpack.c.l.b16 %v130
  %v151 = vunpack.c.h.b16 %v130
  %v152 = vunpack.c.l.b16 %v131
  %v153 = vunpack.c.h.b16 %v131
  %v154 = vunpack.c.l.b16 %v132
  %v155 = vunpack.c.h.b16 %v132
  %v156 = vunpack.c.l.b16 %v133
  %v157 = vunpack.c.h.b16 %v133
  %v158 = vpack.c.b16 %v142, %v142
  %v159 = vpack.c.b16 %v143, %v143
  %v160 = vpack.c.b16 %v144, %v144
  %v161 = vpack.c.b16 %v145, %v145
  %v162 = vpack.c.b16 %v146, %v146
  %v163 = vpack.c.b16 %v147, %v147
  %v164 = vpack.c.b16 %v148, %v148
  %v165 = vpack.c.b16 %v149, %v149
  %v166 = vpack.c.b16 %v150, %v150
  %v167 = vpack.c.b16 %v151, %v151
  %v168 = vpack.c.b16 %v152, %v152
  %v169 = vpack.c.b16 %v153, %v153
  %v170 = vpack.c.b16 %v154, %v154
  %v171 = vpack.c.b16 %v155, %v155
  %v172 = vpack.c.b16 %v156, %v156
  %v173 = vpack.c.b16 %v157, %v157
  %190 = vst [vmem:[%s5] sm:$0xf] %v158
  %191 = vst [vmem:[%s5 + $0x4] sm:$0xf] %v159
  %192 = vst [vmem:[%s5 + $0x8] sm:$0xf] %v160
  %193 = vst [vmem:[%s5 + $0xc] sm:$0xf] %v161
  %194 = vst [vmem:[%s5 + $0x10] sm:$0xf] %v162
  %195 = vst [vmem:[%s5 + $0x14] sm:$0xf] %v163
  %196 = vst [vmem:[%s5 + $0x18] sm:$0xf] %v164
  %197 = vst [vmem:[%s5 + $0x1c] sm:$0xf] %v165
  %198 = vst [vmem:[%s5 + $0x20] sm:$0xf] %v166
  %199 = vst [vmem:[%s5 + $0x24] sm:$0xf] %v167
  %200 = vst [vmem:[%s5 + $0x28] sm:$0xf] %v168
  %201 = vst [vmem:[%s5 + $0x2c] sm:$0xf] %v169
  %202 = vst [vmem:[%s5 + $0x30] sm:$0xf] %v170
  %203 = vst [vmem:[%s5 + $0x34] sm:$0xf] %v171
  %204 = vst [vmem:[%s5 + $0x38] sm:$0xf] %v172
  %205 = vst [vmem:[%s5 + $0x3c] sm:$0xf] %v173
  // Predicated region
  $region22: #{model_and_loss_forward.18} parent=0 // pred_check
    _
  $region23: #{model_and_loss_forward.18} parent=0 // pred_check_branch
    %207 = sbr.rel (0) target = $region25
  $region24: #{model_and_loss_forward.18} parent=0 // pred_region
    _
  $region25: #{model_and_loss_forward.18} parent=0 // pred_fallthru
    _
  // Predicated region
  $region26: #{model_and_loss_forward.18} parent=0 // pred_check
    _
  $region27: #{model_and_loss_forward.18} parent=0 // pred_check_branch
    %209 = sbr.rel (0) target = $region29
  $region28: #{model_and_loss_forward.18} parent=0 // pred_region
    _
  $region29: #{model_and_loss_forward.18} parent=0 // pred_fallthru
    _

// kernel: model_and_loss_forward.17
$region0: #{model_and_loss_forward.17}
  #allocation0 [shape = 'u32[]', space=smem, size = 0x4, offset = 0x4, fixed_abs, tag = 'smem constant byte address 0x4 - core index']
  #allocation1 [shape = 'u32[144,128]{1,0:T(1,128)}', space=vmem, size = 0x12000, scoped, tag = 'internal scratch']
  %s0 = inlined_call_operand.vmem [shape: bf16[128,128], index: 0, kind: input, shape index: {}]
  %s1 = inlined_call_operand.vmem [shape: bf16[128,128], index: 1, kind: input, shape index: {}]
  %s2 = inlined_call_operand.vmem [shape: bf16[128,128], index: 2, kind: output, shape index: {0}]
  %s3 = inlined_call_operand.vmem [shape: f32[1,1,128], index: 3, kind: output, shape index: {1}]
  %s4 = inlined_call_operand.vmem [shape: f32[1,1,128], index: 4, kind: output, shape index: {2}]
  %5 = xla_tuple %s2, %s3, %s4
  %s6 = sld [smem:[#allocation0]]
  $region34: #{model_and_loss_forward.17} parent=0
    _
  %s8 = ssub.s32 1, %s6
  %s9 = scalar_select 0, %s8, %s6
  // Predicated region
  $region2: #{model_and_loss_forward.17} parent=0 // pred_check
    _
  $region3: #{model_and_loss_forward.17} parent=0 // pred_check_branch
    %11 = sbr.rel (0) target = $region5
  $region4: #{model_and_loss_forward.17} parent=0 // pred_region
    _
  $region5: #{model_and_loss_forward.17} parent=0 // pred_fallthru
    _
  // Predicated region
  $region6: #{model_and_loss_forward.17} parent=0 // pred_check
    _
  $region7: #{model_and_loss_forward.17} parent=0 // pred_check_branch
    %13 = sbr.rel (0) target = $region9
  $region8: #{model_and_loss_forward.17} parent=0 // pred_region
    _
  $region9: #{model_and_loss_forward.17} parent=0 // pred_fallthru
    _
  %v15 = vld [vmem:[%s0] sm:$0xf]
  %v16 = vld [vmem:[%s0 + $0x4] sm:$0xf]
  %v17 = vld [vmem:[%s0 + $0x8] sm:$0xf]
  %v18 = vld [vmem:[%s0 + $0xc] sm:$0xf]
  %v19 = vld [vmem:[%s0 + $0x10] sm:$0xf]
  %v20 = vld [vmem:[%s0 + $0x14] sm:$0xf]
  %v21 = vld [vmem:[%s0 + $0x18] sm:$0xf]
  %v22 = vld [vmem:[%s0 + $0x1c] sm:$0xf]
  %v23 = vld [vmem:[%s0 + $0x20] sm:$0xf]
  %v24 = vld [vmem:[%s0 + $0x24] sm:$0xf]
  %v25 = vld [vmem:[%s0 + $0x28] sm:$0xf]
  %v26 = vld [vmem:[%s0 + $0x2c] sm:$0xf]
  %v27 = vld [vmem:[%s0 + $0x30] sm:$0xf]
  %v28 = vld [vmem:[%s0 + $0x34] sm:$0xf]
  %v29 = vld [vmem:[%s0 + $0x38] sm:$0xf]
  %v30 = vld [vmem:[%s0 + $0x3c] sm:$0xf]
  %v31 = vld [vmem:[%s1] sm:$0xf]
  %v32 = vld [vmem:[%s1 + $0x4] sm:$0xf]
  %v33 = vld [vmem:[%s1 + $0x8] sm:$0xf]
  %v34 = vld [vmem:[%s1 + $0xc] sm:$0xf]
  %v35 = vld [vmem:[%s1 + $0x10] sm:$0xf]
  %v36 = vld [vmem:[%s1 + $0x14] sm:$0xf]
  %v37 = vld [vmem:[%s1 + $0x18] sm:$0xf]
  %v38 = vld [vmem:[%s1 + $0x1c] sm:$0xf]
  %v39 = vld [vmem:[%s1 + $0x20] sm:$0xf]
  %v40 = vld [vmem:[%s1 + $0x24] sm:$0xf]
  %v41 = vld [vmem:[%s1 + $0x28] sm:$0xf]
  %v42 = vld [vmem:[%s1 + $0x2c] sm:$0xf]
  %v43 = vld [vmem:[%s1 + $0x30] sm:$0xf]
  %v44 = vld [vmem:[%s1 + $0x34] sm:$0xf]
  %v45 = vld [vmem:[%s1 + $0x38] sm:$0xf]
  %v46 = vld [vmem:[%s1 + $0x3c] sm:$0xf]
  %v63 = vunpack.c.l.b16 %v15
  %v64 = vunpack.c.l.b16 %v16
  %v65 = vunpack.c.l.b16 %v17
  %v66 = vunpack.c.l.b16 %v18
  %v67 = vunpack.c.l.b16 %v19
  %v68 = vunpack.c.l.b16 %v20
  %v69 = vunpack.c.l.b16 %v21
  %v70 = vunpack.c.l.b16 %v22
  %v71 = vunpack.c.l.b16 %v23
  %v72 = vunpack.c.l.b16 %v24
  %v73 = vunpack.c.l.b16 %v25
  %v74 = vunpack.c.l.b16 %v26
  %v75 = vunpack.c.l.b16 %v27
  %v76 = vunpack.c.l.b16 %v28
  %v77 = vunpack.c.l.b16 %v29
  %v78 = vunpack.c.l.b16 %v30
  %v79 = vpack.c.b16 %v64, %v63
  %v80 = vpack.c.b16 %v66, %v65
  %v81 = vpack.c.b16 %v68, %v67
  %v82 = vpack.c.b16 %v70, %v69
  %v83 = vpack.c.b16 %v72, %v71
  %v84 = vpack.c.b16 %v74, %v73
  %v85 = vpack.c.b16 %v76, %v75
  %v86 = vpack.c.b16 %v78, %v77
  %v111 = vunpack.c.l.b16 %v31
  %v112 = vunpack.c.l.b16 %v32
  %v113 = vunpack.c.l.b16 %v33
  %v114 = vunpack.c.l.b16 %v34
  %v115 = vunpack.c.l.b16 %v35
  %v116 = vunpack.c.l.b16 %v36
  %v117 = vunpack.c.l.b16 %v37
  %v118 = vunpack.c.l.b16 %v38
  %v119 = vunpack.c.l.b16 %v39
  %v120 = vunpack.c.l.b16 %v40
  %v121 = vunpack.c.l.b16 %v41
  %v122 = vunpack.c.l.b16 %v42
  %v123 = vunpack.c.l.b16 %v43
  %v124 = vunpack.c.l.b16 %v44
  %v125 = vunpack.c.l.b16 %v45
  %v126 = vunpack.c.l.b16 %v46
  %v127 = vpack.c.b16 %v112, %v111
  %v128 = vpack.c.b16 %v114, %v113
  %v129 = vpack.c.b16 %v116, %v115
  %v130 = vpack.c.b16 %v118, %v117
  %v131 = vpack.c.b16 %v120, %v119
  %v132 = vpack.c.b16 %v122, %v121
  %v133 = vpack.c.b16 %v124, %v123
  %v134 = vpack.c.b16 %v126, %v125
  %143 = vmatprep.subr.bf16.mxu0 0
  %144 = vmatpush1.bf16.msra.mxu0 %v127
  %145 = vmatprep.subr.bf16.mxu0 0
  %146 = vmatpush1.bf16.msra.mxu0 %v128
  %147 = vmatprep.subr.bf16.mxu0 0
  %148 = vmatpush1.bf16.msra.mxu0 %v129
  %149 = vmatprep.subr.bf16.mxu0 0
  %150 = vmatpush1.bf16.msra.mxu0 %v130
  %151 = vmatprep.subr.bf16.mxu0 0
  %152 = vmatpush1.bf16.msra.mxu0 %v131
  %153 = vmatprep.subr.bf16.mxu0 0
  %154 = vmatpush1.bf16.msra.mxu0 %v132
  %155 = vmatprep.subr.bf16.mxu0 0
  %156 = vmatpush1.bf16.msra.mxu0 %v133
  %157 = vmatprep.subr.bf16.mxu0 0
  %158 = vmatpush1.bf16.msra.mxu0 %v134
  %159 = vmatprep.subr.bf16.mxu0 0
  %160 = vmatpush1.bf16.msra.mxu0 0
  %161 = vmatprep.subr.bf16.mxu0 0
  %162 = vmatpush1.bf16.msra.mxu0 0
  %163 = vmatprep.subr.bf16.mxu0 0
  %164 = vmatpush1.bf16.msra.mxu0 0
  %165 = vmatprep.subr.bf16.mxu0 0
  %166 = vmatpush1.bf16.msra.mxu0 0
  %167 = vmatprep.subr.bf16.mxu0 0
  %168 = vmatpush1.bf16.msra.mxu0 0
  %169 = vmatprep.subr.bf16.mxu0 0
  %170 = vmatpush1.bf16.msra.mxu0 0
  %171 = vmatprep.subr.bf16.mxu0 0
  %172 = vmatpush1.bf16.msra.mxu0 0
  %173 = vmatprep.subr.bf16.mxu0 0
  %174 = vmatpush1.bf16.msra.mxu0 0
  %175 = vmatprep.mubr.bf16.mxu0 0
  %176 = vmatmul.mubr.bf16.gmra.mrb[0].mxu0 %v79
  %v177 = vpop.f32.mrb[0].mxu0
  %v178 = vadd.f32 0.0, %v177
  %v179 = vpop.f32.mrb[0].mxu0
  %v180 = vpop.f32.mrb[0].mxu0
  %v181 = vadd.f32 0.0, %v180
  %v182 = vpop.f32.mrb[0].mxu0
  %183 = vmatprep.mubr.bf16.mxu0 0
  %184 = vmatmul.mubr.bf16.gmra.mrb[0].mxu0 %v80
  %v185 = vpop.f32.mrb[0].mxu0
  %v186 = vadd.f32 0.0, %v185
  %v187 = vpop.f32.mrb[0].mxu0
  %v188 = vpop.f32.mrb[0].mxu0
  %v189 = vadd.f32 0.0, %v188
  %v190 = vpop.f32.mrb[0].mxu0
  %191 = vmatprep.mubr.bf16.mxu0 0
  %192 = vmatmul.mubr.bf16.gmra.mrb[0].mxu0 %v81
  %v193 = vpop.f32.mrb[0].mxu0
  %v194 = vadd.f32 0.0, %v193
  %v195 = vpop.f32.mrb[0].mxu0
  %v196 = vpop.f32.mrb[0].mxu0
  %v197 = vadd.f32 0.0, %v196
  %v198 = vpop.f32.mrb[0].mxu0
  %199 = vmatprep.mubr.bf16.mxu0 0
  %200 = vmatmul.mubr.bf16.gmra.mrb[0].mxu0 %v82
  %v201 = vpop.f32.mrb[0].mxu0
  %v202 = vadd.f32 0.0, %v201
  %v203 = vpop.f32.mrb[0].mxu0
  %v204 = vpop.f32.mrb[0].mxu0
  %v205 = vadd.f32 0.0, %v204
  %v206 = vpop.f32.mrb[0].mxu0
  %207 = vmatprep.mubr.bf16.mxu0 0
  %208 = vmatmul.mubr.bf16.gmra.mrb[0].mxu0 %v83
  %v209 = vpop.f32.mrb[0].mxu0
  %v210 = vadd.f32 0.0, %v209
  %v211 = vpop.f32.mrb[0].mxu0
  %v212 = vpop.f32.mrb[0].mxu0
  %v213 = vadd.f32 0.0, %v212
  %v214 = vpop.f32.mrb[0].mxu0
  %215 = vmatprep.mubr.bf16.mxu0 0
  %216 = vmatmul.mubr.bf16.gmra.mrb[0].mxu0 %v84
  %v217 = vpop.f32.mrb[0].mxu0
  %v218 = vadd.f32 0.0, %v217
  %v219 = vpop.f32.mrb[0].mxu0
  %v220 = vpop.f32.mrb[0].mxu0
  %v221 = vadd.f32 0.0, %v220
  %v222 = vpop.f32.mrb[0].mxu0
  %223 = vmatprep.mubr.bf16.mxu0 0
  %224 = vmatmul.mubr.bf16.gmra.mrb[0].mxu0 %v85
  %v225 = vpop.f32.mrb[0].mxu0
  %v226 = vadd.f32 0.0, %v225
  %v227 = vpop.f32.mrb[0].mxu0
  %v228 = vpop.f32.mrb[0].mxu0
  %v229 = vadd.f32 0.0, %v228
  %v230 = vpop.f32.mrb[0].mxu0
  %231 = vmatprep.mubr.bf16.mxu0 0
  %232 = vmatmul.mubr.bf16.gmra.mrb[0].mxu0 %v86
  %v233 = vpop.f32.mrb[0].mxu0
  %v234 = vadd.f32 0.0, %v233
  %v235 = vpop.f32.mrb[0].mxu0
  %v236 = vpop.f32.mrb[0].mxu0
  %v237 = vadd.f32 0.0, %v236
  %v238 = vpop.f32.mrb[0].mxu0
  %239 = vdwg.mxu0
  %v240 = vpack.c.bf16 %v181, %v178
  %v241 = vpack.c.bf16 %v189, %v186
  %v242 = vpack.c.bf16 %v197, %v194
  %v243 = vpack.c.bf16 %v205, %v202
  %v244 = vpack.c.bf16 %v213, %v210
  %v245 = vpack.c.bf16 %v221, %v218
  %v246 = vpack.c.bf16 %v229, %v226
  %v247 = vpack.c.bf16 %v237, %v234
  %v256 = vunpack.c.l.b16 %v240
  %v257 = vunpack.c.h.b16 %v240
  %v258 = vunpack.c.l.b16 %v241
  %v259 = vunpack.c.h.b16 %v241
  %v260 = vunpack.c.l.b16 %v242
  %v261 = vunpack.c.h.b16 %v242
  %v262 = vunpack.c.l.b16 %v243
  %v263 = vunpack.c.h.b16 %v243
  %v264 = vunpack.c.l.b16 %v244
  %v265 = vunpack.c.h.b16 %v244
  %v266 = vunpack.c.l.b16 %v245
  %v267 = vunpack.c.h.b16 %v245
  %v268 = vunpack.c.l.b16 %v246
  %v269 = vunpack.c.h.b16 %v246
  %v270 = vunpack.c.l.b16 %v247
  %v271 = vunpack.c.h.b16 %v247
  %v272 = vpack.c.b16 %v256, %v256
  %v273 = vpack.c.b16 %v257, %v257
  %v274 = vpack.c.b16 %v258, %v258
  %v275 = vpack.c.b16 %v259, %v259
  %v276 = vpack.c.b16 %v260, %v260
  %v277 = vpack.c.b16 %v261, %v261
  %v278 = vpack.c.b16 %v262, %v262
  %v279 = vpack.c.b16 %v263, %v263
  %v280 = vpack.c.b16 %v264, %v264
  %v281 = vpack.c.b16 %v265, %v265
  %v282 = vpack.c.b16 %v266, %v266
  %v283 = vpack.c.b16 %v267, %v267
  %v284 = vpack.c.b16 %v268, %v268
  %v285 = vpack.c.b16 %v269, %v269
  %v286 = vpack.c.b16 %v270, %v270
  %v287 = vpack.c.b16 %v271, %v271
  %304 = vst [vmem:[%s2] sm:$0xf] %v272
  %305 = vst [vmem:[%s2 + $0x4] sm:$0xf] %v273
  %306 = vst [vmem:[%s2 + $0x8] sm:$0xf] %v274
  %307 = vst [vmem:[%s2 + $0xc] sm:$0xf] %v275
  %308 = vst [vmem:[%s2 + $0x10] sm:$0xf] %v276
  %309 = vst [vmem:[%s2 + $0x14] sm:$0xf] %v277
  %310 = vst [vmem:[%s2 + $0x18] sm:$0xf] %v278
  %311 = vst [vmem:[%s2 + $0x1c] sm:$0xf] %v279
  %312 = vst [vmem:[%s2 + $0x20] sm:$0xf] %v280
  %313 = vst [vmem:[%s2 + $0x24] sm:$0xf] %v281
  %314 = vst [vmem:[%s2 + $0x28] sm:$0xf] %v282
  %315 = vst [vmem:[%s2 + $0x2c] sm:$0xf] %v283
  %316 = vst [vmem:[%s2 + $0x30] sm:$0xf] %v284
  %317 = vst [vmem:[%s2 + $0x34] sm:$0xf] %v285
  %318 = vst [vmem:[%s2 + $0x38] sm:$0xf] %v286
  %319 = vst [vmem:[%s2 + $0x3c] sm:$0xf] %v287
  %v320 = vadd.f32 %v178, %v181
  %v321 = vadd.f32 %v320, %v186
  %v322 = vadd.f32 %v321, %v189
  %v323 = vadd.f32 %v322, %v194
  %v324 = vadd.f32 %v323, %v197
  %v325 = vadd.f32 %v324, %v202
  %v326 = vadd.f32 %v325, %v205
  %v327 = vadd.f32 %v326, %v210
  %v328 = vadd.f32 %v327, %v213
  %v329 = vadd.f32 %v328, %v218
  %v330 = vadd.f32 %v329, %v221
  %v331 = vadd.f32 %v330, %v226
  %v332 = vadd.f32 %v331, %v229
  %v333 = vadd.f32 %v332, %v234
  %v334 = vadd.f32 %v333, %v237
  %v335 = vrot.slane %v334, 4
  %v336 = vadd.f32 %v334, %v335
  %v337 = vrot.slane %v336, 2
  %v338 = vadd.f32 %v336, %v337
  %v339 = vrot.slane %v338, 1
  %v340 = vadd.f32 %v338, %v339
  %341 = vst [vmem:[%s3] sm:$0x1] %v340
  %v342 = vmul.f32 %v178, %v178
  %v343 = vmul.f32 %v181, %v181
  %v344 = vmul.f32 %v186, %v186
  %v345 = vmul.f32 %v189, %v189
  %v346 = vmul.f32 %v194, %v194
  %v347 = vmul.f32 %v197, %v197
  %v348 = vmul.f32 %v202, %v202
  %v349 = vmul.f32 %v205, %v205
  %v350 = vmul.f32 %v210, %v210
  %v351 = vmul.f32 %v213, %v213
  %v352 = vmul.f32 %v218, %v218
  %v353 = vmul.f32 %v221, %v221
  %v354 = vmul.f32 %v226, %v226
  %v355 = vmul.f32 %v229, %v229
  %v356 = vmul.f32 %v234, %v234
  %v357 = vmul.f32 %v237, %v237
  %v358 = vadd.f32 %v342, %v343
  %v359 = vadd.f32 %v358, %v344
  %v360 = vadd.f32 %v359, %v345
  %v361 = vadd.f32 %v360, %v346
  %v362 = vadd.f32 %v361, %v347
  %v363 = vadd.f32 %v362, %v348
  %v364 = vadd.f32 %v363, %v349
  %v365 = vadd.f32 %v364, %v350
  %v366 = vadd.f32 %v365, %v351
  %v367 = vadd.f32 %v366, %v352
  %v368 = vadd.f32 %v367, %v353
  %v369 = vadd.f32 %v368, %v354
  %v370 = vadd.f32 %v369, %v355
  %v371 = vadd.f32 %v370, %v356
  %v372 = vadd.f32 %v371, %v357
  %v373 = vrot.slane %v372, 4
  %v374 = vadd.f32 %v372, %v373
  %v375 = vrot.slane %v374, 2
  %v376 = vadd.f32 %v374, %v375
  %v377 = vrot.slane %v376, 1
  %v378 = vadd.f32 %v376, %v377
  %379 = vst [vmem:[%s4] sm:$0x1] %v378
  // Predicated region
  $region10: #{model_and_loss_forward.17} parent=0 // pred_check
    _
  $region11: #{model_and_loss_forward.17} parent=0 // pred_check_branch
    %381 = sbr.rel (0) target = $region13
  $region12: #{model_and_loss_forward.17} parent=0 // pred_region
    _
  $region13: #{model_and_loss_forward.17} parent=0 // pred_fallthru
    _
  // Predicated region
  $region14: #{model_and_loss_forward.17} parent=0 // pred_check
    _
  $region15: #{model_and_loss_forward.17} parent=0 // pred_check_branch
    %383 = sbr.rel (0) target = $region17
  $region16: #{model_and_loss_forward.17} parent=0 // pred_region
    _
  $region17: #{model_and_loss_forward.17} parent=0 // pred_fallthru
    _
  // Predicated region
  $region18: #{model_and_loss_forward.17} parent=0 // pred_check
    _
  $region19: #{model_and_loss_forward.17} parent=0 // pred_check_branch
    %385 = sbr.rel (0) target = $region21
  $region20: #{model_and_loss_forward.17} parent=0 // pred_region
    _
  $region21: #{model_and_loss_forward.17} parent=0 // pred_fallthru
    _
  // Predicated region
  $region22: #{model_and_loss_forward.17} parent=0 // pred_check
    _
  $region23: #{model_and_loss_forward.17} parent=0 // pred_check_branch
    %387 = sbr.rel (0) target = $region25
  $region24: #{model_and_loss_forward.17} parent=0 // pred_region
    _
  $region25: #{model_and_loss_forward.17} parent=0 // pred_fallthru
    _
  // Predicated region
  $region26: #{model_and_loss_forward.17} parent=0 // pred_check
    _
  $region27: #{model_and_loss_forward.17} parent=0 // pred_check_branch
    %389 = sbr.rel (0) target = $region29
  $region28: #{model_and_loss_forward.17} parent=0 // pred_region
    _
  $region29: #{model_and_loss_forward.17} parent=0 // pred_fallthru
    _
  // Predicated region
  $region30: #{model_and_loss_forward.17} parent=0 // pred_check
    _
  $region31: #{model_and_loss_forward.17} parent=0 // pred_check_branch
    %391 = sbr.rel (0) target = $region33
  $region32: #{model_and_loss_forward.17} parent=0 // pred_region
    _
  $region33: #{model_and_loss_forward.17} parent=0 // pred_fallthru
    _

// kernel: model_and_loss_forward.21
$region0: #{model_and_loss_forward.21}
  #allocation0 [shape = 'u32[]', space=smem, size = 0x4, offset = 0x4, fixed_abs, tag = 'smem constant byte address 0x4 - core index']
  #allocation1 [shape = 'u32[144,128]{1,0:T(1,128)}', space=vmem, size = 0x12000, scoped, tag = 'internal scratch']
  %s0 = inlined_call_operand.vmem [shape: bf16[32,256], index: 0, kind: input, shape index: {}]
  %s1 = inlined_call_operand.vmem [shape: f32[1,128], index: 1, kind: input, shape index: {}]
  %s2 = inlined_call_operand.vmem [shape: f32[1,128], index: 2, kind: input, shape index: {}]
  %s3 = inlined_call_operand.vmem [shape: f32[1,128], index: 3, kind: input, shape index: {}]
  %s4 = inlined_call_operand.vmem [shape: f32[1,128], index: 4, kind: input, shape index: {}]
  %s5 = inlined_call_operand.vmem [shape: bf16[32,128], index: 5, kind: output, shape index: {}]
  %s6 = sld [smem:[#allocation0]]
  $region71: #{model_and_loss_forward.21} parent=0
    _
  %s8 = ssub.s32 1, %s6
  %s9 = scalar_select 0, %s8, %s6
  $region1: #{model_and_loss_forward.21} parent=0
    #allocation2 [shape = 'u8[8192]{0}', space=vmem, size = 0x2000, scoped, tag = 'input window, operand 0, single buffered']
    // Predicated region
    $region2: #{model_and_loss_forward.21} parent=1 // pred_check
      _
    $region3: #{model_and_loss_forward.21} parent=1 // pred_check_branch
      %11 = sbr.rel (0) target = $region5
    $region4: #{model_and_loss_forward.21} parent=1 // pred_region
      // Predicated region
      $region6: #{model_and_loss_forward.21} parent=4 // pred_check
        _
      $region7: #{model_and_loss_forward.21} parent=4 // pred_check_branch
        %13 = sbr.rel (0) target = $region9
      $region8: #{model_and_loss_forward.21} parent=4 // pred_region
        // Predicated region
        $region10: #{model_and_loss_forward.21} parent=8 // pred_check
          _
        $region11: #{model_and_loss_forward.21} parent=8 // pred_check_branch
          %15 = sbr.rel target = $region13
        $region12: #{model_and_loss_forward.21} parent=8 // pred_region
          // Predicated region
          $region25: #{model_and_loss_forward.21} parent=12 // pred_check
            _
          $region26: #{model_and_loss_forward.21} parent=12 // pred_check_branch
            %36 = sbr.rel (0) target = $region28
          $region27: #{model_and_loss_forward.21} parent=12 // pred_region
            loop: start=0, step=1, limit=1
            $region29: #{model_and_loss_forward.21} parent=27 // loop_pre_header
              _
            $region30: #{model_and_loss_forward.21} parent=27 // loop_header
              %s38 = sphi 0, %s42
              %p39 = scmp.ge.s32.totalorder %s38, 1
              %s43 = sphi %s0, %s0
              %s44 = sphi [#allocation2], [#allocation2]
            $region31: #{model_and_loss_forward.21} parent=27 // loop_header_branch
              %41 = sbr.rel (%p39) target = $region35
            $region32: #{model_and_loss_forward.21} parent=27 // loop_body
              _
            $region33: #{model_and_loss_forward.21} parent=27 // loop_footer
              %s42 = sadd.s32 1, %s38
            $region34: #{model_and_loss_forward.21} parent=27 // loop_footer_branch
              %37 = sbr.rel target = $region30
            $region35: #{model_and_loss_forward.21} parent=27 // loop_exit
              _
            loop: start=0, step=1, limit=1
            $region36: #{model_and_loss_forward.21} parent=27 // loop_pre_header
              _
            $region37: #{model_and_loss_forward.21} parent=27 // loop_header
              %s47 = sphi 0, %s51
              %p48 = scmp.ge.s32.totalorder %s47, 1
              %s52 = sphi %s0, %s0
              %s53 = sphi [#allocation2], [#allocation2]
            $region38: #{model_and_loss_forward.21} parent=27 // loop_header_branch
              %50 = sbr.rel (%p48) target = $region42
            $region39: #{model_and_loss_forward.21} parent=27 // loop_body
              %v54 = vld [vmem:[%s52] sm:$0xf]
              %55 = vst [vmem:[%s53] sm:$0xf] %v54
              %v56 = vld [vmem:[%s52 + $0x8] sm:$0xf]
              %57 = vst [vmem:[%s53 + $0x4] sm:$0xf] %v56
              %v58 = vld [vmem:[%s52 + $0x10] sm:$0xf]
              %59 = vst [vmem:[%s53 + $0x8] sm:$0xf] %v58
              %v60 = vld [vmem:[%s52 + $0x18] sm:$0xf]
              %61 = vst [vmem:[%s53 + $0xc] sm:$0xf] %v60
            $region40: #{model_and_loss_forward.21} parent=27 // loop_footer
              %s51 = sadd.s32 1, %s47
            $region41: #{model_and_loss_forward.21} parent=27 // loop_footer_branch
              %46 = sbr.rel target = $region37
            $region42: #{model_and_loss_forward.21} parent=27 // loop_exit
              _
          $region28: #{model_and_loss_forward.21} parent=12 // pred_fallthru
            _
        $region13: #{model_and_loss_forward.21} parent=8 // pred_fallthru
          _
        // Predicated region
        $region14: #{model_and_loss_forward.21} parent=8 // pred_check
          _
        $region15: #{model_and_loss_forward.21} parent=8 // pred_check_branch
          %17 = sbr.rel (0) target = $region17
        $region16: #{model_and_loss_forward.21} parent=8 // pred_region
          loop: start=0, step=1, limit=1
          $region18: #{model_and_loss_forward.21} parent=16 // loop_pre_header
            _
          $region19: #{model_and_loss_forward.21} parent=16 // loop_header
            %s20 = sphi 0, %s24
            %p21 = scmp.ge.s32.totalorder %s20, 1
            %s25 = sphi %s0, %s0
            %s26 = sphi [#allocation2], [#allocation2]
          $region20: #{model_and_loss_forward.21} parent=16 // loop_header_branch
            %23 = sbr.rel (%p21) target = $region24
          $region21: #{model_and_loss_forward.21} parent=16 // loop_body
            %v27 = vld [vmem:[%s25] sm:$0xf]
            %28 = vst [vmem:[%s26] sm:$0xf] %v27
            %v29 = vld [vmem:[%s25 + $0x8] sm:$0xf]
            %30 = vst [vmem:[%s26 + $0x4] sm:$0xf] %v29
            %v31 = vld [vmem:[%s25 + $0x10] sm:$0xf]
            %32 = vst [vmem:[%s26 + $0x8] sm:$0xf] %v31
            %v33 = vld [vmem:[%s25 + $0x18] sm:$0xf]
            %34 = vst [vmem:[%s26 + $0xc] sm:$0xf] %v33
          $region22: #{model_and_loss_forward.21} parent=16 // loop_footer
            %s24 = sadd.s32 1, %s20
          $region23: #{model_and_loss_forward.21} parent=16 // loop_footer_branch
            %19 = sbr.rel target = $region19
          $region24: #{model_and_loss_forward.21} parent=16 // loop_exit
            _
        $region17: #{model_and_loss_forward.21} parent=8 // pred_fallthru
          _
      $region9: #{model_and_loss_forward.21} parent=4 // pred_fallthru
        _
      %62 = vnop
    $region5: #{model_and_loss_forward.21} parent=1 // pred_fallthru
      _
    // Predicated region
    $region43: #{model_and_loss_forward.21} parent=1 // pred_check
      _
    $region44: #{model_and_loss_forward.21} parent=1 // pred_check_branch
      %64 = sbr.rel (0) target = $region46
    $region45: #{model_and_loss_forward.21} parent=1 // pred_region
      _
    $region46: #{model_and_loss_forward.21} parent=1 // pred_fallthru
      _
    // Predicated region
    $region47: #{model_and_loss_forward.21} parent=1 // pred_check
      _
    $region48: #{model_and_loss_forward.21} parent=1 // pred_check_branch
      %66 = sbr.rel (0) target = $region50
    $region49: #{model_and_loss_forward.21} parent=1 // pred_region
      _
    $region50: #{model_and_loss_forward.21} parent=1 // pred_fallthru
      _
    // Predicated region
    $region51: #{model_and_loss_forward.21} parent=1 // pred_check
      _
    $region52: #{model_and_loss_forward.21} parent=1 // pred_check_branch
      %68 = sbr.rel (0) target = $region54
    $region53: #{model_and_loss_forward.21} parent=1 // pred_region
      _
    $region54: #{model_and_loss_forward.21} parent=1 // pred_fallthru
      _
    // Predicated region
    $region55: #{model_and_loss_forward.21} parent=1 // pred_check
      _
    $region56: #{model_and_loss_forward.21} parent=1 // pred_check_branch
      %70 = sbr.rel (0) target = $region58
    $region57: #{model_and_loss_forward.21} parent=1 // pred_region
      _
    $region58: #{model_and_loss_forward.21} parent=1 // pred_fallthru
      _
    // Predicated region
    $region59: #{model_and_loss_forward.21} parent=1 // pred_check
      _
    $region60: #{model_and_loss_forward.21} parent=1 // pred_check_branch
      %72 = sbr.rel (0) target = $region62
    $region61: #{model_and_loss_forward.21} parent=1 // pred_region
      _
    $region62: #{model_and_loss_forward.21} parent=1 // pred_fallthru
      _
    %v73 = vld [vmem:[%s1] sm:$0x1]
    %v74 = vmul.f32 %v73, 0.03125
    %v75 = vld [vmem:[%s2] sm:$0x1]
    %v76 = vmul.f32 %v75, 0.03125
    %v77 = vmul.f32 %v74, %v74
    %v78 = vsub.f32 %v76, %v77
    %v79 = vmax.f32 %v78, 0.0
    %v80 = vadd.f32 %v79, 1e-05
    %v81 = vrsqrt.pop %v80
    %v82 = vld [vmem:[%s3] sm:$0x1]
    %v83 = vmul.f32 %v81, %v82
    %v84 = vld [vmem:[%s4] sm:$0x1]
    %v85 = vmul.f32 %v74, %v83
    %v86 = vsub.f32 %v84, %v85
    %v87 = vld [vmem:[#allocation2] sm:$0xf]
    %v88 = vld [vmem:[#allocation2 + $0x4] sm:$0xf]
    %v89 = vld [vmem:[#allocation2 + $0x8] sm:$0xf]
    %v90 = vld [vmem:[#allocation2 + $0xc] sm:$0xf]
    %v91 = vunpack.c.l.bf16 %v87
    %v92 = vunpack.c.l.bf16 %v88
    %v93 = vunpack.c.l.bf16 %v89
    %v94 = vunpack.c.l.bf16 %v90
    %v96 = vlaneseq
    %v97 = vshrl.u32 %v96, 7
    %v98 = vsub.s32 0, %v97
    %v99 = vrot.slane %v83, %v98
    %v101 = vmul.f32 %v91, %v99
    %v102 = vmul.f32 %v92, %v99
    %v103 = vmul.f32 %v93, %v99
    %v104 = vmul.f32 %v94, %v99
    %v106 = vlaneseq
    %v107 = vshrl.u32 %v106, 7
    %v108 = vsub.s32 0, %v107
    %v109 = vrot.slane %v86, %v108
    %v111 = vadd.f32 %v101, %v109
    %v112 = vadd.f32 %v102, %v109
    %v113 = vadd.f32 %v103, %v109
    %v114 = vadd.f32 %v104, %v109
    %v115 = vmax.f32 %v111, 0.0
    %v116 = vmax.f32 %v112, 0.0
    %v117 = vmax.f32 %v113, 0.0
    %v118 = vmax.f32 %v114, 0.0
    %v119 = vpack.c.bf16 %v116, %v115
    %v120 = vpack.c.bf16 %v118, %v117
    %v123 = vunpack.c.l.b16 %v119
    %v124 = vunpack.c.h.b16 %v119
    %v125 = vunpack.c.l.b16 %v120
    %v126 = vunpack.c.h.b16 %v120
    %v127 = vpack.c.b16 %v123, %v123
    %v128 = vpack.c.b16 %v124, %v124
    %v129 = vpack.c.b16 %v125, %v125
    %v130 = vpack.c.b16 %v126, %v126
    %135 = vst [vmem:[%s5] sm:$0xf] %v127
    %136 = vst [vmem:[%s5 + $0x4] sm:$0xf] %v128
    %137 = vst [vmem:[%s5 + $0x8] sm:$0xf] %v129
    %138 = vst [vmem:[%s5 + $0xc] sm:$0xf] %v130
    // Predicated region
    $region63: #{model_and_loss_forward.21} parent=1 // pred_check
      _
    $region64: #{model_and_loss_forward.21} parent=1 // pred_check_branch
      %140 = sbr.rel (0) target = $region66
    $region65: #{model_and_loss_forward.21} parent=1 // pred_region
      _
    $region66: #{model_and_loss_forward.21} parent=1 // pred_fallthru
      _
    // Predicated region
    $region67: #{model_and_loss_forward.21} parent=1 // pred_check
      _
    $region68: #{model_and_loss_forward.21} parent=1 // pred_check_branch
      %142 = sbr.rel (0) target = $region70
    $region69: #{model_and_loss_forward.21} parent=1 // pred_region
      _
    $region70: #{model_and_loss_forward.21} parent=1 // pred_fallthru
      _

// kernel: model_and_loss_forward.19
$region0: #{model_and_loss_forward.19}
  #allocation0 [shape = 'u32[]', space=smem, size = 0x4, offset = 0x4, fixed_abs, tag = 'smem constant byte address 0x4 - core index']
  #allocation1 [shape = 'u32[144,128]{1,0:T(1,128)}', space=vmem, size = 0x12000, scoped, tag = 'internal scratch']
  %s0 = inlined_call_operand.vmem [shape: bf16[32,1152], index: 0, kind: input, shape index: {}]
  %s1 = inlined_call_operand.vmem [shape: bf16[32,128], index: 1, kind: output, shape index: {}]
  %s2 = sld [smem:[#allocation0]]
  $region14: #{model_and_loss_forward.19} parent=0
    _
  %s4 = ssub.s32 1, %s2
  %s5 = scalar_select 0, %s4, %s2
  // Predicated region
  $region2: #{model_and_loss_forward.19} parent=0 // pred_check
    _
  $region3: #{model_and_loss_forward.19} parent=0 // pred_check_branch
    %7 = sbr.rel (0) target = $region5
  $region4: #{model_and_loss_forward.19} parent=0 // pred_region
    _
  $region5: #{model_and_loss_forward.19} parent=0 // pred_fallthru
    _
  %v8 = vld [vmem:[%s0] sm:$0xf]
  %v9 = vld [vmem:[%s0 + $0x24] sm:$0xf]
  %v10 = vld [vmem:[%s0 + $0x48] sm:$0xf]
  %v11 = vld [vmem:[%s0 + $0x6c] sm:$0xf]
  %v12 = vld [vmem:[%s0 + $0x4] sm:$0xf]
  %v13 = vld [vmem:[%s0 + $0x28] sm:$0xf]
  %v14 = vld [vmem:[%s0 + $0x4c] sm:$0xf]
  %v15 = vld [vmem:[%s0 + $0x70] sm:$0xf]
  %v16 = vmax.bf16 %v8, %v12
  %v17 = vmax.bf16 %v9, %v13
  %v18 = vmax.bf16 %v10, %v14
  %v19 = vmax.bf16 %v11, %v15
  %v20 = vld [vmem:[%s0 + $0x8] sm:$0xf]
  %v21 = vld [vmem:[%s0 + $0x2c] sm:$0xf]
  %v22 = vld [vmem:[%s0 + $0x50] sm:$0xf]
  %v23 = vld [vmem:[%s0 + $0x74] sm:$0xf]
  %v24 = vmax.bf16 %v16, %v20
  %v25 = vmax.bf16 %v17, %v21
  %v26 = vmax.bf16 %v18, %v22
  %v27 = vmax.bf16 %v19, %v23
  %v28 = vld [vmem:[%s0 + $0xc] sm:$0xf]
  %v29 = vld [vmem:[%s0 + $0x30] sm:$0xf]
  %v30 = vld [vmem:[%s0 + $0x54] sm:$0xf]
  %v31 = vld [vmem:[%s0 + $0x78] sm:$0xf]
  %v32 = vmax.bf16 %v24, %v28
  %v33 = vmax.bf16 %v25, %v29
  %v34 = vmax.bf16 %v26, %v30
  %v35 = vmax.bf16 %v27, %v31
  %v36 = vld [vmem:[%s0 + $0x10] sm:$0xf]
  %v37 = vld [vmem:[%s0 + $0x34] sm:$0xf]
  %v38 = vld [vmem:[%s0 + $0x58] sm:$0xf]
  %v39 = vld [vmem:[%s0 + $0x7c] sm:$0xf]
  %v40 = vmax.bf16 %v32, %v36
  %v41 = vmax.bf16 %v33, %v37
  %v42 = vmax.bf16 %v34, %v38
  %v43 = vmax.bf16 %v35, %v39
  %v44 = vld [vmem:[%s0 + $0x14] sm:$0xf]
  %v45 = vld [vmem:[%s0 + $0x38] sm:$0xf]
  %v46 = vld [vmem:[%s0 + $0x5c] sm:$0xf]
  %v47 = vld [vmem:[%s0 + $0x80] sm:$0xf]
  %v48 = vmax.bf16 %v40, %v44
  %v49 = vmax.bf16 %v41, %v45
  %v50 = vmax.bf16 %v42, %v46
  %v51 = vmax.bf16 %v43, %v47
  %v52 = vld [vmem:[%s0 + $0x18] sm:$0xf]
  %v53 = vld [vmem:[%s0 + $0x3c] sm:$0xf]
  %v54 = vld [vmem:[%s0 + $0x60] sm:$0xf]
  %v55 = vld [vmem:[%s0 + $0x84] sm:$0xf]
  %v56 = vmax.bf16 %v48, %v52
  %v57 = vmax.bf16 %v49, %v53
  %v58 = vmax.bf16 %v50, %v54
  %v59 = vmax.bf16 %v51, %v55
  %v60 = vld [vmem:[%s0 + $0x1c] sm:$0xf]
  %v61 = vld [vmem:[%s0 + $0x40] sm:$0xf]
  %v62 = vld [vmem:[%s0 + $0x64] sm:$0xf]
  %v63 = vld [vmem:[%s0 + $0x88] sm:$0xf]
  %v64 = vmax.bf16 %v56, %v60
  %v65 = vmax.bf16 %v57, %v61
  %v66 = vmax.bf16 %v58, %v62
  %v67 = vmax.bf16 %v59, %v63
  %v68 = vld [vmem:[%s0 + $0x20] sm:$0xf]
  %v69 = vld [vmem:[%s0 + $0x44] sm:$0xf]
  %v70 = vld [vmem:[%s0 + $0x68] sm:$0xf]
  %v71 = vld [vmem:[%s0 + $0x8c] sm:$0xf]
  %v72 = vmax.bf16 %v64, %v68
  %v73 = vmax.bf16 %v65, %v69
  %v74 = vmax.bf16 %v66, %v70
  %v75 = vmax.bf16 %v67, %v71
  %76 = vst [vmem:[%s1] sm:$0xf] %v72
  %77 = vst [vmem:[%s1 + $0x4] sm:$0xf] %v73
  %78 = vst [vmem:[%s1 + $0x8] sm:$0xf] %v74
  %79 = vst [vmem:[%s1 + $0xc] sm:$0xf] %v75
  // Predicated region
  $region6: #{model_and_loss_forward.19} parent=0 // pred_check
    _
  $region7: #{model_and_loss_forward.19} parent=0 // pred_check_branch
    %81 = sbr.rel (0) target = $region9
  $region8: #{model_and_loss_forward.19} parent=0 // pred_region
    _
  $region9: #{model_and_loss_forward.19} parent=0 // pred_fallthru
    _
  // Predicated region
  $region10: #{model_and_loss_forward.19} parent=0 // pred_check
    _
  $region11: #{model_and_loss_forward.19} parent=0 // pred_check_branch
    %83 = sbr.rel (0) target = $region13
  $region12: #{model_and_loss_forward.19} parent=0 // pred_region
    _
  $region13: #{model_and_loss_forward.19} parent=0 // pred_fallthru
    _

// kernel: model_and_loss_forward.20
$region0: #{model_and_loss_forward.20}
  #allocation0 [shape = 'u32[]', space=smem, size = 0x4, offset = 0x4, fixed_abs, tag = 'smem constant byte address 0x4 - core index']
  #allocation1 [shape = 'u32[144,128]{1,0:T(1,128)}', space=vmem, size = 0x12000, scoped, tag = 'internal scratch']
  %s0 = inlined_call_operand.vmem [shape: bf16[32,128], index: 0, kind: input, shape index: {}]
  %s1 = inlined_call_operand.vmem [shape: bf16[128,256], index: 1, kind: input, shape index: {}]
  %s2 = inlined_call_operand.vmem [shape: bf16[32,256], index: 2, kind: output, shape index: {0}]
  %s3 = inlined_call_operand.vmem [shape: f32[1,1,256], index: 3, kind: output, shape index: {1}]
  %s4 = inlined_call_operand.vmem [shape: f32[1,1,256], index: 4, kind: output, shape index: {2}]
  %5 = xla_tuple %s2, %s3, %s4
  %s6 = sld [smem:[#allocation0]]
  $region34: #{model_and_loss_forward.20} parent=0
    _
  %s8 = ssub.s32 1, %s6
  %s9 = scalar_select 0, %s8, %s6
  // Predicated region
  $region2: #{model_and_loss_forward.20} parent=0 // pred_check
    _
  $region3: #{model_and_loss_forward.20} parent=0 // pred_check_branch
    %11 = sbr.rel (0) target = $region5
  $region4: #{model_and_loss_forward.20} parent=0 // pred_region
    _
  $region5: #{model_and_loss_forward.20} parent=0 // pred_fallthru
    _
  // Predicated region
  $region6: #{model_and_loss_forward.20} parent=0 // pred_check
    _
  $region7: #{model_and_loss_forward.20} parent=0 // pred_check_branch
    %13 = sbr.rel (0) target = $region9
  $region8: #{model_and_loss_forward.20} parent=0 // pred_region
    _
  $region9: #{model_and_loss_forward.20} parent=0 // pred_fallthru
    _
  %v15 = vld [vmem:[%s0] sm:$0xf]
  %v16 = vld [vmem:[%s0 + $0x4] sm:$0xf]
  %v17 = vld [vmem:[%s0 + $0x8] sm:$0xf]
  %v18 = vld [vmem:[%s0 + $0xc] sm:$0xf]
  %v19 = vld [vmem:[%s1] sm:$0xff]
  %v20 = vld [vmem:[%s1 + $0x8] sm:$0xff]
  %v21 = vld [vmem:[%s1 + $0x10] sm:$0xff]
  %v22 = vld [vmem:[%s1 + $0x18] sm:$0xff]
  %v23 = vld [vmem:[%s1 + $0x20] sm:$0xff]
  %v24 = vld [vmem:[%s1 + $0x28] sm:$0xff]
  %v25 = vld [vmem:[%s1 + $0x30] sm:$0xff]
  %v26 = vld [vmem:[%s1 + $0x38] sm:$0xff]
  %v27 = vld [vmem:[%s1 + $0x40] sm:$0xff]
  %v28 = vld [vmem:[%s1 + $0x48] sm:$0xff]
  %v29 = vld [vmem:[%s1 + $0x50] sm:$0xff]
  %v30 = vld [vmem:[%s1 + $0x58] sm:$0xff]
  %v31 = vld [vmem:[%s1 + $0x60] sm:$0xff]
  %v32 = vld [vmem:[%s1 + $0x68] sm:$0xff]
  %v33 = vld [vmem:[%s1 + $0x70] sm:$0xff]
  %v34 = vld [vmem:[%s1 + $0x78] sm:$0xff]
  %v39 = vunpack.c.l.b16 %v15
  %v40 = vunpack.c.l.b16 %v16
  %v41 = vunpack.c.l.b16 %v17
  %v42 = vunpack.c.l.b16 %v18
  %v43 = vpack.c.b16 %v40, %v39
  %v44 = vpack.c.b16 %v42, %v41
  %v63 = vunpack.c.l.b16 %v19
  %v64 = vunpack.c.h.b16 %v19
  %v65 = vunpack.c.l.b16 %v20
  %v66 = vunpack.c.h.b16 %v20
  %v67 = vunpack.c.l.b16 %v21
  %v68 = vunpack.c.h.b16 %v21
  %v69 = vunpack.c.l.b16 %v22
  %v70 = vunpack.c.h.b16 %v22
  %v71 = vunpack.c.l.b16 %v23
  %v72 = vunpack.c.h.b16 %v23
  %v73 = vunpack.c.l.b16 %v24
  %v74 = vunpack.c.h.b16 %v24
  %v75 = vunpack.c.l.b16 %v25
  %v76 = vunpack.c.h.b16 %v25
  %v77 = vunpack.c.l.b16 %v26
  %v78 = vunpack.c.h.b16 %v26
  %v79 = vunpack.c.l.b16 %v27
  %v80 = vunpack.c.h.b16 %v27
  %v81 = vunpack.c.l.b16 %v28
  %v82 = vunpack.c.h.b16 %v28
  %v83 = vunpack.c.l.b16 %v29
  %v84 = vunpack.c.h.b16 %v29
  %v85 = vunpack.c.l.b16 %v30
  %v86 = vunpack.c.h.b16 %v30
  %v87 = vunpack.c.l.b16 %v31
  %v88 = vunpack.c.h.b16 %v31
  %v89 = vunpack.c.l.b16 %v32
  %v90 = vunpack.c.h.b16 %v32
  %v91 = vunpack.c.l.b16 %v33
  %v92 = vunpack.c.h.b16 %v33
  %v93 = vunpack.c.l.b16 %v34
  %v94 = vunpack.c.h.b16 %v34
  %v95 = vpack.c.b16 %v65, %v63
  %v96 = vpack.c.b16 %v66, %v64
  %v97 = vpack.c.b16 %v69, %v67
  %v98 = vpack.c.b16 %v70, %v68
  %v99 = vpack.c.b16 %v73, %v71
  %v100 = vpack.c.b16 %v74, %v72
  %v101 = vpack.c.b16 %v77, %v75
  %v102 = vpack.c.b16 %v78, %v76
  %v103 = vpack.c.b16 %v81, %v79
  %v104 = vpack.c.b16 %v82, %v80
  %v105 = vpack.c.b16 %v85, %v83
  %v106 = vpack.c.b16 %v86, %v84
  %v107 = vpack.c.b16 %v89, %v87
  %v108 = vpack.c.b16 %v90, %v88
  %v109 = vpack.c.b16 %v93, %v91
  %v110 = vpack.c.b16 %v94, %v92
  %127 = vmatprep.subr.bf16.mxu0 %v96
  %128 = vmatpush1.bf16.msra.mxu0 %v95
  %129 = vmatprep.subr.bf16.mxu0 %v98
  %130 = vmatpush1.bf16.msra.mxu0 %v97
  %131 = vmatprep.subr.bf16.mxu0 %v100
  %132 = vmatpush1.bf16.msra.mxu0 %v99
  %133 = vmatprep.subr.bf16.mxu0 %v102
  %134 = vmatpush1.bf16.msra.mxu0 %v101
  %135 = vmatprep.subr.bf16.mxu0 %v104
  %136 = vmatpush1.bf16.msra.mxu0 %v103
  %137 = vmatprep.subr.bf16.mxu0 %v106
  %138 = vmatpush1.bf16.msra.mxu0 %v105
  %139 = vmatprep.subr.bf16.mxu0 %v108
  %140 = vmatpush1.bf16.msra.mxu0 %v107
  %141 = vmatprep.subr.bf16.mxu0 %v110
  %142 = vmatpush1.bf16.msra.mxu0 %v109
  %143 = vmatprep.subr.bf16.mxu0 0
  %144 = vmatpush1.bf16.msra.mxu0 0
  %145 = vmatprep.subr.bf16.mxu0 0
  %146 = vmatpush1.bf16.msra.mxu0 0
  %147 = vmatprep.subr.bf16.mxu0 0
  %148 = vmatpush1.bf16.msra.mxu0 0
  %149 = vmatprep.subr.bf16.mxu0 0
  %150 = vmatpush1.bf16.msra.mxu0 0
  %151 = vmatprep.subr.bf16.mxu0 0
  %152 = vmatpush1.bf16.msra.mxu0 0
  %153 = vmatprep.subr.bf16.mxu0 0
  %154 = vmatpush1.bf16.msra.mxu0 0
  %155 = vmatprep.subr.bf16.mxu0 0
  %156 = vmatpush1.bf16.msra.mxu0 0
  %157 = vmatprep.subr.bf16.mxu0 0
  %158 = vmatpush1.bf16.msra.mxu0 0
  %159 = vmatprep.mubr.bf16.mxu0 0
  %160 = vmatmul.mubr.bf16.gmra.mrb[0].mxu0 %v43
  %v161 = vpop.f32.mrb[0].mxu0
  %v162 = vadd.f32 0.0, %v161
  %v163 = vpop.f32.mrb[0].mxu0
  %v164 = vadd.f32 0.0, %v163
  %v165 = vpop.f32.mrb[0].mxu0
  %v166 = vadd.f32 0.0, %v165
  %v167 = vpop.f32.mrb[0].mxu0
  %v168 = vadd.f32 0.0, %v167
  %169 = vmatprep.mubr.bf16.mxu0 0
  %170 = vmatmul.mubr.bf16.gmra.mrb[0].mxu0 %v44
  %v171 = vpop.f32.mrb[0].mxu0
  %v172 = vadd.f32 0.0, %v171
  %v173 = vpop.f32.mrb[0].mxu0
  %v174 = vadd.f32 0.0, %v173
  %v175 = vpop.f32.mrb[0].mxu0
  %v176 = vadd.f32 0.0, %v175
  %v177 = vpop.f32.mrb[0].mxu0
  %v178 = vadd.f32 0.0, %v177
  %179 = vdwg.mxu0
  %v180 = vpack.c.bf16 %v166, %v162
  %v181 = vpack.c.bf16 %v168, %v164
  %v182 = vpack.c.bf16 %v176, %v172
  %v183 = vpack.c.bf16 %v178, %v174
  %v188 = vunpack.c.l.b16 %v180
  %v189 = vunpack.c.l.b16 %v181
  %v190 = vunpack.c.h.b16 %v180
  %v191 = vunpack.c.h.b16 %v181
  %v192 = vunpack.c.l.b16 %v182
  %v193 = vunpack.c.l.b16 %v183
  %v194 = vunpack.c.h.b16 %v182
  %v195 = vunpack.c.h.b16 %v183
  %v196 = vpack.c.b16 %v189, %v188
  %v197 = vpack.c.b16 %v191, %v190
  %v198 = vpack.c.b16 %v193, %v192
  %v199 = vpack.c.b16 %v195, %v194
  %204 = vst [vmem:[%s2] sm:$0xff] %v196
  %205 = vst [vmem:[%s2 + $0x8] sm:$0xff] %v197
  %206 = vst [vmem:[%s2 + $0x10] sm:$0xff] %v198
  %207 = vst [vmem:[%s2 + $0x18] sm:$0xff] %v199
  %v208 = vadd.f32 %v162, %v166
  %v209 = vadd.f32 %v208, %v172
  %v210 = vadd.f32 %v209, %v176
  %v211 = vrot.slane %v210, 4
  %v212 = vadd.f32 %v210, %v211
  %v213 = vrot.slane %v212, 2
  %v214 = vadd.f32 %v212, %v213
  %v215 = vrot.slane %v214, 1
  %v216 = vadd.f32 %v214, %v215
  %v217 = vadd.f32 %v164, %v168
  %v218 = vadd.f32 %v217, %v174
  %v219 = vadd.f32 %v218, %v178
  %v220 = vrot.slane %v219, 4
  %v221 = vadd.f32 %v219, %v220
  %v222 = vrot.slane %v221, 2
  %v223 = vadd.f32 %v221, %v222
  %v224 = vrot.slane %v223, 1
  %v225 = vadd.f32 %v223, %v224
  %v228 = vcombine.low %v216, %v225
  %v230 = vunpack.c.l.s4 1966171168
  %v231 = vunpack.c.0.s8 %v230
  %v232 = vlaneseq
  %v233 = vshrl.u32 %v232, 7
  %v234 = vsub.s32 %v231, %v233
  %v235 = vrot.slane %v228, %v234
  %v237 = vunpack.c.l.s4 1966171168
  %v238 = vunpack.c.0.s8 %v237
  %v239 = vlaneseq
  %v240 = vshrl.u32 %v239, 7
  %v241 = vsub.s32 %v238, %v240
  %v242 = vrot.slane %v235, %v241
  %v244 = vlaneseq
  %vm245 = vcmp.ge.s32.totalorder %v244, 0
  %vm246 = vcmp.lt.s32.totalorder %v244, 256
  %vm247 = vmand %vm245, %vm246
  %248 = vst.msk [vmem:[%s3] sm:$0x3] %vm247, %v242
  %v249 = vmul.f32 %v162, %v162
  %v250 = vmul.f32 %v164, %v164
  %v251 = vmul.f32 %v166, %v166
  %v252 = vmul.f32 %v168, %v168
  %v253 = vmul.f32 %v172, %v172
  %v254 = vmul.f32 %v174, %v174
  %v255 = vmul.f32 %v176, %v176
  %v256 = vmul.f32 %v178, %v178
  %v257 = vadd.f32 %v249, %v251
  %v258 = vadd.f32 %v257, %v253
  %v259 = vadd.f32 %v258, %v255
  %v260 = vrot.slane %v259, 4
  %v261 = vadd.f32 %v259, %v260
  %v262 = vrot.slane %v261, 2
  %v263 = vadd.f32 %v261, %v262
  %v264 = vrot.slane %v263, 1
  %v265 = vadd.f32 %v263, %v264
  %v266 = vadd.f32 %v250, %v252
  %v267 = vadd.f32 %v266, %v254
  %v268 = vadd.f32 %v267, %v256
  %v269 = vrot.slane %v268, 4
  %v270 = vadd.f32 %v268, %v269
  %v271 = vrot.slane %v270, 2
  %v272 = vadd.f32 %v270, %v271
  %v273 = vrot.slane %v272, 1
  %v274 = vadd.f32 %v272, %v273
  %v277 = vcombine.low %v265, %v274
  %v279 = vunpack.c.l.s4 1966171168
  %v280 = vunpack.c.0.s8 %v279
  %v281 = vlaneseq
  %v282 = vshrl.u32 %v281, 7
  %v283 = vsub.s32 %v280, %v282
  %v284 = vrot.slane %v277, %v283
  %v286 = vunpack.c.l.s4 1966171168
  %v287 = vunpack.c.0.s8 %v286
  %v288 = vlaneseq
  %v289 = vshrl.u32 %v288, 7
  %v290 = vsub.s32 %v287, %v289
  %v291 = vrot.slane %v284, %v290
  %293 = vst.msk [vmem:[%s4] sm:$0x3] %vm247, %v291
  // Predicated region
  $region10: #{model_and_loss_forward.20} parent=0 // pred_check
    _
  $region11: #{model_and_loss_forward.20} parent=0 // pred_check_branch
    %295 = sbr.rel (0) target = $region13
  $region12: #{model_and_loss_forward.20} parent=0 // pred_region
    _
  $region13: #{model_and_loss_forward.20} parent=0 // pred_fallthru
    _
  // Predicated region
  $region14: #{model_and_loss_forward.20} parent=0 // pred_check
    _
  $region15: #{model_and_loss_forward.20} parent=0 // pred_check_branch
    %297 = sbr.rel (0) target = $region17
  $region16: #{model_and_loss_forward.20} parent=0 // pred_region
    _
  $region17: #{model_and_loss_forward.20} parent=0 // pred_fallthru
    _
  // Predicated region
  $region18: #{model_and_loss_forward.20} parent=0 // pred_check
    _
  $region19: #{model_and_loss_forward.20} parent=0 // pred_check_branch
    %299 = sbr.rel (0) target = $region21
  $region20: #{model_and_loss_forward.20} parent=0 // pred_region
    _
  $region21: #{model_and_loss_forward.20} parent=0 // pred_fallthru
    _
  // Predicated region
  $region22: #{model_and_loss_forward.20} parent=0 // pred_check
    _
  $region23: #{model_and_loss_forward.20} parent=0 // pred_check_branch
    %301 = sbr.rel (0) target = $region25
  $region24: #{model_and_loss_forward.20} parent=0 // pred_region
    _
  $region25: #{model_and_loss_forward.20} parent=0 // pred_fallthru
    _
  // Predicated region
  $region26: #{model_and_loss_forward.20} parent=0 // pred_check
    _
  $region27: #{model_and_loss_forward.20} parent=0 // pred_check_branch
    %303 = sbr.rel (0) target = $region29
  $region28: #{model_and_loss_forward.20} parent=0 // pred_region
    _
  $region29: #{model_and_loss_forward.20} parent=0 // pred_fallthru
    _
  // Predicated region
  $region30: #{model_and_loss_forward.20} parent=0 // pred_check
    _
  $region31: #{model_and_loss_forward.20} parent=0 // pred_check_branch
    %305 = sbr.rel (0) target = $region33
  $region32: #{model_and_loss_forward.20} parent=0 // pred_region
    _
  $region33: #{model_and_loss_forward.20} parent=0 // pred_fallthru
    _

// kernel: model_and_loss_forward.22
$region0: #{model_and_loss_forward.22}
  #allocation0 [shape = 'u32[]', space=smem, size = 0x4, offset = 0x4, fixed_abs, tag = 'smem constant byte address 0x4 - core index']
  #allocation1 [shape = 'u32[144,128]{1,0:T(1,128)}', space=vmem, size = 0x12000, scoped, tag = 'internal scratch']
  %s0 = inlined_call_operand.vmem [shape: bf16[32,128], index: 0, kind: input, shape index: {}]
  %s1 = inlined_call_operand.vmem [shape: bf16[128,128], index: 1, kind: input, shape index: {}]
  %s2 = inlined_call_operand.vmem [shape: bf16[32,128], index: 2, kind: output, shape index: {0}]
  %s3 = inlined_call_operand.vmem [shape: f32[1,1,128], index: 3, kind: output, shape index: {1}]
  %s4 = inlined_call_operand.vmem [shape: f32[1,1,128], index: 4, kind: output, shape index: {2}]
  %5 = xla_tuple %s2, %s3, %s4
  %s6 = sld [smem:[#allocation0]]
  $region34: #{model_and_loss_forward.22} parent=0
    _
  %s8 = ssub.s32 1, %s6
  %s9 = scalar_select 0, %s8, %s6
  // Predicated region
  $region2: #{model_and_loss_forward.22} parent=0 // pred_check
    _
  $region3: #{model_and_loss_forward.22} parent=0 // pred_check_branch
    %11 = sbr.rel (0) target = $region5
  $region4: #{model_and_loss_forward.22} parent=0 // pred_region
    _
  $region5: #{model_and_loss_forward.22} parent=0 // pred_fallthru
    _
  // Predicated region
  $region6: #{model_and_loss_forward.22} parent=0 // pred_check
    _
  $region7: #{model_and_loss_forward.22} parent=0 // pred_check_branch
    %13 = sbr.rel (0) target = $region9
  $region8: #{model_and_loss_forward.22} parent=0 // pred_region
    _
  $region9: #{model_and_loss_forward.22} parent=0 // pred_fallthru
    _
  %v15 = vld [vmem:[%s0] sm:$0xf]
  %v16 = vld [vmem:[%s0 + $0x4] sm:$0xf]
  %v17 = vld [vmem:[%s0 + $0x8] sm:$0xf]
  %v18 = vld [vmem:[%s0 + $0xc] sm:$0xf]
  %v19 = vld [vmem:[%s1] sm:$0xf]
  %v20 = vld [vmem:[%s1 + $0x4] sm:$0xf]
  %v21 = vld [vmem:[%s1 + $0x8] sm:$0xf]
  %v22 = vld [vmem:[%s1 + $0xc] sm:$0xf]
  %v23 = vld [vmem:[%s1 + $0x10] sm:$0xf]
  %v24 = vld [vmem:[%s1 + $0x14] sm:$0xf]
  %v25 = vld [vmem:[%s1 + $0x18] sm:$0xf]
  %v26 = vld [vmem:[%s1 + $0x1c] sm:$0xf]
  %v27 = vld [vmem:[%s1 + $0x20] sm:$0xf]
  %v28 = vld [vmem:[%s1 + $0x24] sm:$0xf]
  %v29 = vld [vmem:[%s1 + $0x28] sm:$0xf]
  %v30 = vld [vmem:[%s1 + $0x2c] sm:$0xf]
  %v31 = vld [vmem:[%s1 + $0x30] sm:$0xf]
  %v32 = vld [vmem:[%s1 + $0x34] sm:$0xf]
  %v33 = vld [vmem:[%s1 + $0x38] sm:$0xf]
  %v34 = vld [vmem:[%s1 + $0x3c] sm:$0xf]
  %v39 = vunpack.c.l.b16 %v15
  %v40 = vunpack.c.l.b16 %v16
  %v41 = vunpack.c.l.b16 %v17
  %v42 = vunpack.c.l.b16 %v18
  %v43 = vpack.c.b16 %v40, %v39
  %v44 = vpack.c.b16 %v42, %v41
  %v63 = vunpack.c.l.b16 %v19
  %v64 = vunpack.c.l.b16 %v20
  %v65 = vunpack.c.l.b16 %v21
  %v66 = vunpack.c.l.b16 %v22
  %v67 = vunpack.c.l.b16 %v23
  %v68 = vunpack.c.l.b16 %v24
  %v69 = vunpack.c.l.b16 %v25
  %v70 = vunpack.c.l.b16 %v26
  %v71 = vunpack.c.l.b16 %v27
  %v72 = vunpack.c.l.b16 %v28
  %v73 = vunpack.c.l.b16 %v29
  %v74 = vunpack.c.l.b16 %v30
  %v75 = vunpack.c.l.b16 %v31
  %v76 = vunpack.c.l.b16 %v32
  %v77 = vunpack.c.l.b16 %v33
  %v78 = vunpack.c.l.b16 %v34
  %v79 = vpack.c.b16 %v64, %v63
  %v80 = vpack.c.b16 %v66, %v65
  %v81 = vpack.c.b16 %v68, %v67
  %v82 = vpack.c.b16 %v70, %v69
  %v83 = vpack.c.b16 %v72, %v71
  %v84 = vpack.c.b16 %v74, %v73
  %v85 = vpack.c.b16 %v76, %v75
  %v86 = vpack.c.b16 %v78, %v77
  %95 = vmatprep.subr.bf16.mxu0 0
  %96 = vmatpush1.bf16.msra.mxu0 %v79
  %97 = vmatprep.subr.bf16.mxu0 0
  %98 = vmatpush1.bf16.msra.mxu0 %v80
  %99 = vmatprep.subr.bf16.mxu0 0
  %100 = vmatpush1.bf16.msra.mxu0 %v81
  %101 = vmatprep.subr.bf16.mxu0 0
  %102 = vmatpush1.bf16.msra.mxu0 %v82
  %103 = vmatprep.subr.bf16.mxu0 0
  %104 = vmatpush1.bf16.msra.mxu0 %v83
  %105 = vmatprep.subr.bf16.mxu0 0
  %106 = vmatpush1.bf16.msra.mxu0 %v84
  %107 = vmatprep.subr.bf16.mxu0 0
  %108 = vmatpush1.bf16.msra.mxu0 %v85
  %109 = vmatprep.subr.bf16.mxu0 0
  %110 = vmatpush1.bf16.msra.mxu0 %v86
  %111 = vmatprep.subr.bf16.mxu0 0
  %112 = vmatpush1.bf16.msra.mxu0 0
  %113 = vmatprep.subr.bf16.mxu0 0
  %114 = vmatpush1.bf16.msra.mxu0 0
  %115 = vmatprep.subr.bf16.mxu0 0
  %116 = vmatpush1.bf16.msra.mxu0 0
  %117 = vmatprep.subr.bf16.mxu0 0
  %118 = vmatpush1.bf16.msra.mxu0 0
  %119 = vmatprep.subr.bf16.mxu0 0
  %120 = vmatpush1.bf16.msra.mxu0 0
  %121 = vmatprep.subr.bf16.mxu0 0
  %122 = vmatpush1.bf16.msra.mxu0 0
  %123 = vmatprep.subr.bf16.mxu0 0
  %124 = vmatpush1.bf16.msra.mxu0 0
  %125 = vmatprep.subr.bf16.mxu0 0
  %126 = vmatpush1.bf16.msra.mxu0 0
  %127 = vmatprep.mubr.bf16.mxu0 0
  %128 = vmatmul.mubr.bf16.gmra.mrb[0].mxu0 %v43
  %v129 = vpop.f32.mrb[0].mxu0
  %v130 = vadd.f32 0.0, %v129
  %v131 = vpop.f32.mrb[0].mxu0
  %v132 = vpop.f32.mrb[0].mxu0
  %v133 = vadd.f32 0.0, %v132
  %v134 = vpop.f32.mrb[0].mxu0
  %135 = vmatprep.mubr.bf16.mxu0 0
  %136 = vmatmul.mubr.bf16.gmra.mrb[0].mxu0 %v44
  %v137 = vpop.f32.mrb[0].mxu0
  %v138 = vadd.f32 0.0, %v137
  %v139 = vpop.f32.mrb[0].mxu0
  %v140 = vpop.f32.mrb[0].mxu0
  %v141 = vadd.f32 0.0, %v140
  %v142 = vpop.f32.mrb[0].mxu0
  %143 = vdwg.mxu0
  %v144 = vpack.c.bf16 %v133, %v130
  %v145 = vpack.c.bf16 %v141, %v138
  %v148 = vunpack.c.l.b16 %v144
  %v149 = vunpack.c.h.b16 %v144
  %v150 = vunpack.c.l.b16 %v145
  %v151 = vunpack.c.h.b16 %v145
  %v152 = vpack.c.b16 %v148, %v148
  %v153 = vpack.c.b16 %v149, %v149
  %v154 = vpack.c.b16 %v150, %v150
  %v155 = vpack.c.b16 %v151, %v151
  %160 = vst [vmem:[%s2] sm:$0xf] %v152
  %161 = vst [vmem:[%s2 + $0x4] sm:$0xf] %v153
  %162 = vst [vmem:[%s2 + $0x8] sm:$0xf] %v154
  %163 = vst [vmem:[%s2 + $0xc] sm:$0xf] %v155
  %v164 = vadd.f32 %v130, %v133
  %v165 = vadd.f32 %v164, %v138
  %v166 = vadd.f32 %v165, %v141
  %v167 = vrot.slane %v166, 4
  %v168 = vadd.f32 %v166, %v167
  %v169 = vrot.slane %v168, 2
  %v170 = vadd.f32 %v168, %v169
  %v171 = vrot.slane %v170, 1
  %v172 = vadd.f32 %v170, %v171
  %173 = vst [vmem:[%s3] sm:$0x1] %v172
  %v174 = vmul.f32 %v130, %v130
  %v175 = vmul.f32 %v133, %v133
  %v176 = vmul.f32 %v138, %v138
  %v177 = vmul.f32 %v141, %v141
  %v178 = vadd.f32 %v174, %v175
  %v179 = vadd.f32 %v178, %v176
  %v180 = vadd.f32 %v179, %v177
  %v181 = vrot.slane %v180, 4
  %v182 = vadd.f32 %v180, %v181
  %v183 = vrot.slane %v182, 2
  %v184 = vadd.f32 %v182, %v183
  %v185 = vrot.slane %v184, 1
  %v186 = vadd.f32 %v184, %v185
  %187 = vst [vmem:[%s4] sm:$0x1] %v186
  // Predicated region
  $region10: #{model_and_loss_forward.22} parent=0 // pred_check
    _
  $region11: #{model_and_loss_forward.22} parent=0 // pred_check_branch
    %189 = sbr.rel (0) target = $region13
  $region12: #{model_and_loss_forward.22} parent=0 // pred_region
    _
  $region13: #{model_and_loss_forward.22} parent=0 // pred_fallthru
    _
  // Predicated region
  $region14: #{model_and_loss_forward.22} parent=0 // pred_check
    _
  $region15: #{model_and_loss_forward.22} parent=0 // pred_check_branch
    %191 = sbr.rel (0) target = $region17
  $region16: #{model_and_loss_forward.22} parent=0 // pred_region
    _
  $region17: #{model_and_loss_forward.22} parent=0 // pred_fallthru
    _
  // Predicated region
  $region18: #{model_and_loss_forward.22} parent=0 // pred_check
    _
  $region19: #{model_and_loss_forward.22} parent=0 // pred_check_branch
    %193 = sbr.rel (0) target = $region21
  $region20: #{model_and_loss_forward.22} parent=0 // pred_region
    _
  $region21: #{model_and_loss_forward.22} parent=0 // pred_fallthru
    _
  // Predicated region
  $region22: #{model_and_loss_forward.22} parent=0 // pred_check
    _
  $region23: #{model_and_loss_forward.22} parent=0 // pred_check_branch
    %195 = sbr.rel (0) target = $region25
  $region24: #{model_and_loss_forward.22} parent=0 // pred_region
    _
  $region25: #{model_and_loss_forward.22} parent=0 // pred_fallthru
    _
  // Predicated region
  $region26: #{model_and_loss_forward.22} parent=0 // pred_check
    _
  $region27: #{model_and_loss_forward.22} parent=0 // pred_check_branch
    %197 = sbr.rel (0) target = $region29
  $region28: #{model_and_loss_forward.22} parent=0 // pred_region
    _
  $region29: #{model_and_loss_forward.22} parent=0 // pred_fallthru
    _
  // Predicated region
  $region30: #{model_and_loss_forward.22} parent=0 // pred_check
    _
  $region31: #{model_and_loss_forward.22} parent=0 // pred_check_branch
    %199 = sbr.rel (0) target = $region33
  $region32: #{model_and_loss_forward.22} parent=0 // pred_region
    _
  $region33: #{model_and_loss_forward.22} parent=0 // pred_fallthru
    _

// kernel: model_and_loss_forward.23
$region0: #{model_and_loss_forward.23}
  #allocation0 [shape = 'u32[]', space=smem, size = 0x4, offset = 0x4, fixed_abs, tag = 'smem constant byte address 0x4 - core index']
  #allocation1 [shape = 'u32[144,128]{1,0:T(1,128)}', space=vmem, size = 0x12000, scoped, tag = 'internal scratch']
  %s0 = inlined_call_operand.vmem [shape: bf16[32,128], index: 0, kind: input, shape index: {}]
  %s1 = inlined_call_operand.vmem [shape: f32[1,128], index: 1, kind: input, shape index: {}]
  %s2 = inlined_call_operand.vmem [shape: f32[1,128], index: 2, kind: input, shape index: {}]
  %s3 = inlined_call_operand.vmem [shape: f32[1,128], index: 3, kind: input, shape index: {}]
  %s4 = inlined_call_operand.vmem [shape: f32[1,128], index: 4, kind: input, shape index: {}]
  %s5 = inlined_call_operand.vmem [shape: bf16[32,128], index: 5, kind: output, shape index: {}]
  %s6 = sld [smem:[#allocation0]]
  $region30: #{model_and_loss_forward.23} parent=0
    _
  %s8 = ssub.s32 1, %s6
  %s9 = scalar_select 0, %s8, %s6
  // Predicated region
  $region2: #{model_and_loss_forward.23} parent=0 // pred_check
    _
  $region3: #{model_and_loss_forward.23} parent=0 // pred_check_branch
    %11 = sbr.rel (0) target = $region5
  $region4: #{model_and_loss_forward.23} parent=0 // pred_region
    _
  $region5: #{model_and_loss_forward.23} parent=0 // pred_fallthru
    _
  // Predicated region
  $region6: #{model_and_loss_forward.23} parent=0 // pred_check
    _
  $region7: #{model_and_loss_forward.23} parent=0 // pred_check_branch
    %13 = sbr.rel (0) target = $region9
  $region8: #{model_and_loss_forward.23} parent=0 // pred_region
    _
  $region9: #{model_and_loss_forward.23} parent=0 // pred_fallthru
    _
  // Predicated region
  $region10: #{model_and_loss_forward.23} parent=0 // pred_check
    _
  $region11: #{model_and_loss_forward.23} parent=0 // pred_check_branch
    %15 = sbr.rel (0) target = $region13
  $region12: #{model_and_loss_forward.23} parent=0 // pred_region
    _
  $region13: #{model_and_loss_forward.23} parent=0 // pred_fallthru
    _
  // Predicated region
  $region14: #{model_and_loss_forward.23} parent=0 // pred_check
    _
  $region15: #{model_and_loss_forward.23} parent=0 // pred_check_branch
    %17 = sbr.rel (0) target = $region17
  $region16: #{model_and_loss_forward.23} parent=0 // pred_region
    _
  $region17: #{model_and_loss_forward.23} parent=0 // pred_fallthru
    _
  // Predicated region
  $region18: #{model_and_loss_forward.23} parent=0 // pred_check
    _
  $region19: #{model_and_loss_forward.23} parent=0 // pred_check_branch
    %19 = sbr.rel (0) target = $region21
  $region20: #{model_and_loss_forward.23} parent=0 // pred_region
    _
  $region21: #{model_and_loss_forward.23} parent=0 // pred_fallthru
    _
  %v20 = vld [vmem:[%s1] sm:$0x1]
  %v21 = vmul.f32 %v20, 0.03125
  %v22 = vld [vmem:[%s2] sm:$0x1]
  %v23 = vmul.f32 %v22, 0.03125
  %v24 = vmul.f32 %v21, %v21
  %v25 = vsub.f32 %v23, %v24
  %v26 = vmax.f32 %v25, 0.0
  %v27 = vadd.f32 %v26, 1e-05
  %v28 = vrsqrt.pop %v27
  %v29 = vld [vmem:[%s3] sm:$0x1]
  %v30 = vmul.f32 %v28, %v29
  %v31 = vld [vmem:[%s4] sm:$0x1]
  %v32 = vmul.f32 %v21, %v30
  %v33 = vsub.f32 %v31, %v32
  %v34 = vld [vmem:[%s0] sm:$0xf]
  %v35 = vld [vmem:[%s0 + $0x4] sm:$0xf]
  %v36 = vld [vmem:[%s0 + $0x8] sm:$0xf]
  %v37 = vld [vmem:[%s0 + $0xc] sm:$0xf]
  %v38 = vunpack.c.l.bf16 %v34
  %v39 = vunpack.c.l.bf16 %v35
  %v40 = vunpack.c.l.bf16 %v36
  %v41 = vunpack.c.l.bf16 %v37
  %v43 = vlaneseq
  %v44 = vshrl.u32 %v43, 7
  %v45 = vsub.s32 0, %v44
  %v46 = vrot.slane %v30, %v45
  %v48 = vmul.f32 %v38, %v46
  %v49 = vmul.f32 %v39, %v46
  %v50 = vmul.f32 %v40, %v46
  %v51 = vmul.f32 %v41, %v46
  %v53 = vlaneseq
  %v54 = vshrl.u32 %v53, 7
  %v55 = vsub.s32 0, %v54
  %v56 = vrot.slane %v33, %v55
  %v58 = vadd.f32 %v48, %v56
  %v59 = vadd.f32 %v49, %v56
  %v60 = vadd.f32 %v50, %v56
  %v61 = vadd.f32 %v51, %v56
  %v62 = vmax.f32 %v58, 0.0
  %v63 = vmax.f32 %v59, 0.0
  %v64 = vmax.f32 %v60, 0.0
  %v65 = vmax.f32 %v61, 0.0
  %v66 = vpack.c.bf16 %v63, %v62
  %v67 = vpack.c.bf16 %v65, %v64
  %v70 = vunpack.c.l.b16 %v66
  %v71 = vunpack.c.h.b16 %v66
  %v72 = vunpack.c.l.b16 %v67
  %v73 = vunpack.c.h.b16 %v67
  %v74 = vpack.c.b16 %v70, %v70
  %v75 = vpack.c.b16 %v71, %v71
  %v76 = vpack.c.b16 %v72, %v72
  %v77 = vpack.c.b16 %v73, %v73
  %82 = vst [vmem:[%s5] sm:$0xf] %v74
  %83 = vst [vmem:[%s5 + $0x4] sm:$0xf] %v75
  %84 = vst [vmem:[%s5 + $0x8] sm:$0xf] %v76
  %85 = vst [vmem:[%s5 + $0xc] sm:$0xf] %v77
  // Predicated region
  $region22: #{model_and_loss_forward.23} parent=0 // pred_check
    _
  $region23: #{model_and_loss_forward.23} parent=0 // pred_check_branch
    %87 = sbr.rel (0) target = $region25
  $region24: #{model_and_loss_forward.23} parent=0 // pred_region
    _
  $region25: #{model_and_loss_forward.23} parent=0 // pred_fallthru
    _
  // Predicated region
  $region26: #{model_and_loss_forward.23} parent=0 // pred_check
    _
  $region27: #{model_and_loss_forward.23} parent=0 // pred_check_branch
    %89 = sbr.rel (0) target = $region29
  $region28: #{model_and_loss_forward.23} parent=0 // pred_region
    _
  $region29: #{model_and_loss_forward.23} parent=0 // pred_fallthru
    _

// kernel: model_and_loss_forward.25
$region0: #{model_and_loss_forward.25}
  #allocation0 [shape = 'u32[]', space=smem, size = 0x4, offset = 0x4, fixed_abs, tag = 'smem constant byte address 0x4 - core index']
  #allocation1 [shape = 'u32[144,128]{1,0:T(1,128)}', space=vmem, size = 0x12000, scoped, tag = 'internal scratch']
  %s0 = inlined_call_operand.vmem [shape: bf16[32,128], index: 0, kind: input, shape index: {}]
  %s1 = inlined_call_operand.vmem [shape: bf16[32,256], index: 1, kind: input, shape index: {}]
  %s2 = inlined_call_operand.vmem [shape: f32[1,128], index: 2, kind: input, shape index: {}]
  %s3 = inlined_call_operand.vmem [shape: f32[1,128], index: 3, kind: input, shape index: {}]
  %s4 = inlined_call_operand.vmem [shape: f32[1,128], index: 4, kind: input, shape index: {}]
  %s5 = inlined_call_operand.vmem [shape: f32[1,128], index: 5, kind: input, shape index: {}]
  %s6 = inlined_call_operand.vmem [shape: f32[1,128], index: 6, kind: input, shape index: {}]
  %s7 = inlined_call_operand.vmem [shape: f32[1,128], index: 7, kind: input, shape index: {}]
  %s8 = inlined_call_operand.vmem [shape: f32[1,128], index: 8, kind: input, shape index: {}]
  %s9 = inlined_call_operand.vmem [shape: f32[1,128], index: 9, kind: input, shape index: {}]
  %s10 = inlined_call_operand.vmem [shape: bf16[32,128], index: 10, kind: output, shape index: {}]
  %s11 = sld [smem:[#allocation0]]
  $region91: #{model_and_loss_forward.25} parent=0
    _
  %s13 = ssub.s32 1, %s11
  %s14 = scalar_select 0, %s13, %s11
  $region1: #{model_and_loss_forward.25} parent=0
    #allocation2 [shape = 'u8[8192]{0}', space=vmem, size = 0x2000, scoped, tag = 'input window, operand 1, single buffered']
    // Predicated region
    $region2: #{model_and_loss_forward.25} parent=1 // pred_check
      _
    $region3: #{model_and_loss_forward.25} parent=1 // pred_check_branch
      %16 = sbr.rel (0) target = $region5
    $region4: #{model_and_loss_forward.25} parent=1 // pred_region
      _
    $region5: #{model_and_loss_forward.25} parent=1 // pred_fallthru
      _
    // Predicated region
    $region6: #{model_and_loss_forward.25} parent=1 // pred_check
      _
    $region7: #{model_and_loss_forward.25} parent=1 // pred_check_branch
      %18 = sbr.rel (0) target = $region9
    $region8: #{model_and_loss_forward.25} parent=1 // pred_region
      %s19 = scalar_lea.vmem %s1, 4
      // Predicated region
      $region10: #{model_and_loss_forward.25} parent=8 // pred_check
        _
      $region11: #{model_and_loss_forward.25} parent=8 // pred_check_branch
        %21 = sbr.rel (0) target = $region13
      $region12: #{model_and_loss_forward.25} parent=8 // pred_region
        // Predicated region
        $region14: #{model_and_loss_forward.25} parent=12 // pred_check
          _
        $region15: #{model_and_loss_forward.25} parent=12 // pred_check_branch
          %23 = sbr.rel target = $region17
        $region16: #{model_and_loss_forward.25} parent=12 // pred_region
          // Predicated region
          $region29: #{model_and_loss_forward.25} parent=16 // pred_check
            _
          $region30: #{model_and_loss_forward.25} parent=16 // pred_check_branch
            %44 = sbr.rel (0) target = $region32
          $region31: #{model_and_loss_forward.25} parent=16 // pred_region
            loop: start=0, step=1, limit=1
            $region33: #{model_and_loss_forward.25} parent=31 // loop_pre_header
              _
            $region34: #{model_and_loss_forward.25} parent=31 // loop_header
              %s46 = sphi 0, %s50
              %p47 = scmp.ge.s32.totalorder %s46, 1
              %s51 = sphi %s19, %s19
              %s52 = sphi [#allocation2], [#allocation2]
            $region35: #{model_and_loss_forward.25} parent=31 // loop_header_branch
              %49 = sbr.rel (%p47) target = $region39
            $region36: #{model_and_loss_forward.25} parent=31 // loop_body
              _
            $region37: #{model_and_loss_forward.25} parent=31 // loop_footer
              %s50 = sadd.s32 1, %s46
            $region38: #{model_and_loss_forward.25} parent=31 // loop_footer_branch
              %45 = sbr.rel target = $region34
            $region39: #{model_and_loss_forward.25} parent=31 // loop_exit
              _
            loop: start=0, step=1, limit=1
            $region40: #{model_and_loss_forward.25} parent=31 // loop_pre_header
              _
            $region41: #{model_and_loss_forward.25} parent=31 // loop_header
              %s55 = sphi 0, %s59
              %p56 = scmp.ge.s32.totalorder %s55, 1
              %s60 = sphi %s19, %s19
              %s61 = sphi [#allocation2], [#allocation2]
            $region42: #{model_and_loss_forward.25} parent=31 // loop_header_branch
              %58 = sbr.rel (%p56) target = $region46
            $region43: #{model_and_loss_forward.25} parent=31 // loop_body
              %v62 = vld [vmem:[%s60] sm:$0xf]
              %63 = vst [vmem:[%s61] sm:$0xf] %v62
              %v64 = vld [vmem:[%s60 + $0x8] sm:$0xf]
              %65 = vst [vmem:[%s61 + $0x4] sm:$0xf] %v64
              %v66 = vld [vmem:[%s60 + $0x10] sm:$0xf]
              %67 = vst [vmem:[%s61 + $0x8] sm:$0xf] %v66
              %v68 = vld [vmem:[%s60 + $0x18] sm:$0xf]
              %69 = vst [vmem:[%s61 + $0xc] sm:$0xf] %v68
            $region44: #{model_and_loss_forward.25} parent=31 // loop_footer
              %s59 = sadd.s32 1, %s55
            $region45: #{model_and_loss_forward.25} parent=31 // loop_footer_branch
              %54 = sbr.rel target = $region41
            $region46: #{model_and_loss_forward.25} parent=31 // loop_exit
              _
          $region32: #{model_and_loss_forward.25} parent=16 // pred_fallthru
            _
        $region17: #{model_and_loss_forward.25} parent=12 // pred_fallthru
          _
        // Predicated region
        $region18: #{model_and_loss_forward.25} parent=12 // pred_check
          _
        $region19: #{model_and_loss_forward.25} parent=12 // pred_check_branch
          %25 = sbr.rel (0) target = $region21
        $region20: #{model_and_loss_forward.25} parent=12 // pred_region
          loop: start=0, step=1, limit=1
          $region22: #{model_and_loss_forward.25} parent=20 // loop_pre_header
            _
          $region23: #{model_and_loss_forward.25} parent=20 // loop_header
            %s28 = sphi 0, %s32
            %p29 = scmp.ge.s32.totalorder %s28, 1
            %s33 = sphi %s19, %s19
            %s34 = sphi [#allocation2], [#allocation2]
          $region24: #{model_and_loss_forward.25} parent=20 // loop_header_branch
            %31 = sbr.rel (%p29) target = $region28
          $region25: #{model_and_loss_forward.25} parent=20 // loop_body
            %v35 = vld [vmem:[%s33] sm:$0xf]
            %36 = vst [vmem:[%s34] sm:$0xf] %v35
            %v37 = vld [vmem:[%s33 + $0x8] sm:$0xf]
            %38 = vst [vmem:[%s34 + $0x4] sm:$0xf] %v37
            %v39 = vld [vmem:[%s33 + $0x10] sm:$0xf]
            %40 = vst [vmem:[%s34 + $0x8] sm:$0xf] %v39
            %v41 = vld [vmem:[%s33 + $0x18] sm:$0xf]
            %42 = vst [vmem:[%s34 + $0xc] sm:$0xf] %v41
          $region26: #{model_and_loss_forward.25} parent=20 // loop_footer
            %s32 = sadd.s32 1, %s28
          $region27: #{model_and_loss_forward.25} parent=20 // loop_footer_branch
            %27 = sbr.rel target = $region23
          $region28: #{model_and_loss_forward.25} parent=20 // loop_exit
            _
        $region21: #{model_and_loss_forward.25} parent=12 // pred_fallthru
          _
      $region13: #{model_and_loss_forward.25} parent=8 // pred_fallthru
        _
      %70 = vnop
    $region9: #{model_and_loss_forward.25} parent=1 // pred_fallthru
      _
    // Predicated region
    $region47: #{model_and_loss_forward.25} parent=1 // pred_check
      _
    $region48: #{model_and_loss_forward.25} parent=1 // pred_check_branch
      %72 = sbr.rel (0) target = $region50
    $region49: #{model_and_loss_forward.25} parent=1 // pred_region
      _
    $region50: #{model_and_loss_forward.25} parent=1 // pred_fallthru
      _
    // Predicated region
    $region51: #{model_and_loss_forward.25} parent=1 // pred_check
      _
    $region52: #{model_and_loss_forward.25} parent=1 // pred_check_branch
      %74 = sbr.rel (0) target = $region54
    $region53: #{model_and_loss_forward.25} parent=1 // pred_region
      _
    $region54: #{model_and_loss_forward.25} parent=1 // pred_fallthru
      _
    // Predicated region
    $region55: #{model_and_loss_forward.25} parent=1 // pred_check
      _
    $region56: #{model_and_loss_forward.25} parent=1 // pred_check_branch
      %76 = sbr.rel (0) target = $region58
    $region57: #{model_and_loss_forward.25} parent=1 // pred_region
      _
    $region58: #{model_and_loss_forward.25} parent=1 // pred_fallthru
      _
    // Predicated region
    $region59: #{model_and_loss_forward.25} parent=1 // pred_check
      _
    $region60: #{model_and_loss_forward.25} parent=1 // pred_check_branch
      %78 = sbr.rel (0) target = $region62
    $region61: #{model_and_loss_forward.25} parent=1 // pred_region
      _
    $region62: #{model_and_loss_forward.25} parent=1 // pred_fallthru
      _
    // Predicated region
    $region63: #{model_and_loss_forward.25} parent=1 // pred_check
      _
    $region64: #{model_and_loss_forward.25} parent=1 // pred_check_branch
      %80 = sbr.rel (0) target = $region66
    $region65: #{model_and_loss_forward.25} parent=1 // pred_region
      _
    $region66: #{model_and_loss_forward.25} parent=1 // pred_fallthru
      _
    // Predicated region
    $region67: #{model_and_loss_forward.25} parent=1 // pred_check
      _
    $region68: #{model_and_loss_forward.25} parent=1 // pred_check_branch
      %82 = sbr.rel (0) target = $region70
    $region69: #{model_and_loss_forward.25} parent=1 // pred_region
      _
    $region70: #{model_and_loss_forward.25} parent=1 // pred_fallthru
      _
    // Predicated region
    $region71: #{model_and_loss_forward.25} parent=1 // pred_check
      _
    $region72: #{model_and_loss_forward.25} parent=1 // pred_check_branch
      %84 = sbr.rel (0) target = $region74
    $region73: #{model_and_loss_forward.25} parent=1 // pred_region
      _
    $region74: #{model_and_loss_forward.25} parent=1 // pred_fallthru
      _
    // Predicated region
    $region75: #{model_and_loss_forward.25} parent=1 // pred_check
      _
    $region76: #{model_and_loss_forward.25} parent=1 // pred_check_branch
      %86 = sbr.rel (0) target = $region78
    $region77: #{model_and_loss_forward.25} parent=1 // pred_region
      _
    $region78: #{model_and_loss_forward.25} parent=1 // pred_fallthru
      _
    // Predicated region
    $region79: #{model_and_loss_forward.25} parent=1 // pred_check
      _
    $region80: #{model_and_loss_forward.25} parent=1 // pred_check_branch
      %88 = sbr.rel (0) target = $region82
    $region81: #{model_and_loss_forward.25} parent=1 // pred_region
      _
    $region82: #{model_and_loss_forward.25} parent=1 // pred_fallthru
      _
    %v89 = vld [vmem:[%s2] sm:$0x1]
    %v90 = vmul.f32 %v89, 0.03125
    %v91 = vld [vmem:[%s3] sm:$0x1]
    %v92 = vmul.f32 %v91, 0.03125
    %v93 = vmul.f32 %v90, %v90
    %v94 = vsub.f32 %v92, %v93
    %v95 = vmax.f32 %v94, 0.0
    %v96 = vadd.f32 %v95, 1e-05
    %v97 = vrsqrt.pop %v96
    %v98 = vld [vmem:[%s4] sm:$0x1]
    %v99 = vmul.f32 %v97, %v98
    %v100 = vld [vmem:[%s5] sm:$0x1]
    %v101 = vmul.f32 %v90, %v99
    %v102 = vsub.f32 %v100, %v101
    %v103 = vld [vmem:[%s0] sm:$0xf]
    %v104 = vld [vmem:[%s0 + $0x4] sm:$0xf]
    %v105 = vld [vmem:[%s0 + $0x8] sm:$0xf]
    %v106 = vld [vmem:[%s0 + $0xc] sm:$0xf]
    %v107 = vunpack.c.l.bf16 %v103
    %v108 = vunpack.c.l.bf16 %v104
    %v109 = vunpack.c.l.bf16 %v105
    %v110 = vunpack.c.l.bf16 %v106
    %v112 = vlaneseq
    %v113 = vshrl.u32 %v112, 7
    %v114 = vsub.s32 0, %v113
    %v115 = vrot.slane %v99, %v114
    %v117 = vmul.f32 %v107, %v115
    %v118 = vmul.f32 %v108, %v115
    %v119 = vmul.f32 %v109, %v115
    %v120 = vmul.f32 %v110, %v115
    %v122 = vlaneseq
    %v123 = vshrl.u32 %v122, 7
    %v124 = vsub.s32 0, %v123
    %v125 = vrot.slane %v102, %v124
    %v127 = vadd.f32 %v117, %v125
    %v128 = vadd.f32 %v118, %v125
    %v129 = vadd.f32 %v119, %v125
    %v130 = vadd.f32 %v120, %v125
    %v131 = vld [vmem:[%s6] sm:$0x1]
    %v132 = vmul.f32 %v131, 0.03125
    %v133 = vld [vmem:[%s7] sm:$0x1]
    %v134 = vmul.f32 %v133, 0.03125
    %v135 = vmul.f32 %v132, %v132
    %v136 = vsub.f32 %v134, %v135
    %v137 = vmax.f32 %v136, 0.0
    %v138 = vadd.f32 %v137, 1e-05
    %v139 = vrsqrt.pop %v138
    %v140 = vld [vmem:[%s8] sm:$0x1]
    %v141 = vmul.f32 %v139, %v140
    %v142 = vld [vmem:[%s9] sm:$0x1]
    %v143 = vmul.f32 %v132, %v141
    %v144 = vsub.f32 %v142, %v143
    %v145 = vld [vmem:[#allocation2] sm:$0xf]
    %v146 = vld [vmem:[#allocation2 + $0x4] sm:$0xf]
    %v147 = vld [vmem:[#allocation2 + $0x8] sm:$0xf]
    %v148 = vld [vmem:[#allocation2 + $0xc] sm:$0xf]
    %v149 = vunpack.c.l.bf16 %v145
    %v150 = vunpack.c.l.bf16 %v146
    %v151 = vunpack.c.l.bf16 %v147
    %v152 = vunpack.c.l.bf16 %v148
    %v154 = vlaneseq
    %v155 = vshrl.u32 %v154, 7
    %v156 = vsub.s32 0, %v155
    %v157 = vrot.slane %v141, %v156
    %v159 = vmul.f32 %v149, %v157
    %v160 = vmul.f32 %v150, %v157
    %v161 = vmul.f32 %v151, %v157
    %v162 = vmul.f32 %v152, %v157
    %v164 = vlaneseq
    %v165 = vshrl.u32 %v164, 7
    %v166 = vsub.s32 0, %v165
    %v167 = vrot.slane %v144, %v166
    %v169 = vadd.f32 %v159, %v167
    %v170 = vadd.f32 %v160, %v167
    %v171 = vadd.f32 %v161, %v167
    %v172 = vadd.f32 %v162, %v167
    %v173 = vadd.f32 %v127, %v169
    %v174 = vadd.f32 %v128, %v170
    %v175 = vadd.f32 %v129, %v171
    %v176 = vadd.f32 %v130, %v172
    %v177 = vmax.f32 %v173, 0.0
    %v178 = vmax.f32 %v174, 0.0
    %v179 = vmax.f32 %v175, 0.0
    %v180 = vmax.f32 %v176, 0.0
    %v181 = vpack.c.bf16 %v178, %v177
    %v182 = vpack.c.bf16 %v180, %v179
    %v185 = vunpack.c.l.b16 %v181
    %v186 = vunpack.c.h.b16 %v181
    %v187 = vunpack.c.l.b16 %v182
    %v188 = vunpack.c.h.b16 %v182
    %v189 = vpack.c.b16 %v185, %v185
    %v190 = vpack.c.b16 %v186, %v186
    %v191 = vpack.c.b16 %v187, %v187
    %v192 = vpack.c.b16 %v188, %v188
    %197 = vst [vmem:[%s10] sm:$0xf] %v189
    %198 = vst [vmem:[%s10 + $0x4] sm:$0xf] %v190
    %199 = vst [vmem:[%s10 + $0x8] sm:$0xf] %v191
    %200 = vst [vmem:[%s10 + $0xc] sm:$0xf] %v192
    // Predicated region
    $region83: #{model_and_loss_forward.25} parent=1 // pred_check
      _
    $region84: #{model_and_loss_forward.25} parent=1 // pred_check_branch
      %202 = sbr.rel (0) target = $region86
    $region85: #{model_and_loss_forward.25} parent=1 // pred_region
      _
    $region86: #{model_and_loss_forward.25} parent=1 // pred_fallthru
      _
    // Predicated region
    $region87: #{model_and_loss_forward.25} parent=1 // pred_check
      _
    $region88: #{model_and_loss_forward.25} parent=1 // pred_check_branch
      %204 = sbr.rel (0) target = $region90
    $region89: #{model_and_loss_forward.25} parent=1 // pred_region
      _
    $region90: #{model_and_loss_forward.25} parent=1 // pred_fallthru
      _

// kernel: model_and_loss_forward.30
$region0: #{model_and_loss_forward.30}
  #allocation0 [shape = 'u32[]', space=smem, size = 0x4, offset = 0x4, fixed_abs, tag = 'smem constant byte address 0x4 - core index']
  #allocation1 [shape = 'u32[144,128]{1,0:T(1,128)}', space=vmem, size = 0x12000, scoped, tag = 'internal scratch']
  %s0 = inlined_call_operand.vmem [shape: bf16[8,128], index: 0, kind: input, shape index: {}]
  %s1 = inlined_call_operand.vmem [shape: f32[1,128], index: 1, kind: input, shape index: {}]
  %s2 = inlined_call_operand.vmem [shape: f32[1,128], index: 2, kind: input, shape index: {}]
  %s3 = inlined_call_operand.vmem [shape: f32[1,128], index: 3, kind: input, shape index: {}]
  %s4 = inlined_call_operand.vmem [shape: f32[1,128], index: 4, kind: input, shape index: {}]
  %s5 = inlined_call_operand.vmem [shape: bf16[8,128], index: 5, kind: output, shape index: {}]
  %s6 = sld [smem:[#allocation0]]
  $region30: #{model_and_loss_forward.30} parent=0
    _
  %s8 = ssub.s32 1, %s6
  %s9 = scalar_select 0, %s8, %s6
  // Predicated region
  $region2: #{model_and_loss_forward.30} parent=0 // pred_check
    _
  $region3: #{model_and_loss_forward.30} parent=0 // pred_check_branch
    %11 = sbr.rel (0) target = $region5
  $region4: #{model_and_loss_forward.30} parent=0 // pred_region
    _
  $region5: #{model_and_loss_forward.30} parent=0 // pred_fallthru
    _
  // Predicated region
  $region6: #{model_and_loss_forward.30} parent=0 // pred_check
    _
  $region7: #{model_and_loss_forward.30} parent=0 // pred_check_branch
    %13 = sbr.rel (0) target = $region9
  $region8: #{model_and_loss_forward.30} parent=0 // pred_region
    _
  $region9: #{model_and_loss_forward.30} parent=0 // pred_fallthru
    _
  // Predicated region
  $region10: #{model_and_loss_forward.30} parent=0 // pred_check
    _
  $region11: #{model_and_loss_forward.30} parent=0 // pred_check_branch
    %15 = sbr.rel (0) target = $region13
  $region12: #{model_and_loss_forward.30} parent=0 // pred_region
    _
  $region13: #{model_and_loss_forward.30} parent=0 // pred_fallthru
    _
  // Predicated region
  $region14: #{model_and_loss_forward.30} parent=0 // pred_check
    _
  $region15: #{model_and_loss_forward.30} parent=0 // pred_check_branch
    %17 = sbr.rel (0) target = $region17
  $region16: #{model_and_loss_forward.30} parent=0 // pred_region
    _
  $region17: #{model_and_loss_forward.30} parent=0 // pred_fallthru
    _
  // Predicated region
  $region18: #{model_and_loss_forward.30} parent=0 // pred_check
    _
  $region19: #{model_and_loss_forward.30} parent=0 // pred_check_branch
    %19 = sbr.rel (0) target = $region21
  $region20: #{model_and_loss_forward.30} parent=0 // pred_region
    _
  $region21: #{model_and_loss_forward.30} parent=0 // pred_fallthru
    _
  %v20 = vld [vmem:[%s1] sm:$0x1]
  %v21 = vmul.f32 %v20, 0.125
  %v22 = vld [vmem:[%s2] sm:$0x1]
  %v23 = vmul.f32 %v22, 0.125
  %v24 = vmul.f32 %v21, %v21
  %v25 = vsub.f32 %v23, %v24
  %v26 = vmax.f32 %v25, 0.0
  %v27 = vadd.f32 %v26, 1e-05
  %v28 = vrsqrt.pop %v27
  %v29 = vld [vmem:[%s3] sm:$0x1]
  %v30 = vmul.f32 %v28, %v29
  %v31 = vld [vmem:[%s4] sm:$0x1]
  %v32 = vmul.f32 %v21, %v30
  %v33 = vsub.f32 %v31, %v32
  %v34 = vld [vmem:[%s0] sm:$0xf]
  %v35 = vunpack.c.l.bf16 %v34
  %v37 = vlaneseq
  %v38 = vshrl.u32 %v37, 7
  %v39 = vsub.s32 0, %v38
  %v40 = vrot.slane %v30, %v39
  %v42 = vmul.f32 %v35, %v40
  %v44 = vlaneseq
  %v45 = vshrl.u32 %v44, 7
  %v46 = vsub.s32 0, %v45
  %v47 = vrot.slane %v33, %v46
  %v49 = vadd.f32 %v42, %v47
  %v50 = vmax.f32 %v49, 0.0
  %v51 = vpack.c.bf16 %v50, %v50
  %52 = vst [vmem:[%s5] sm:$0xf] %v51
  // Predicated region
  $region22: #{model_and_loss_forward.30} parent=0 // pred_check
    _
  $region23: #{model_and_loss_forward.30} parent=0 // pred_check_branch
    %54 = sbr.rel (0) target = $region25
  $region24: #{model_and_loss_forward.30} parent=0 // pred_region
    _
  $region25: #{model_and_loss_forward.30} parent=0 // pred_fallthru
    _
  // Predicated region
  $region26: #{model_and_loss_forward.30} parent=0 // pred_check
    _
  $region27: #{model_and_loss_forward.30} parent=0 // pred_check_branch
    %56 = sbr.rel (0) target = $region29
  $region28: #{model_and_loss_forward.30} parent=0 // pred_region
    _
  $region29: #{model_and_loss_forward.30} parent=0 // pred_fallthru
    _

// kernel: model_and_loss_forward.31
$region0: #{model_and_loss_forward.31}
  #allocation0 [shape = 'u32[]', space=smem, size = 0x4, offset = 0x4, fixed_abs, tag = 'smem constant byte address 0x4 - core index']
  #allocation1 [shape = 'u32[144,128]{1,0:T(1,128)}', space=vmem, size = 0x12000, scoped, tag = 'internal scratch']
  %s0 = inlined_call_operand.vmem [shape: bf16[8,128], index: 0, kind: input, shape index: {}]
  %s1 = inlined_call_operand.vmem [shape: bf16[128,128], index: 1, kind: input, shape index: {}]
  %s2 = inlined_call_operand.vmem [shape: bf16[8,128], index: 2, kind: output, shape index: {0}]
  %s3 = inlined_call_operand.vmem [shape: f32[1,1,128], index: 3, kind: output, shape index: {1}]
  %s4 = inlined_call_operand.vmem [shape: f32[1,1,128], index: 4, kind: output, shape index: {2}]
  %5 = xla_tuple %s2, %s3, %s4
  %s6 = sld [smem:[#allocation0]]
  $region34: #{model_and_loss_forward.31} parent=0
    _
  %s8 = ssub.s32 1, %s6
  %s9 = scalar_select 0, %s8, %s6
  // Predicated region
  $region2: #{model_and_loss_forward.31} parent=0 // pred_check
    _
  $region3: #{model_and_loss_forward.31} parent=0 // pred_check_branch
    %11 = sbr.rel (0) target = $region5
  $region4: #{model_and_loss_forward.31} parent=0 // pred_region
    _
  $region5: #{model_and_loss_forward.31} parent=0 // pred_fallthru
    _
  // Predicated region
  $region6: #{model_and_loss_forward.31} parent=0 // pred_check
    _
  $region7: #{model_and_loss_forward.31} parent=0 // pred_check_branch
    %13 = sbr.rel (0) target = $region9
  $region8: #{model_and_loss_forward.31} parent=0 // pred_region
    _
  $region9: #{model_and_loss_forward.31} parent=0 // pred_fallthru
    _
  %v15 = vld [vmem:[%s0] sm:$0xf]
  %v16 = vld [vmem:[%s1] sm:$0xf]
  %v17 = vld [vmem:[%s1 + $0x4] sm:$0xf]
  %v18 = vld [vmem:[%s1 + $0x8] sm:$0xf]
  %v19 = vld [vmem:[%s1 + $0xc] sm:$0xf]
  %v20 = vld [vmem:[%s1 + $0x10] sm:$0xf]
  %v21 = vld [vmem:[%s1 + $0x14] sm:$0xf]
  %v22 = vld [vmem:[%s1 + $0x18] sm:$0xf]
  %v23 = vld [vmem:[%s1 + $0x1c] sm:$0xf]
  %v24 = vld [vmem:[%s1 + $0x20] sm:$0xf]
  %v25 = vld [vmem:[%s1 + $0x24] sm:$0xf]
  %v26 = vld [vmem:[%s1 + $0x28] sm:$0xf]
  %v27 = vld [vmem:[%s1 + $0x2c] sm:$0xf]
  %v28 = vld [vmem:[%s1 + $0x30] sm:$0xf]
  %v29 = vld [vmem:[%s1 + $0x34] sm:$0xf]
  %v30 = vld [vmem:[%s1 + $0x38] sm:$0xf]
  %v31 = vld [vmem:[%s1 + $0x3c] sm:$0xf]
  %v48 = vunpack.c.l.b16 %v16
  %v49 = vunpack.c.l.b16 %v17
  %v50 = vunpack.c.l.b16 %v18
  %v51 = vunpack.c.l.b16 %v19
  %v52 = vunpack.c.l.b16 %v20
  %v53 = vunpack.c.l.b16 %v21
  %v54 = vunpack.c.l.b16 %v22
  %v55 = vunpack.c.l.b16 %v23
  %v56 = vunpack.c.l.b16 %v24
  %v57 = vunpack.c.l.b16 %v25
  %v58 = vunpack.c.l.b16 %v26
  %v59 = vunpack.c.l.b16 %v27
  %v60 = vunpack.c.l.b16 %v28
  %v61 = vunpack.c.l.b16 %v29
  %v62 = vunpack.c.l.b16 %v30
  %v63 = vunpack.c.l.b16 %v31
  %v64 = vpack.c.b16 %v49, %v48
  %v65 = vpack.c.b16 %v51, %v50
  %v66 = vpack.c.b16 %v53, %v52
  %v67 = vpack.c.b16 %v55, %v54
  %v68 = vpack.c.b16 %v57, %v56
  %v69 = vpack.c.b16 %v59, %v58
  %v70 = vpack.c.b16 %v61, %v60
  %v71 = vpack.c.b16 %v63, %v62
  %80 = vmatprep.subr.bf16.mxu0 0
  %81 = vmatpush1.bf16.msra.mxu0 %v64
  %82 = vmatprep.subr.bf16.mxu0 0
  %83 = vmatpush1.bf16.msra.mxu0 %v65
  %84 = vmatprep.subr.bf16.mxu0 0
  %85 = vmatpush1.bf16.msra.mxu0 %v66
  %86 = vmatprep.subr.bf16.mxu0 0
  %87 = vmatpush1.bf16.msra.mxu0 %v67
  %88 = vmatprep.subr.bf16.mxu0 0
  %89 = vmatpush1.bf16.msra.mxu0 %v68
  %90 = vmatprep.subr.bf16.mxu0 0
  %91 = vmatpush1.bf16.msra.mxu0 %v69
  %92 = vmatprep.subr.bf16.mxu0 0
  %93 = vmatpush1.bf16.msra.mxu0 %v70
  %94 = vmatprep.subr.bf16.mxu0 0
  %95 = vmatpush1.bf16.msra.mxu0 %v71
  %96 = vmatprep.subr.bf16.mxu0 0
  %97 = vmatpush1.bf16.msra.mxu0 0
  %98 = vmatprep.subr.bf16.mxu0 0
  %99 = vmatpush1.bf16.msra.mxu0 0
  %100 = vmatprep.subr.bf16.mxu0 0
  %101 = vmatpush1.bf16.msra.mxu0 0
  %102 = vmatprep.subr.bf16.mxu0 0
  %103 = vmatpush1.bf16.msra.mxu0 0
  %104 = vmatprep.subr.bf16.mxu0 0
  %105 = vmatpush1.bf16.msra.mxu0 0
  %106 = vmatprep.subr.bf16.mxu0 0
  %107 = vmatpush1.bf16.msra.mxu0 0
  %108 = vmatprep.subr.bf16.mxu0 0
  %109 = vmatpush1.bf16.msra.mxu0 0
  %110 = vmatprep.subr.bf16.mxu0 0
  %111 = vmatpush1.bf16.msra.mxu0 0
  %112 = vmatprep.mubr.bf16.mxu0 0
  %113 = vmatmul.mubr.bf16.gmra.mrb[0].mxu0 %v15
  %v114 = vpop.f32.mrb[0].mxu0
  %v115 = vadd.f32 0.0, %v114
  %v116 = vpop.f32.mrb[0].mxu0
  %v117 = vpop.f32.mrb[0].mxu0
  %v118 = vpop.f32.mrb[0].mxu0
  %119 = vdwg.mxu0
  %v120 = vpack.c.bf16 %v115, %v115
  %121 = vst [vmem:[%s2] sm:$0xf] %v120
  %v122 = vrot.slane %v115, 4
  %v123 = vadd.f32 %v115, %v122
  %v124 = vrot.slane %v123, 2
  %v125 = vadd.f32 %v123, %v124
  %v126 = vrot.slane %v125, 1
  %v127 = vadd.f32 %v125, %v126
  %128 = vst [vmem:[%s3] sm:$0x1] %v127
  %v129 = vmul.f32 %v115, %v115
  %v130 = vrot.slane %v129, 4
  %v131 = vadd.f32 %v129, %v130
  %v132 = vrot.slane %v131, 2
  %v133 = vadd.f32 %v131, %v132
  %v134 = vrot.slane %v133, 1
  %v135 = vadd.f32 %v133, %v134
  %136 = vst [vmem:[%s4] sm:$0x1] %v135
  // Predicated region
  $region10: #{model_and_loss_forward.31} parent=0 // pred_check
    _
  $region11: #{model_and_loss_forward.31} parent=0 // pred_check_branch
    %138 = sbr.rel (0) target = $region13
  $region12: #{model_and_loss_forward.31} parent=0 // pred_region
    _
  $region13: #{model_and_loss_forward.31} parent=0 // pred_fallthru
    _
  // Predicated region
  $region14: #{model_and_loss_forward.31} parent=0 // pred_check
    _
  $region15: #{model_and_loss_forward.31} parent=0 // pred_check_branch
    %140 = sbr.rel (0) target = $region17
  $region16: #{model_and_loss_forward.31} parent=0 // pred_region
    _
  $region17: #{model_and_loss_forward.31} parent=0 // pred_fallthru
    _
  // Predicated region
  $region18: #{model_and_loss_forward.31} parent=0 // pred_check
    _
  $region19: #{model_and_loss_forward.31} parent=0 // pred_check_branch
    %142 = sbr.rel (0) target = $region21
  $region20: #{model_and_loss_forward.31} parent=0 // pred_region
    _
  $region21: #{model_and_loss_forward.31} parent=0 // pred_fallthru
    _
  // Predicated region
  $region22: #{model_and_loss_forward.31} parent=0 // pred_check
    _
  $region23: #{model_and_loss_forward.31} parent=0 // pred_check_branch
    %144 = sbr.rel (0) target = $region25
  $region24: #{model_and_loss_forward.31} parent=0 // pred_region
    _
  $region25: #{model_and_loss_forward.31} parent=0 // pred_fallthru
    _
  // Predicated region
  $region26: #{model_and_loss_forward.31} parent=0 // pred_check
    _
  $region27: #{model_and_loss_forward.31} parent=0 // pred_check_branch
    %146 = sbr.rel (0) target = $region29
  $region28: #{model_and_loss_forward.31} parent=0 // pred_region
    _
  $region29: #{model_and_loss_forward.31} parent=0 // pred_fallthru
    _
  // Predicated region
  $region30: #{model_and_loss_forward.31} parent=0 // pred_check
    _
  $region31: #{model_and_loss_forward.31} parent=0 // pred_check_branch
    %148 = sbr.rel (0) target = $region33
  $region32: #{model_and_loss_forward.31} parent=0 // pred_region
    _
  $region33: #{model_and_loss_forward.31} parent=0 // pred_fallthru
    _

// kernel: model_and_loss_forward.29
$region0: #{model_and_loss_forward.29}
  #allocation0 [shape = 'u32[]', space=smem, size = 0x4, offset = 0x4, fixed_abs, tag = 'smem constant byte address 0x4 - core index']
  #allocation1 [shape = 'u32[144,128]{1,0:T(1,128)}', space=vmem, size = 0x12000, scoped, tag = 'internal scratch']
  %s0 = inlined_call_operand.vmem [shape: bf16[8,256], index: 0, kind: input, shape index: {}]
  %s1 = inlined_call_operand.vmem [shape: bf16[256,128], index: 1, kind: input, shape index: {}]
  %s2 = inlined_call_operand.vmem [shape: bf16[8,128], index: 2, kind: output, shape index: {0}]
  %s3 = inlined_call_operand.vmem [shape: f32[1,1,128], index: 3, kind: output, shape index: {1}]
  %s4 = inlined_call_operand.vmem [shape: f32[1,1,128], index: 4, kind: output, shape index: {2}]
  %5 = xla_tuple %s2, %s3, %s4
  %s6 = sld [smem:[#allocation0]]
  $region34: #{model_and_loss_forward.29} parent=0
    _
  %s8 = ssub.s32 1, %s6
  %s9 = scalar_select 0, %s8, %s6
  // Predicated region
  $region2: #{model_and_loss_forward.29} parent=0 // pred_check
    _
  $region3: #{model_and_loss_forward.29} parent=0 // pred_check_branch
    %11 = sbr.rel (0) target = $region5
  $region4: #{model_and_loss_forward.29} parent=0 // pred_region
    _
  $region5: #{model_and_loss_forward.29} parent=0 // pred_fallthru
    _
  // Predicated region
  $region6: #{model_and_loss_forward.29} parent=0 // pred_check
    _
  $region7: #{model_and_loss_forward.29} parent=0 // pred_check_branch
    %13 = sbr.rel (0) target = $region9
  $region8: #{model_and_loss_forward.29} parent=0 // pred_region
    _
  $region9: #{model_and_loss_forward.29} parent=0 // pred_fallthru
    _
  %v15 = vld [vmem:[%s0] sm:$0xff]
  %v16 = vld [vmem:[%s1] sm:$0xf]
  %v17 = vld [vmem:[%s1 + $0x4] sm:$0xf]
  %v18 = vld [vmem:[%s1 + $0x8] sm:$0xf]
  %v19 = vld [vmem:[%s1 + $0xc] sm:$0xf]
  %v20 = vld [vmem:[%s1 + $0x10] sm:$0xf]
  %v21 = vld [vmem:[%s1 + $0x14] sm:$0xf]
  %v22 = vld [vmem:[%s1 + $0x18] sm:$0xf]
  %v23 = vld [vmem:[%s1 + $0x1c] sm:$0xf]
  %v24 = vld [vmem:[%s1 + $0x20] sm:$0xf]
  %v25 = vld [vmem:[%s1 + $0x24] sm:$0xf]
  %v26 = vld [vmem:[%s1 + $0x28] sm:$0xf]
  %v27 = vld [vmem:[%s1 + $0x2c] sm:$0xf]
  %v28 = vld [vmem:[%s1 + $0x30] sm:$0xf]
  %v29 = vld [vmem:[%s1 + $0x34] sm:$0xf]
  %v30 = vld [vmem:[%s1 + $0x38] sm:$0xf]
  %v31 = vld [vmem:[%s1 + $0x3c] sm:$0xf]
  %v32 = vld [vmem:[%s1 + $0x40] sm:$0xf]
  %v33 = vld [vmem:[%s1 + $0x44] sm:$0xf]
  %v34 = vld [vmem:[%s1 + $0x48] sm:$0xf]
  %v35 = vld [vmem:[%s1 + $0x4c] sm:$0xf]
  %v36 = vld [vmem:[%s1 + $0x50] sm:$0xf]
  %v37 = vld [vmem:[%s1 + $0x54] sm:$0xf]
  %v38 = vld [vmem:[%s1 + $0x58] sm:$0xf]
  %v39 = vld [vmem:[%s1 + $0x5c] sm:$0xf]
  %v40 = vld [vmem:[%s1 + $0x60] sm:$0xf]
  %v41 = vld [vmem:[%s1 + $0x64] sm:$0xf]
  %v42 = vld [vmem:[%s1 + $0x68] sm:$0xf]
  %v43 = vld [vmem:[%s1 + $0x6c] sm:$0xf]
  %v44 = vld [vmem:[%s1 + $0x70] sm:$0xf]
  %v45 = vld [vmem:[%s1 + $0x74] sm:$0xf]
  %v46 = vld [vmem:[%s1 + $0x78] sm:$0xf]
  %v47 = vld [vmem:[%s1 + $0x7c] sm:$0xf]
  %v49 = vunpack.c.l.b16 %v15
  %v50 = vunpack.c.h.b16 %v15
  %v51 = vpack.c.b16 %v49, %v49
  %v52 = vpack.c.b16 %v50, %v50
  %v87 = vunpack.c.l.b16 %v16
  %v88 = vunpack.c.l.b16 %v17
  %v89 = vunpack.c.l.b16 %v18
  %v90 = vunpack.c.l.b16 %v19
  %v91 = vunpack.c.l.b16 %v20
  %v92 = vunpack.c.l.b16 %v21
  %v93 = vunpack.c.l.b16 %v22
  %v94 = vunpack.c.l.b16 %v23
  %v95 = vunpack.c.l.b16 %v24
  %v96 = vunpack.c.l.b16 %v25
  %v97 = vunpack.c.l.b16 %v26
  %v98 = vunpack.c.l.b16 %v27
  %v99 = vunpack.c.l.b16 %v28
  %v100 = vunpack.c.l.b16 %v29
  %v101 = vunpack.c.l.b16 %v30
  %v102 = vunpack.c.l.b16 %v31
  %v103 = vunpack.c.l.b16 %v32
  %v104 = vunpack.c.l.b16 %v33
  %v105 = vunpack.c.l.b16 %v34
  %v106 = vunpack.c.l.b16 %v35
  %v107 = vunpack.c.l.b16 %v36
  %v108 = vunpack.c.l.b16 %v37
  %v109 = vunpack.c.l.b16 %v38
  %v110 = vunpack.c.l.b16 %v39
  %v111 = vunpack.c.l.b16 %v40
  %v112 = vunpack.c.l.b16 %v41
  %v113 = vunpack.c.l.b16 %v42
  %v114 = vunpack.c.l.b16 %v43
  %v115 = vunpack.c.l.b16 %v44
  %v116 = vunpack.c.l.b16 %v45
  %v117 = vunpack.c.l.b16 %v46
  %v118 = vunpack.c.l.b16 %v47
  %v119 = vpack.c.b16 %v88, %v87
  %v120 = vpack.c.b16 %v90, %v89
  %v121 = vpack.c.b16 %v92, %v91
  %v122 = vpack.c.b16 %v94, %v93
  %v123 = vpack.c.b16 %v96, %v95
  %v124 = vpack.c.b16 %v98, %v97
  %v125 = vpack.c.b16 %v100, %v99
  %v126 = vpack.c.b16 %v102, %v101
  %v127 = vpack.c.b16 %v104, %v103
  %v128 = vpack.c.b16 %v106, %v105
  %v129 = vpack.c.b16 %v108, %v107
  %v130 = vpack.c.b16 %v110, %v109
  %v131 = vpack.c.b16 %v112, %v111
  %v132 = vpack.c.b16 %v114, %v113
  %v133 = vpack.c.b16 %v116, %v115
  %v134 = vpack.c.b16 %v118, %v117
  %151 = vmatprep.subr.bf16.mxu0 0
  %152 = vmatpush1.bf16.msra.mxu0 %v119
  %153 = vmatprep.subr.bf16.mxu0 0
  %154 = vmatpush1.bf16.msra.mxu0 %v120
  %155 = vmatprep.subr.bf16.mxu0 0
  %156 = vmatpush1.bf16.msra.mxu0 %v121
  %157 = vmatprep.subr.bf16.mxu0 0
  %158 = vmatpush1.bf16.msra.mxu0 %v122
  %159 = vmatprep.subr.bf16.mxu0 0
  %160 = vmatpush1.bf16.msra.mxu0 %v123
  %161 = vmatprep.subr.bf16.mxu0 0
  %162 = vmatpush1.bf16.msra.mxu0 %v124
  %163 = vmatprep.subr.bf16.mxu0 0
  %164 = vmatpush1.bf16.msra.mxu0 %v125
  %165 = vmatprep.subr.bf16.mxu0 0
  %166 = vmatpush1.bf16.msra.mxu0 %v126
  %167 = vmatprep.subr.bf16.mxu0 0
  %168 = vmatpush1.bf16.msra.mxu0 %v127
  %169 = vmatprep.subr.bf16.mxu0 0
  %170 = vmatpush1.bf16.msra.mxu0 %v128
  %171 = vmatprep.subr.bf16.mxu0 0
  %172 = vmatpush1.bf16.msra.mxu0 %v129
  %173 = vmatprep.subr.bf16.mxu0 0
  %174 = vmatpush1.bf16.msra.mxu0 %v130
  %175 = vmatprep.subr.bf16.mxu0 0
  %176 = vmatpush1.bf16.msra.mxu0 %v131
  %177 = vmatprep.subr.bf16.mxu0 0
  %178 = vmatpush1.bf16.msra.mxu0 %v132
  %179 = vmatprep.subr.bf16.mxu0 0
  %180 = vmatpush1.bf16.msra.mxu0 %v133
  %181 = vmatprep.subr.bf16.mxu0 0
  %182 = vmatpush1.bf16.msra.mxu0 %v134
  %183 = vmatprep.mubr.bf16.mxu0 %v52
  %184 = vmatmul.mubr.bf16.gmra.mrb[0].mxu0 %v51
  %v185 = vpop.f32.mrb[0].mxu0
  %v186 = vadd.f32 0.0, %v185
  %v187 = vpop.f32.mrb[0].mxu0
  %v188 = vpop.f32.mrb[0].mxu0
  %v189 = vpop.f32.mrb[0].mxu0
  %190 = vdwg.mxu0
  %v191 = vpack.c.bf16 %v186, %v186
  %192 = vst [vmem:[%s2] sm:$0xf] %v191
  %v193 = vrot.slane %v186, 4
  %v194 = vadd.f32 %v186, %v193
  %v195 = vrot.slane %v194, 2
  %v196 = vadd.f32 %v194, %v195
  %v197 = vrot.slane %v196, 1
  %v198 = vadd.f32 %v196, %v197
  %199 = vst [vmem:[%s3] sm:$0x1] %v198
  %v200 = vmul.f32 %v186, %v186
  %v201 = vrot.slane %v200, 4
  %v202 = vadd.f32 %v200, %v201
  %v203 = vrot.slane %v202, 2
  %v204 = vadd.f32 %v202, %v203
  %v205 = vrot.slane %v204, 1
  %v206 = vadd.f32 %v204, %v205
  %207 = vst [vmem:[%s4] sm:$0x1] %v206
  // Predicated region
  $region10: #{model_and_loss_forward.29} parent=0 // pred_check
    _
  $region11: #{model_and_loss_forward.29} parent=0 // pred_check_branch
    %209 = sbr.rel (0) target = $region13
  $region12: #{model_and_loss_forward.29} parent=0 // pred_region
    _
  $region13: #{model_and_loss_forward.29} parent=0 // pred_fallthru
    _
  // Predicated region
  $region14: #{model_and_loss_forward.29} parent=0 // pred_check
    _
  $region15: #{model_and_loss_forward.29} parent=0 // pred_check_branch
    %211 = sbr.rel (0) target = $region17
  $region16: #{model_and_loss_forward.29} parent=0 // pred_region
    _
  $region17: #{model_and_loss_forward.29} parent=0 // pred_fallthru
    _
  // Predicated region
  $region18: #{model_and_loss_forward.29} parent=0 // pred_check
    _
  $region19: #{model_and_loss_forward.29} parent=0 // pred_check_branch
    %213 = sbr.rel (0) target = $region21
  $region20: #{model_and_loss_forward.29} parent=0 // pred_region
    _
  $region21: #{model_and_loss_forward.29} parent=0 // pred_fallthru
    _
  // Predicated region
  $region22: #{model_and_loss_forward.29} parent=0 // pred_check
    _
  $region23: #{model_and_loss_forward.29} parent=0 // pred_check_branch
    %215 = sbr.rel (0) target = $region25
  $region24: #{model_and_loss_forward.29} parent=0 // pred_region
    _
  $region25: #{model_and_loss_forward.29} parent=0 // pred_fallthru
    _
  // Predicated region
  $region26: #{model_and_loss_forward.29} parent=0 // pred_check
    _
  $region27: #{model_and_loss_forward.29} parent=0 // pred_check_branch
    %217 = sbr.rel (0) target = $region29
  $region28: #{model_and_loss_forward.29} parent=0 // pred_region
    _
  $region29: #{model_and_loss_forward.29} parent=0 // pred_fallthru
    _
  // Predicated region
  $region30: #{model_and_loss_forward.29} parent=0 // pred_check
    _
  $region31: #{model_and_loss_forward.29} parent=0 // pred_check_branch
    %219 = sbr.rel (0) target = $region33
  $region32: #{model_and_loss_forward.29} parent=0 // pred_region
    _
  $region33: #{model_and_loss_forward.29} parent=0 // pred_fallthru
    _

// kernel: model_and_loss_forward.32
$region0: #{model_and_loss_forward.32}
  #allocation0 [shape = 'u32[]', space=smem, size = 0x4, offset = 0x4, fixed_abs, tag = 'smem constant byte address 0x4 - core index']
  #allocation1 [shape = 'u32[144,128]{1,0:T(1,128)}', space=vmem, size = 0x12000, scoped, tag = 'internal scratch']
  %s0 = inlined_call_operand.vmem [shape: bf16[8,128], index: 0, kind: input, shape index: {}]
  %s1 = inlined_call_operand.vmem [shape: bf16[8,128], index: 1, kind: input, shape index: {}]
  %s2 = inlined_call_operand.vmem [shape: f32[1,128], index: 2, kind: input, shape index: {}]
  %s3 = inlined_call_operand.vmem [shape: f32[1,128], index: 3, kind: input, shape index: {}]
  %s4 = inlined_call_operand.vmem [shape: f32[1,128], index: 4, kind: input, shape index: {}]
  %s5 = inlined_call_operand.vmem [shape: f32[1,128], index: 5, kind: input, shape index: {}]
  %s6 = inlined_call_operand.vmem [shape: f32[1,128], index: 6, kind: input, shape index: {}]
  %s7 = inlined_call_operand.vmem [shape: f32[1,128], index: 7, kind: input, shape index: {}]
  %s8 = inlined_call_operand.vmem [shape: f32[1,128], index: 8, kind: input, shape index: {}]
  %s9 = inlined_call_operand.vmem [shape: f32[1,128], index: 9, kind: input, shape index: {}]
  %s10 = inlined_call_operand.vmem [shape: bf16[8,128], index: 10, kind: output, shape index: {}]
  %s11 = sld [smem:[#allocation0]]
  $region50: #{model_and_loss_forward.32} parent=0
    _
  %s13 = ssub.s32 1, %s11
  %s14 = scalar_select 0, %s13, %s11
  // Predicated region
  $region2: #{model_and_loss_forward.32} parent=0 // pred_check
    _
  $region3: #{model_and_loss_forward.32} parent=0 // pred_check_branch
    %16 = sbr.rel (0) target = $region5
  $region4: #{model_and_loss_forward.32} parent=0 // pred_region
    _
  $region5: #{model_and_loss_forward.32} parent=0 // pred_fallthru
    _
  // Predicated region
  $region6: #{model_and_loss_forward.32} parent=0 // pred_check
    _
  $region7: #{model_and_loss_forward.32} parent=0 // pred_check_branch
    %18 = sbr.rel (0) target = $region9
  $region8: #{model_and_loss_forward.32} parent=0 // pred_region
    _
  $region9: #{model_and_loss_forward.32} parent=0 // pred_fallthru
    _
  // Predicated region
  $region10: #{model_and_loss_forward.32} parent=0 // pred_check
    _
  $region11: #{model_and_loss_forward.32} parent=0 // pred_check_branch
    %20 = sbr.rel (0) target = $region13
  $region12: #{model_and_loss_forward.32} parent=0 // pred_region
    _
  $region13: #{model_and_loss_forward.32} parent=0 // pred_fallthru
    _
  // Predicated region
  $region14: #{model_and_loss_forward.32} parent=0 // pred_check
    _
  $region15: #{model_and_loss_forward.32} parent=0 // pred_check_branch
    %22 = sbr.rel (0) target = $region17
  $region16: #{model_and_loss_forward.32} parent=0 // pred_region
    _
  $region17: #{model_and_loss_forward.32} parent=0 // pred_fallthru
    _
  // Predicated region
  $region18: #{model_and_loss_forward.32} parent=0 // pred_check
    _
  $region19: #{model_and_loss_forward.32} parent=0 // pred_check_branch
    %24 = sbr.rel (0) target = $region21
  $region20: #{model_and_loss_forward.32} parent=0 // pred_region
    _
  $region21: #{model_and_loss_forward.32} parent=0 // pred_fallthru
    _
  // Predicated region
  $region22: #{model_and_loss_forward.32} parent=0 // pred_check
    _
  $region23: #{model_and_loss_forward.32} parent=0 // pred_check_branch
    %26 = sbr.rel (0) target = $region25
  $region24: #{model_and_loss_forward.32} parent=0 // pred_region
    _
  $region25: #{model_and_loss_forward.32} parent=0 // pred_fallthru
    _
  // Predicated region
  $region26: #{model_and_loss_forward.32} parent=0 // pred_check
    _
  $region27: #{model_and_loss_forward.32} parent=0 // pred_check_branch
    %28 = sbr.rel (0) target = $region29
  $region28: #{model_and_loss_forward.32} parent=0 // pred_region
    _
  $region29: #{model_and_loss_forward.32} parent=0 // pred_fallthru
    _
  // Predicated region
  $region30: #{model_and_loss_forward.32} parent=0 // pred_check
    _
  $region31: #{model_and_loss_forward.32} parent=0 // pred_check_branch
    %30 = sbr.rel (0) target = $region33
  $region32: #{model_and_loss_forward.32} parent=0 // pred_region
    _
  $region33: #{model_and_loss_forward.32} parent=0 // pred_fallthru
    _
  // Predicated region
  $region34: #{model_and_loss_forward.32} parent=0 // pred_check
    _
  $region35: #{model_and_loss_forward.32} parent=0 // pred_check_branch
    %32 = sbr.rel (0) target = $region37
  $region36: #{model_and_loss_forward.32} parent=0 // pred_region
    _
  $region37: #{model_and_loss_forward.32} parent=0 // pred_fallthru
    _
  // Predicated region
  $region38: #{model_and_loss_forward.32} parent=0 // pred_check
    _
  $region39: #{model_and_loss_forward.32} parent=0 // pred_check_branch
    %34 = sbr.rel (0) target = $region41
  $region40: #{model_and_loss_forward.32} parent=0 // pred_region
    _
  $region41: #{model_and_loss_forward.32} parent=0 // pred_fallthru
    _
  %v35 = vld [vmem:[%s2] sm:$0x1]
  %v36 = vmul.f32 %v35, 0.125
  %v37 = vld [vmem:[%s3] sm:$0x1]
  %v38 = vmul.f32 %v37, 0.125
  %v39 = vmul.f32 %v36, %v36
  %v40 = vsub.f32 %v38, %v39
  %v41 = vmax.f32 %v40, 0.0
  %v42 = vadd.f32 %v41, 1e-05
  %v43 = vrsqrt.pop %v42
  %v44 = vld [vmem:[%s4] sm:$0x1]
  %v45 = vmul.f32 %v43, %v44
  %v46 = vld [vmem:[%s5] sm:$0x1]
  %v47 = vmul.f32 %v36, %v45
  %v48 = vsub.f32 %v46, %v47
  %v49 = vld [vmem:[%s0] sm:$0xf]
  %v50 = vunpack.c.l.bf16 %v49
  %v52 = vlaneseq
  %v53 = vshrl.u32 %v52, 7
  %v54 = vsub.s32 0, %v53
  %v55 = vrot.slane %v45, %v54
  %v57 = vmul.f32 %v50, %v55
  %v59 = vlaneseq
  %v60 = vshrl.u32 %v59, 7
  %v61 = vsub.s32 0, %v60
  %v62 = vrot.slane %v48, %v61
  %v64 = vadd.f32 %v57, %v62
  %v65 = vld [vmem:[%s6] sm:$0x1]
  %v66 = vmul.f32 %v65, 0.125
  %v67 = vld [vmem:[%s7] sm:$0x1]
  %v68 = vmul.f32 %v67, 0.125
  %v69 = vmul.f32 %v66, %v66
  %v70 = vsub.f32 %v68, %v69
  %v71 = vmax.f32 %v70, 0.0
  %v72 = vadd.f32 %v71, 1e-05
  %v73 = vrsqrt.pop %v72
  %v74 = vld [vmem:[%s8] sm:$0x1]
  %v75 = vmul.f32 %v73, %v74
  %v76 = vld [vmem:[%s9] sm:$0x1]
  %v77 = vmul.f32 %v66, %v75
  %v78 = vsub.f32 %v76, %v77
  %v79 = vld [vmem:[%s1] sm:$0xf]
  %v80 = vunpack.c.l.bf16 %v79
  %v82 = vlaneseq
  %v83 = vshrl.u32 %v82, 7
  %v84 = vsub.s32 0, %v83
  %v85 = vrot.slane %v75, %v84
  %v87 = vmul.f32 %v80, %v85
  %v89 = vlaneseq
  %v90 = vshrl.u32 %v89, 7
  %v91 = vsub.s32 0, %v90
  %v92 = vrot.slane %v78, %v91
  %v94 = vadd.f32 %v87, %v92
  %v95 = vadd.f32 %v64, %v94
  %v96 = vmax.f32 %v95, 0.0
  %v97 = vpack.c.bf16 %v96, %v96
  %98 = vst [vmem:[%s10] sm:$0xf] %v97
  // Predicated region
  $region42: #{model_and_loss_forward.32} parent=0 // pred_check
    _
  $region43: #{model_and_loss_forward.32} parent=0 // pred_check_branch
    %100 = sbr.rel (0) target = $region45
  $region44: #{model_and_loss_forward.32} parent=0 // pred_region
    _
  $region45: #{model_and_loss_forward.32} parent=0 // pred_fallthru
    _
  // Predicated region
  $region46: #{model_and_loss_forward.32} parent=0 // pred_check
    _
  $region47: #{model_and_loss_forward.32} parent=0 // pred_check_branch
    %102 = sbr.rel (0) target = $region49
  $region48: #{model_and_loss_forward.32} parent=0 // pred_region
    _
  $region49: #{model_and_loss_forward.32} parent=0 // pred_fallthru
    _

// kernel: model_and_loss_forward.33
$region0: #{model_and_loss_forward.33}
  #allocation0 [shape = 'u32[]', space=smem, size = 0x4, offset = 0x4, fixed_abs, tag = 'smem constant byte address 0x4 - core index']
  #allocation1 [shape = 'u32[144,128]{1,0:T(1,128)}', space=vmem, size = 0x12000, scoped, tag = 'internal scratch']
  %s0 = inlined_call_operand.vmem [shape: bf16[2,4,128], index: 0, kind: input, shape index: {}]
  %s1 = inlined_call_operand.vmem [shape: bf16[128,128], index: 1, kind: input, shape index: {}]
  %s2 = inlined_call_operand.vmem [shape: f32[1,128], index: 2, kind: input, shape index: {}]
  %s3 = inlined_call_operand.vmem [shape: f32[2,128], index: 3, kind: input, shape index: {}]
  %s4 = inlined_call_operand.hbm [shape: f32[2,128], index: 4, kind: output, shape index: {0}]
  %s5 = inlined_call_operand.hbm [shape: f32[1,1], index: 5, kind: output, shape index: {1}]
  %6 = xla_tuple %s4, %s5
  %s7 = sld [smem:[#allocation0]]
  $region38: #{model_and_loss_forward.33} parent=0
    _
  %s9 = ssub.s32 1, %s7
  %s10 = scalar_select 0, %s9, %s7
  $region1: #{model_and_loss_forward.33} parent=0
    #allocation2 [shape = 'u8[1024]{0}', space=vmem, size = 0x400, scoped, tag = 'output window, operand 0, single buffered']
    #allocation3 [shape = 's32[1]{0}', space=sflag, size = 0x4, scoped, tag = 'scoped memory for model_and_loss_forward.33']
    #allocation4 [shape = 'u8[512]{0}', space=vmem, size = 0x400, scoped, tag = 'output window, operand 1, single buffered']
    #allocation5 [shape = 's32[1]{0}', space=sflag, size = 0x4, scoped, tag = 'scoped memory for model_and_loss_forward.33']
    %11 = vsyncpa [#allocation3], 0
    %12 = vsyncpa [#allocation5], 0
    // Predicated region
    $region2: #{model_and_loss_forward.33} parent=1 // pred_check
      _
    $region3: #{model_and_loss_forward.33} parent=1 // pred_check_branch
      %14 = sbr.rel (0) target = $region5
    $region4: #{model_and_loss_forward.33} parent=1 // pred_region
      _
    $region5: #{model_and_loss_forward.33} parent=1 // pred_fallthru
      _
    // Predicated region
    $region6: #{model_and_loss_forward.33} parent=1 // pred_check
      _
    $region7: #{model_and_loss_forward.33} parent=1 // pred_check_branch
      %16 = sbr.rel (0) target = $region9
    $region8: #{model_and_loss_forward.33} parent=1 // pred_region
      _
    $region9: #{model_and_loss_forward.33} parent=1 // pred_fallthru
      _
    // Predicated region
    $region10: #{model_and_loss_forward.33} parent=1 // pred_check
      _
    $region11: #{model_and_loss_forward.33} parent=1 // pred_check_branch
      %18 = sbr.rel (0) target = $region13
    $region12: #{model_and_loss_forward.33} parent=1 // pred_region
      _
    $region13: #{model_and_loss_forward.33} parent=1 // pred_fallthru
      _
    // Predicated region
    $region14: #{model_and_loss_forward.33} parent=1 // pred_check
      _
    $region15: #{model_and_loss_forward.33} parent=1 // pred_check_branch
      %20 = sbr.rel (0) target = $region17
    $region16: #{model_and_loss_forward.33} parent=1 // pred_region
      _
    $region17: #{model_and_loss_forward.33} parent=1 // pred_fallthru
      _
    %p22 = scmp.eq.s32.totalorder 0, 0
    // Predicated region
    $region18: #{model_and_loss_forward.33} parent=1 // pred_check
      %p23 = pneg %p22
    $region19: #{model_and_loss_forward.33} parent=1 // pred_check_branch
      %25 = sbr.rel (%p23) target = $region21
    $region20: #{model_and_loss_forward.33} parent=1 // pred_region
      %vm26 = vcmask 0
      %27 = vst.msk [vmem:[#allocation4] sm:$0x1] %vm26, 0.0
    $region21: #{model_and_loss_forward.33} parent=1 // pred_fallthru
      _
    %v28 = vld [vmem:[%s0] sm:$0x3]
    %v29 = vld [vmem:[%s0 + $0x2] sm:$0x3]
    %v30 = vunpack.c.l.bf16 %v28
    %v31 = vunpack.c.l.bf16 %v29
    %vm32 = vcmask 1043456
    %v33 = vsel %vm32, %v30, 0.0
    %v34 = vrot.slane %v33, 4
    %v35 = vadd.f32 %v33, %v34
    %v36 = vrot.slane %v35, 2
    %v37 = vadd.f32 %v35, %v36
    %v38 = vrot.slane %v37, 1
    %v39 = vadd.f32 %v37, %v38
    %v40 = vsel %vm32, %v31, 0.0
    %v41 = vrot.slane %v40, 4
    %v42 = vadd.f32 %v40, %v41
    %v43 = vrot.slane %v42, 2
    %v44 = vadd.f32 %v42, %v43
    %v45 = vrot.slane %v44, 1
    %v46 = vadd.f32 %v44, %v45
    %v47 = vrcp.pop 4.0
    %v48 = vmul.f32 %v39, %v47
    %v49 = vmul.f32 %v46, %v47
    %v50 = vpack.c.bf16 %v48, %v48
    %v51 = vpack.c.bf16 %v49, %v49
    %v52 = vld [vmem:[%s1] sm:$0xf]
    %v53 = vld [vmem:[%s1 + $0x4] sm:$0xf]
    %v54 = vld [vmem:[%s1 + $0x8] sm:$0xf]
    %v55 = vld [vmem:[%s1 + $0xc] sm:$0xf]
    %v56 = vld [vmem:[%s1 + $0x10] sm:$0xf]
    %v57 = vld [vmem:[%s1 + $0x14] sm:$0xf]
    %v58 = vld [vmem:[%s1 + $0x18] sm:$0xf]
    %v59 = vld [vmem:[%s1 + $0x1c] sm:$0xf]
    %v60 = vld [vmem:[%s1 + $0x20] sm:$0xf]
    %v61 = vld [vmem:[%s1 + $0x24] sm:$0xf]
    %v62 = vld [vmem:[%s1 + $0x28] sm:$0xf]
    %v63 = vld [vmem:[%s1 + $0x2c] sm:$0xf]
    %v64 = vld [vmem:[%s1 + $0x30] sm:$0xf]
    %v65 = vld [vmem:[%s1 + $0x34] sm:$0xf]
    %v66 = vld [vmem:[%s1 + $0x38] sm:$0xf]
    %v67 = vld [vmem:[%s1 + $0x3c] sm:$0xf]
    %v68 = vld [vmem:[%s2] sm:$0x1]
    %v70 = vlaneseq
    %v71 = vshrl.u32 %v70, 7
    %v72 = vsub.s32 0, %v71
    %v73 = vrot.slane %v68, %v72
    %v77 = vunpack.c.l.b16 %v50
    %v78 = vunpack.c.l.b16 %v51
    %vm79 = vcmask 1041409
    %v80 = vsel %vm79, %v78, %v77
    %v81 = vpack.c.b16 %v80, %v80
    %v99 = vunpack.c.l.b16 %v52
    %v100 = vunpack.c.l.b16 %v53
    %v101 = vunpack.c.l.b16 %v54
    %v102 = vunpack.c.l.b16 %v55
    %v103 = vunpack.c.l.b16 %v56
    %v104 = vunpack.c.l.b16 %v57
    %v105 = vunpack.c.l.b16 %v58
    %v106 = vunpack.c.l.b16 %v59
    %v107 = vunpack.c.l.b16 %v60
    %v108 = vunpack.c.l.b16 %v61
    %v109 = vunpack.c.l.b16 %v62
    %v110 = vunpack.c.l.b16 %v63
    %v111 = vunpack.c.l.b16 %v64
    %v112 = vunpack.c.l.b16 %v65
    %v113 = vunpack.c.l.b16 %v66
    %v114 = vunpack.c.l.b16 %v67
    %v115 = vpack.c.b16 %v100, %v99
    %v116 = vpack.c.b16 %v102, %v101
    %v117 = vpack.c.b16 %v104, %v103
    %v118 = vpack.c.b16 %v106, %v105
    %v119 = vpack.c.b16 %v108, %v107
    %v120 = vpack.c.b16 %v110, %v109
    %v121 = vpack.c.b16 %v112, %v111
    %v122 = vpack.c.b16 %v114, %v113
    %131 = vmatprep.subr.bf16.mxu0 0
    %132 = vmatpush1.bf16.msra.mxu0 %v115
    %133 = vmatprep.subr.bf16.mxu0 0
    %134 = vmatpush1.bf16.msra.mxu0 %v116
    %135 = vmatprep.subr.bf16.mxu0 0
    %136 = vmatpush1.bf16.msra.mxu0 %v117
    %137 = vmatprep.subr.bf16.mxu0 0
    %138 = vmatpush1.bf16.msra.mxu0 %v118
    %139 = vmatprep.subr.bf16.mxu0 0
    %140 = vmatpush1.bf16.msra.mxu0 %v119
    %141 = vmatprep.subr.bf16.mxu0 0
    %142 = vmatpush1.bf16.msra.mxu0 %v120
    %143 = vmatprep.subr.bf16.mxu0 0
    %144 = vmatpush1.bf16.msra.mxu0 %v121
    %145 = vmatprep.subr.bf16.mxu0 0
    %146 = vmatpush1.bf16.msra.mxu0 %v122
    %147 = vmatprep.subr.bf16.mxu0 0
    %148 = vmatpush1.bf16.msra.mxu0 0
    %149 = vmatprep.subr.bf16.mxu0 0
    %150 = vmatpush1.bf16.msra.mxu0 0
    %151 = vmatprep.subr.bf16.mxu0 0
    %152 = vmatpush1.bf16.msra.mxu0 0
    %153 = vmatprep.subr.bf16.mxu0 0
    %154 = vmatpush1.bf16.msra.mxu0 0
    %155 = vmatprep.subr.bf16.mxu0 0
    %156 = vmatpush1.bf16.msra.mxu0 0
    %157 = vmatprep.subr.bf16.mxu0 0
    %158 = vmatpush1.bf16.msra.mxu0 0
    %159 = vmatprep.subr.bf16.mxu0 0
    %160 = vmatpush1.bf16.msra.mxu0 0
    %161 = vmatprep.subr.bf16.mxu0 0
    %162 = vmatpush1.bf16.msra.mxu0 0
    %163 = vmatprep.mubr.bf16.mxu0 0
    %164 = vmatmul.mubr.bf16.gmra.mrb[0].mxu0 %v81
    %v165 = vpop.f32.mrb[0].mxu0
    %v166 = vadd.f32 %v73, %v165
    %v167 = vpop.f32.mrb[0].mxu0
    %v168 = vpop.f32.mrb[0].mxu0
    %v169 = vpop.f32.mrb[0].mxu0
    %170 = vdwg.mxu0
    %171 = vst [vmem:[#allocation2] sm:$0x3] %v166
    %v172 = vlaneseq
    %v173 = vand.u32 %v172, 127
    %vm174 = vcmp.lt.s32.totalorder %v173, 8
    %v175 = vsel %vm174, %v166, -1e+30
    %vm176 = vcmask 1041408
    %v177 = vsel %vm176, %v175, -inf
    %178 = vmax.xlane.f32.xlu0 %v177
    %v179 = vpop.xlane.xlu0 %178
    %v180 = vsub.f32 %v175, %v179
    %v181 = vmul.f32 %v180, 1.442695
    %v182 = vpow.pop %v181
    %v183 = vsel %vm174, %v182, 0.0
    %v184 = vsel %vm176, %v183, 0.0
    %185 = vadd.xlane.f32.xlu0 %v184
    %v186 = vpop.xlane.xlu0 %185
    %v187 = vlog2.pop %v186
    %v188 = vmul.f32 %v187, 0.6931472
    %v189 = vadd.f32 %v179, %v188
    %v190 = vld [vmem:[%s3] sm:$0x3]
    %v191 = vmul.f32 %v190, %v166
    %v192 = vsel %vm176, %v191, 0.0
    %193 = vadd.xlane.f32.xlu0 %v192
    %v194 = vpop.xlane.xlu0 %193
    %v195 = vsub.f32 %v189, %v194
    %v196 = vld [vmem:[#allocation4] sm:$0x1]
    %vm197 = vcmask 1024
    %v198 = vsel %vm197, %v195, 0.0
    %199 = vadd.xlane.f32.xlu0 %v198
    %v200 = vpop.xlane.xlu0 %199
    %v201 = vrot.slane %v200, 4
    %v202 = vadd.f32 %v200, %v201
    %v203 = vrot.slane %v202, 2
    %v204 = vadd.f32 %v202, %v203
    %v205 = vrot.slane %v204, 1
    %v206 = vadd.f32 %v204, %v205
    %s207 = vtos %v206
    %s208 = smul.f32 %s207, 0.5
    %v209 = vstv %s208
    %v210 = vadd.f32 %v196, %v209
    %vm211 = vcmask 0
    %212 = vst.msk [vmem:[#allocation4] sm:$0x1] %vm211, %v210
    // Predicated region
    $region22: #{model_and_loss_forward.33} parent=1 // pred_check
      _
    $region23: #{model_and_loss_forward.33} parent=1 // pred_check_branch
      %214 = sbr.rel (0) target = $region25
    $region24: #{model_and_loss_forward.33} parent=1 // pred_region
      %s216 = ssub.s32 32, 32
      %217 = vsyncadd [#allocation3], %s216
      %s219 = sshll.u32 [#allocation2], 4
      %s220 = int_to_ptr.vmem [resolvable:$true] %s219
      %222 = dma.vmem_to_hbm [thread:$0]  %s220, 32, %s4, [#allocation3]
    $region25: #{model_and_loss_forward.33} parent=1 // pred_fallthru
      _
    // Predicated region
    $region26: #{model_and_loss_forward.33} parent=1 // pred_check
      _
    $region27: #{model_and_loss_forward.33} parent=1 // pred_check_branch
      %224 = sbr.rel (0) target = $region29
    $region28: #{model_and_loss_forward.33} parent=1 // pred_region
      %s226 = ssub.s32 16, 16
      %227 = vsyncadd [#allocation5], %s226
      %s229 = sshll.u32 [#allocation4], 4
      %s230 = int_to_ptr.vmem [resolvable:$true] %s229
      %232 = dma.vmem_to_hbm [thread:$0]  %s230, 16, %s5, [#allocation5]
    $region29: #{model_and_loss_forward.33} parent=1 // pred_fallthru
      _
    // Predicated region
    $region30: #{model_and_loss_forward.33} parent=1 // pred_check
      _
    $region31: #{model_and_loss_forward.33} parent=1 // pred_check_branch
      %234 = sbr.rel (0) target = $region33
    $region32: #{model_and_loss_forward.33} parent=1 // pred_region
      %235 = dma.done [#allocation3], 32
    $region33: #{model_and_loss_forward.33} parent=1 // pred_fallthru
      _
    // Predicated region
    $region34: #{model_and_loss_forward.33} parent=1 // pred_check
      _
    $region35: #{model_and_loss_forward.33} parent=1 // pred_check_branch
      %237 = sbr.rel (0) target = $region37
    $region36: #{model_and_loss_forward.33} parent=1 // pred_region
      %238 = dma.done [#allocation5], 16
    $region37: #{model_and_loss_forward.33} parent=1 // pred_fallthru
      _
    %239 = vsyncpa [#allocation3], 1
    %240 = vsyncpa [#allocation5], 1

</llo_original>
